<compile_context>
chip_gen: v6e
topology: v6e:2x2x1
jax: 0.10.0
libtpu: 0.0.40
codegen_flags: <defaults>
</compile_context>

<pallas_src>
import numpy as np
import jax
import jax.numpy as jnp
from jax.experimental import pallas as pl
from jax.experimental.pallas import tpu as pltpu


# ---------------------------------------------------------------------------
# Chip-dependent configuration (host-side, at import time)
# ---------------------------------------------------------------------------
def _device_kind():
    try:
        return jax.devices()[0].device_kind.lower()
    except Exception:
        return ""


_KIND = _device_kind()
# bf16 MXU operands on v6e/v7x (an f32 matmul decomposes into ~3x bf16 MXU
# passes there); f32 operands on older / unknown chips.  Accumulation is always
# f32 (preferred_element_type) and all normalization math stays f32.
MATMUL_DTYPE = jnp.bfloat16 if ("v6" in _KIND or "v7" in _KIND) else jnp.float32
# v7x has 2 TensorCores per chip -> split the batch across them; v5e/v6e have a
# single TC, so extra grid steps are pure per-step overhead -> collapse to 1.
_NUM_TC = 2 if "v7" in _KIND else 1


# ---------------------------------------------------------------------------
# In-kernel helpers (traced inline into the fused kernel)
# ---------------------------------------------------------------------------
def _adjacency(q, k, mask):
    """q, k: (R, NF) MXU-dtype projections; mask: (R, R) {0,1} block-diagonal.

    Returns the per-graph p=1-normalized squared-attention adjacency as one
    dense block-diagonal (R, R) f32 matrix.  Off-block entries are zeroed
    BEFORE the row sum, so normalization matches per-graph F.normalize exactly
    (exact division, per the correctness feedback)."""
    dot = jnp.einsum("ik,jk->ij", q, k, preferred_element_type=jnp.float32)
    sq = dot * dot * mask
    denom = jnp.maximum(jnp.sum(sq, axis=-1, keepdims=True), 1e-12)
    return sq / denom


def _gcn_layers(x, adj, gw, lg, lb):
    """Stack of GCNLayer(x, adj): x (R, NF) f32, adj (R, R) f32 block-diag."""
    adj_m = adj.astype(MATMUL_DTYPE)                       # cast once, reused per layer
    for l in range(gw.shape[0]):                           # static unroll (L small)
        h = jnp.dot(x.astype(MATMUL_DTYPE), gw[l], preferred_element_type=jnp.float32)
        h = jnp.dot(adj_m, h.astype(MATMUL_DTYPE), preferred_element_type=jnp.float32)
        mu = jnp.mean(h, axis=-1, keepdims=True)           # LayerNorm (f32)
        d = h - mu
        var = jnp.mean(d * d, axis=-1, keepdims=True)
        h = d * jax.lax.rsqrt(var + 1e-5) * lg[l] + lb[l]
        x = jnp.maximum(h, 0.0)                            # ReLU
    return x


# ---------------------------------------------------------------------------
# Fused kernel: one block of NB samples per grid step
# ---------------------------------------------------------------------------
def fused_forward_kernel(
        feats_ref, fg_ref,
        mask_f_ref, mask_s_ref,
        pool_x1s_ref, sel_fg_ref, pool_xt_ref, pool_x2_ref, pool_y_ref,
        wqk4_ref, bqk4_ref, wqk2_ref, bqk2_ref,
        gw_g_ref, lg_g_ref, lb_g_ref,
        gw_o_ref, lg_o_ref, lb_o_ref,
        w1_ref, b1_ref, w2_ref, b2_ref,
        out_ref):
    NF = feats_ref.shape[-1]

    xf = feats_ref[...]                                    # (Rf, NF) flattened frame-node stack
    xf_m = xf.astype(MATMUL_DTYPE)                         # cast once, reused below
    mask_f = mask_f_ref[...]

    # One lane-dense (NF, 4*NF)=128-wide projection shared by graph & graph_omega.
    qk = jnp.dot(xf_m, wqk4_ref[...], preferred_element_type=jnp.float32) + bqk4_ref[...]
    qk = qk.astype(MATMUL_DTYPE)
    adj_g = _adjacency(qk[:, :NF], qk[:, NF:2 * NF], mask_f)
    adj_o = _adjacency(qk[:, 2 * NF:3 * NF], qk[:, 3 * NF:], mask_f)

    gw_o = gw_o_ref[...]
    lg_o = lg_o_ref[...]
    lb_o = lb_o_ref[...]

    # First-level GCN stacks over the frame graphs (block-diagonal, flat rows).
    hg = _gcn_layers(xf, adj_g, gw_g_ref[...], lg_g_ref[...], lb_g_ref[...])
    ho = _gcn_layers(xf, adj_o, gw_o, lg_o, lb_o)

    # xt: per-sample mean over all FR*B frame nodes of the `graph` pass
    # (== mean over frames of per-frame means since every frame has B nodes).
    xt = jnp.dot(pool_xt_ref[...], hg.astype(MATMUL_DTYPE),
                 preferred_element_type=jnp.float32)       # (NB, NF)

    # Second-level graph_omega over the FR per-frame tokens of each sample,
    # fused with the graph_omega pass over the global tokens: both live as rows
    # of ONE block-diagonal node stack `xs`.  The stack is assembled with two
    # matmuls (frame-token pooling + one-hot placement of the global tokens)
    # instead of an in-kernel row concatenation.
    xs = (jnp.dot(pool_x1s_ref[...], ho.astype(MATMUL_DTYPE),
                  preferred_element_type=jnp.float32)
          + jnp.dot(sel_fg_ref[...], fg_ref[...].astype(MATMUL_DTYPE),
                    preferred_element_type=jnp.float32))   # (Rs, NF) f32
    xs_m = xs.astype(MATMUL_DTYPE)
    qk2 = jnp.dot(xs_m, wqk2_ref[...], preferred_element_type=jnp.float32) + bqk2_ref[...]
    qk2 = qk2.astype(MATMUL_DTYPE)
    adj_s = _adjacency(qk2[:, :NF], qk2[:, NF:], mask_s_ref[...])
    hs = _gcn_layers(xs, adj_s, gw_o, lg_o, lb_o)
    hs_m = hs.astype(MATMUL_DTYPE)
    x2 = jnp.dot(pool_x2_ref[...], hs_m, preferred_element_type=jnp.float32)  # (NB, NF)
    y = jnp.dot(pool_y_ref[...], hs_m, preferred_element_type=jnp.float32)    # (NB, NF)

    # Classifier: fc1 on concat([x2, xt, y]) expressed as three partial matmuls
    # (no lane concat needed), ReLU, fc2 into the 128-lane-padded class slab.
    w1 = w1_ref[...]
    h = (jnp.dot(x2.astype(MATMUL_DTYPE), w1[:NF], preferred_element_type=jnp.float32)
         + jnp.dot(xt.astype(MATMUL_DTYPE), w1[NF:2 * NF], preferred_element_type=jnp.float32)
         + jnp.dot(y.astype(MATMUL_DTYPE), w1[2 * NF:], preferred_element_type=jnp.float32)
         + b1_ref[...])
    h = jnp.maximum(h, 0.0)
    # TODO(synk): nn.Dropout() treated as identity (inference mode); no RNG mask.
    out_ref[0] = (jnp.dot(h.astype(MATMUL_DTYPE), w2_ref[...],
                          preferred_element_type=jnp.float32) + b2_ref[...])


# ---------------------------------------------------------------------------
# Host-side constant builders (trace-time numpy; baked in as tiny constants)
# ---------------------------------------------------------------------------
def _block_diag_mask(sizes):
    r = int(sum(sizes))
    m = np.zeros((r, r), np.float32)
    off = 0
    for s in sizes:
        m[off:off + s, off:off + s] = 1.0
        off += s
    return m


def _mean_pool_matrix(sizes):
    r = int(sum(sizes))
    p = np.zeros((len(sizes), r), np.float32)
    off = 0
    for g, s in enumerate(sizes):
        p[g, off:off + s] = 1.0 / s
        off += s
    return p


# ---------------------------------------------------------------------------
# Wrapper: single pallas_call for the whole forward
# ---------------------------------------------------------------------------
@jax.jit
def tokens_as_extra_graph_mean_forward(feats, feats_global, p_graph, p_graph_omega, p_cls):
    N, FR, B, NF = feats.shape
    G = feats_global.shape[1]
    C = p_cls["w2"].shape[1]
    CP = max(128, ((C + 127) // 128) * 128)                 # lane-dense output width

    num_blocks = _NUM_TC if (N >= _NUM_TC and N % _NUM_TC == 0) else 1
    NB = N // num_blocks                                    # samples per grid step
    Rf = NB * FR * B                                        # frame-node rows per step
    Rg = NB * G                                             # global-token rows per step
    Rs = NB * FR + NB * G                                   # second-stack rows per step

    # Host-side flattening: the kernel only ever sees 2-D (rows, NF) node stacks.
    feats_blk = feats.reshape(num_blocks, Rf, NF)
    fg_blk = feats_global.reshape(num_blocks, Rg, NF)

    # Block-diagonal masks + pooling / placement matrices (identical per block).
    mask_f = jnp.asarray(_block_diag_mask([B] * (NB * FR)))
    mask_s = jnp.asarray(_block_diag_mask([FR] * NB + [G] * NB))
    pool_xt = jnp.asarray(_mean_pool_matrix([FR * B] * NB), MATMUL_DTYPE)
    pool_fr_np = _mean_pool_matrix([B] * (NB * FR))         # per-frame means (NB*FR, Rf)
    pool_x1s_np = np.zeros((Rs, Rf), np.float32)
    pool_x1s_np[:NB * FR] = pool_fr_np                      # frame tokens -> top of 2nd stack
    sel_fg_np = np.zeros((Rs, Rg), np.float32)
    sel_fg_np[NB * FR:] = np.eye(Rg, dtype=np.float32)      # global tokens -> bottom of 2nd stack
    pool_x1s = jnp.asarray(pool_x1s_np, MATMUL_DTYPE)
    sel_fg = jnp.asarray(sel_fg_np, MATMUL_DTYPE)
    pool_all = _mean_pool_matrix([FR] * NB + [G] * NB)      # (2*NB, Rs)
    pool_x2 = jnp.asarray(pool_all[:NB], MATMUL_DTYPE)      # second-level omega means
    pool_y = jnp.asarray(pool_all[NB:], MATMUL_DTYPE)       # global omega means

    # Lane-dense fused q/k projection weights (128 lanes for the shared pass).
    wqk4 = jnp.concatenate([p_graph["wq"], p_graph["wk"],
                            p_graph_omega["wq"], p_graph_omega["wk"]],
                           axis=1).astype(MATMUL_DTYPE)
    bqk4 = jnp.concatenate([p_graph["bq"], p_graph["bk"],
                            p_graph_omega["bq"], p_graph_omega["bk"]])[None, :]
    wqk2 = jnp.concatenate([p_graph_omega["wq"], p_graph_omega["wk"]],
                           axis=1).astype(MATMUL_DTYPE)
    bqk2 = jnp.concatenate([p_graph_omega["bq"], p_graph_omega["bk"]])[None, :]

    gw_g = p_graph["gcn_w"].astype(MATMUL_DTYPE)
    gw_o = p_graph_omega["gcn_w"].astype(MATMUL_DTYPE)

    w1 = p_cls["w1"].astype(MATMUL_DTYPE)
    b1 = p_cls["b1"][None, :]
    w2p = jnp.pad(p_cls["w2"], ((0, 0), (0, CP - C))).astype(MATMUL_DTYPE)
    b2p = jnp.pad(p_cls["b2"], (0, CP - C))[None, :]

    rep_args = (mask_f, mask_s, pool_x1s, sel_fg, pool_xt, pool_x2, pool_y,
                wqk4, bqk4, wqk2, bqk2,
                gw_g, p_graph["ln_g"], p_graph["ln_b"],
                gw_o, p_graph_omega["ln_g"], p_graph_omega["ln_b"],
                w1, b1, w2p, b2p)

    # Replicated (constant index_map) inputs: whole array, every grid step.
    # (default pipeline mode; with <=2 grid steps the extra buffer is negligible)
    def rep_spec(a):
        nd = a.ndim
        return pl.BlockSpec(a.shape, lambda blk, nd=nd: (0,) * nd)

    in_specs = (
        [pl.BlockSpec((pl.Squeezed(), Rf, NF), lambda blk: (blk, 0, 0)),   # feats block
         pl.BlockSpec((pl.Squeezed(), Rg, NF), lambda blk: (blk, 0, 0))]   # feats_global block
        + [rep_spec(a) for a in rep_args]
    )

    out = pl.pallas_call(
        fused_forward_kernel,
        out_shape=jax.ShapeDtypeStruct((num_blocks, NB, CP), jnp.float32),
        grid=(num_blocks,),
        in_specs=in_specs,
        out_specs=pl.BlockSpec((1, NB, CP), lambda blk: (blk, 0, 0)),
        compiler_params=pltpu.CompilerParams(
            dimension_semantics=("parallel",)),             # v7x: 2 TCs split the blocks
    )(feats_blk, fg_blk, *rep_args)
    return out.reshape(N, CP)[:, :C]


# ---------------------------------------------------------------------------
# Pure-JAX reference (sanity check only, f32 throughout)
# ---------------------------------------------------------------------------
def graph_module_ref(x, p):
    q = x @ p["wq"] + p["bq"]
    k = x @ p["wk"] + p["bk"]
    dot = jnp.einsum("bik,bjk->bij", q, k)
    sq = dot * dot
    adj = sq / jnp.maximum(sq.sum(-1, keepdims=True), 1e-12)
    for l in range(p["gcn_w"].shape[0]):
        h = x @ p["gcn_w"][l]
        h = adj @ h
        mu = h.mean(-1, keepdims=True)
        var = ((h - mu) ** 2).mean(-1, keepdims=True)
        h = (h - mu) / jnp.sqrt(var + 1e-5) * p["ln_g"][l] + p["ln_b"][l]
        x = jnp.maximum(h, 0.0)
    return x.mean(-2)


def forward_ref(feats, feats_global, pg, pgo, pc):
    N, FR, B, NF = feats.shape
    ff = feats.reshape(N * FR, B, NF)
    x = graph_module_ref(ff, pgo).reshape(N, FR, NF)
    x = graph_module_ref(x, pgo)
    xt = graph_module_ref(ff, pg).reshape(N, FR, NF).mean(axis=1)
    y = graph_module_ref(feats_global, pgo)
    xcat = jnp.concatenate([x, xt, y], axis=-1)
    h = jnp.maximum(xcat @ pc["w1"] + pc["b1"], 0.0)
    return h @ pc["w2"] + pc["b2"]


# ---------------------------------------------------------------------------
# Deterministic parameter construction
# ---------------------------------------------------------------------------
def make_graph_params(key, num_layers, nf):
    ks = jax.random.split(key, 4 + num_layers)
    xav = np.sqrt(6.0 / (nf + nf)).astype(np.float32)
    return {
        "wq": jax.random.uniform(ks[0], (nf, nf), jnp.float32, -xav, xav),
        "bq": jax.random.uniform(ks[1], (nf,), jnp.float32, -0.1, 0.1),
        "wk": jax.random.uniform(ks[2], (nf, nf), jnp.float32, -xav, xav),
        "bk": jax.random.uniform(ks[3], (nf,), jnp.float32, -0.1, 0.1),
        "gcn_w": jnp.stack([jax.random.uniform(ks[4 + l], (nf, nf), jnp.float32, -xav, xav)
                            for l in range(num_layers)]),
        "ln_g": jnp.ones((num_layers, nf), jnp.float32),
        "ln_b": jnp.zeros((num_layers, nf), jnp.float32),
    }


def make_cls_params(key, in_f, hid, num_class):
    ks = jax.random.split(key, 4)
    s1 = np.sqrt(1.0 / in_f).astype(np.float32)
    s2 = np.sqrt(1.0 / hid).astype(np.float32)
    return {
        "w1": jax.random.uniform(ks[0], (in_f, hid), jnp.float32, -s1, s1),
        "b1": jax.random.uniform(ks[1], (hid,), jnp.float32, -s1, s1),
        "w2": jax.random.uniform(ks[2], (hid, num_class), jnp.float32, -s2, s2),
        "b2": jax.random.uniform(ks[3], (num_class,), jnp.float32, -s2, s2),
    }


# ---------------------------------------------------------------------------
if __name__ == "__main__":
    # Small shapes consistent with the module's forward.
    N, FR, B, NF = 2, 4, 8, 32      # feats: (N, FR, B, NF)
    G = 8                           # feats_global tokens: (N, G, NF)
    GCN_LAYERS = 2
    NUM_CLASS = 5

    key = jax.random.PRNGKey(0)
    k_in, k_ing, k_g, k_go, k_cls = jax.random.split(key, 5)

    feats = jax.random.normal(k_in, (N, FR, B, NF), jnp.float32)
    feats_global = jax.random.normal(k_ing, (N, G, NF), jnp.float32)

    p_graph = make_graph_params(k_g, GCN_LAYERS, NF)
    p_graph_omega = make_graph_params(k_go, GCN_LAYERS, NF)
    p_cls = make_cls_params(k_cls, 3 * NF, NF, NUM_CLASS)

    out = tokens_as_extra_graph_mean_forward(feats, feats_global,
                                             p_graph, p_graph_omega, p_cls)
    out = jax.block_until_ready(out)

    ref = forward_ref(feats, feats_global, p_graph, p_graph_omega, p_cls)
    ref = jax.block_until_ready(ref)

    assert out.shape == (N, NUM_CLASS)
    # f32 MXU operands should be near bit-exact; bf16 operands (v6e/v7x path)
    # get a looser tolerance — the dot*dot adjacency squaring amplifies
    # operand rounding (flagged in the perf review).
    tol = 5e-2 if MATMUL_DTYPE == jnp.float32 else 1e-1
    np.testing.assert_allclose(np.asarray(out), np.asarray(ref), rtol=tol, atol=tol)
    print("KERNEL_OK")
</pallas_src>

<mosaic_0001>
module attributes {stable_mosaic.version = 11 : i64} {
  func.func @fused_forward_kernel(%arg0: i32, %arg1: memref<1x64x32xf32, #tpu.memory_space<vmem>>, %arg2: memref<1x16x32xf32, #tpu.memory_space<vmem>>, %arg3: memref<64x64xf32, #tpu.memory_space<vmem>>, %arg4: memref<24x24xf32, #tpu.memory_space<vmem>>, %arg5: memref<24x64xf32, #tpu.memory_space<vmem>>, %arg6: memref<24x16xf32, #tpu.memory_space<vmem>>, %arg7: memref<2x64xf32, #tpu.memory_space<vmem>>, %arg8: memref<2x24xf32, #tpu.memory_space<vmem>>, %arg9: memref<2x24xf32, #tpu.memory_space<vmem>>, %arg10: memref<32x128xf32, #tpu.memory_space<vmem>>, %arg11: memref<1x128xf32, #tpu.memory_space<vmem>>, %arg12: memref<32x64xf32, #tpu.memory_space<vmem>>, %arg13: memref<1x64xf32, #tpu.memory_space<vmem>>, %arg14: memref<2x32x32xf32, #tpu.memory_space<vmem>>, %arg15: memref<2x32xf32, #tpu.memory_space<vmem>>, %arg16: memref<2x32xf32, #tpu.memory_space<vmem>>, %arg17: memref<2x32x32xf32, #tpu.memory_space<vmem>>, %arg18: memref<2x32xf32, #tpu.memory_space<vmem>>, %arg19: memref<2x32xf32, #tpu.memory_space<vmem>>, %arg20: memref<96x32xf32, #tpu.memory_space<vmem>>, %arg21: memref<1x32xf32, #tpu.memory_space<vmem>>, %arg22: memref<32x128xf32, #tpu.memory_space<vmem>>, %arg23: memref<1x128xf32, #tpu.memory_space<vmem>>, %arg24: memref<1x2x128xf32, #tpu.memory_space<vmem>>) attributes {dimension_semantics = [#tpu.dimension_semantics<parallel>], iteration_bounds = array<i64: 1>, scalar_prefetch = 0 : i64, scratch_operands = 0 : i64, tpu.core_type = #tpu.core_type<tc>, window_params = [{transform_indices = @transform_0, window_bounds = array<i64: 1, 64, 32>}, {transform_indices = @transform_1, window_bounds = array<i64: 1, 16, 32>}, {pipeline_mode = #tpu.pipeline_mode<synchronous>, transform_indices = @transform_2, window_bounds = array<i64: 64, 64>}, {pipeline_mode = #tpu.pipeline_mode<synchronous>, transform_indices = @transform_3, window_bounds = array<i64: 24, 24>}, {pipeline_mode = #tpu.pipeline_mode<synchronous>, transform_indices = @transform_4, window_bounds = array<i64: 24, 64>}, {pipeline_mode = #tpu.pipeline_mode<synchronous>, transform_indices = @transform_5, window_bounds = array<i64: 24, 16>}, {pipeline_mode = #tpu.pipeline_mode<synchronous>, transform_indices = @transform_6, window_bounds = array<i64: 2, 64>}, {pipeline_mode = #tpu.pipeline_mode<synchronous>, transform_indices = @transform_7, window_bounds = array<i64: 2, 24>}, {pipeline_mode = #tpu.pipeline_mode<synchronous>, transform_indices = @transform_8, window_bounds = array<i64: 2, 24>}, {pipeline_mode = #tpu.pipeline_mode<synchronous>, transform_indices = @transform_9, window_bounds = array<i64: 32, 128>}, {pipeline_mode = #tpu.pipeline_mode<synchronous>, transform_indices = @transform_10, window_bounds = array<i64: 1, 128>}, {pipeline_mode = #tpu.pipeline_mode<synchronous>, transform_indices = @transform_11, window_bounds = array<i64: 32, 64>}, {pipeline_mode = #tpu.pipeline_mode<synchronous>, transform_indices = @transform_12, window_bounds = array<i64: 1, 64>}, {pipeline_mode = #tpu.pipeline_mode<synchronous>, transform_indices = @transform_13, window_bounds = array<i64: 2, 32, 32>}, {pipeline_mode = #tpu.pipeline_mode<synchronous>, transform_indices = @transform_14, window_bounds = array<i64: 2, 32>}, {pipeline_mode = #tpu.pipeline_mode<synchronous>, transform_indices = @transform_15, window_bounds = array<i64: 2, 32>}, {pipeline_mode = #tpu.pipeline_mode<synchronous>, transform_indices = @transform_16, window_bounds = array<i64: 2, 32, 32>}, {pipeline_mode = #tpu.pipeline_mode<synchronous>, transform_indices = @transform_17, window_bounds = array<i64: 2, 32>}, {pipeline_mode = #tpu.pipeline_mode<synchronous>, transform_indices = @transform_18, window_bounds = array<i64: 2, 32>}, {pipeline_mode = #tpu.pipeline_mode<synchronous>, transform_indices = @transform_19, window_bounds = array<i64: 96, 32>}, {pipeline_mode = #tpu.pipeline_mode<synchronous>, transform_indices = @transform_20, window_bounds = array<i64: 1, 32>}, {pipeline_mode = #tpu.pipeline_mode<synchronous>, transform_indices = @transform_21, window_bounds = array<i64: 32, 128>}, {pipeline_mode = #tpu.pipeline_mode<synchronous>, transform_indices = @transform_22, window_bounds = array<i64: 1, 128>}, {transform_indices = @transform_23, window_bounds = array<i64: 1, 2, 128>}]} {
    %c0 = arith.constant 0 : index
    %c0_0 = arith.constant 0 : index
    %c0_1 = arith.constant 0 : index
    %0 = vector.load %arg1[%c0, %c0_0, %c0_1] : memref<1x64x32xf32, #tpu.memory_space<vmem>>, vector<1x64x32xf32>
    %1 = vector.shape_cast %0 : vector<1x64x32xf32> to vector<64x32xf32>
    %c0_2 = arith.constant 0 : index
    %c0_3 = arith.constant 0 : index
    %2 = vector.load %arg3[%c0_2, %c0_3] : memref<64x64xf32, #tpu.memory_space<vmem>>, vector<64x64xf32>
    %c0_4 = arith.constant 0 : index
    %c0_5 = arith.constant 0 : index
    %3 = vector.load %arg10[%c0_4, %c0_5] : memref<32x128xf32, #tpu.memory_space<vmem>>, vector<32x128xf32>
    %cst = arith.constant dense<0.000000e+00> : vector<64x128xf32>
    %4 = tpu.matmul %1, %3, %cst {dimension_numbers = #tpu.dot_dimension_numbers<[1], [0], [0], [1], [0, 0, 1, 1], [], []>} : vector<64x32xf32>, vector<32x128xf32>, vector<64x128xf32> -> vector<64x128xf32>
    %c0_6 = arith.constant 0 : index
    %c0_7 = arith.constant 0 : index
    %5 = vector.load %arg11[%c0_6, %c0_7] : memref<1x128xf32, #tpu.memory_space<vmem>>, vector<1x128xf32>
    %6 = vector.broadcast %5 : vector<1x128xf32> to vector<64x128xf32>
    %7 = arith.addf %4, %6 : vector<64x128xf32>
    %8 = vector.extract_strided_slice %7 {offsets = [0, 0], sizes = [64, 32], strides = [1, 1]} : vector<64x128xf32> to vector<64x32xf32>
    %9 = vector.extract_strided_slice %7 {offsets = [0, 32], sizes = [64, 32], strides = [1, 1]} : vector<64x128xf32> to vector<64x32xf32>
    "tpu.trace_start"() <{level = 10 : i32, message = "ik,jk->ij"}> : () -> ()
    %cst_8 = arith.constant dense<0.000000e+00> : vector<64x64xf32>
    %10 = tpu.matmul %8, %9, %cst_8 {dimension_numbers = #tpu.dot_dimension_numbers<[1], [1], [0], [0], [0, 0, 1, 0], [], []>} : vector<64x32xf32>, vector<64x32xf32>, vector<64x64xf32> -> vector<64x64xf32>
    "tpu.trace_stop"() : () -> ()
    %11 = arith.mulf %10, %10 : vector<64x64xf32>
    %12 = arith.mulf %11, %2 : vector<64x64xf32>
    %cst_9 = arith.constant dense<0.000000e+00> : vector<64xf32>
    %13 = vector.multi_reduction <add>, %12, %cst_9 [1] : vector<64x64xf32> to vector<64xf32>
    %14 = vector.shape_cast %13 : vector<64xf32> to vector<64x1xf32>
    %cst_10 = arith.constant 9.99999996E-13 : f32
    %15 = vector.broadcast %cst_10 : f32 to vector<64x1xf32>
    %16 = arith.maximumf %14, %15 : vector<64x1xf32>
    %17 = vector.broadcast %16 : vector<64x1xf32> to vector<64x64xf32>
    %18 = arith.divf %12, %17 : vector<64x64xf32>
    %19 = vector.extract_strided_slice %7 {offsets = [0, 64], sizes = [64, 32], strides = [1, 1]} : vector<64x128xf32> to vector<64x32xf32>
    %20 = vector.extract_strided_slice %7 {offsets = [0, 96], sizes = [64, 32], strides = [1, 1]} : vector<64x128xf32> to vector<64x32xf32>
    "tpu.trace_start"() <{level = 10 : i32, message = "ik,jk->ij"}> : () -> ()
    %cst_11 = arith.constant dense<0.000000e+00> : vector<64x64xf32>
    %21 = tpu.matmul %19, %20, %cst_11 {dimension_numbers = #tpu.dot_dimension_numbers<[1], [1], [0], [0], [0, 0, 1, 0], [], []>} : vector<64x32xf32>, vector<64x32xf32>, vector<64x64xf32> -> vector<64x64xf32>
    "tpu.trace_stop"() : () -> ()
    %22 = arith.mulf %21, %21 : vector<64x64xf32>
    %23 = arith.mulf %22, %2 : vector<64x64xf32>
    %cst_12 = arith.constant dense<0.000000e+00> : vector<64xf32>
    %24 = vector.multi_reduction <add>, %23, %cst_12 [1] : vector<64x64xf32> to vector<64xf32>
    %25 = vector.shape_cast %24 : vector<64xf32> to vector<64x1xf32>
    %cst_13 = arith.constant 9.99999996E-13 : f32
    %26 = vector.broadcast %cst_13 : f32 to vector<64x1xf32>
    %27 = arith.maximumf %25, %26 : vector<64x1xf32>
    %28 = vector.broadcast %27 : vector<64x1xf32> to vector<64x64xf32>
    %29 = arith.divf %23, %28 : vector<64x64xf32>
    %c0_14 = arith.constant 0 : index
    %c0_15 = arith.constant 0 : index
    %c0_16 = arith.constant 0 : index
    %30 = vector.load %arg17[%c0_14, %c0_15, %c0_16] : memref<2x32x32xf32, #tpu.memory_space<vmem>>, vector<2x32x32xf32>
    %c0_17 = arith.constant 0 : index
    %c0_18 = arith.constant 0 : index
    %31 = vector.load %arg18[%c0_17, %c0_18] : memref<2x32xf32, #tpu.memory_space<vmem>>, vector<2x32xf32>
    %c0_19 = arith.constant 0 : index
    %c0_20 = arith.constant 0 : index
    %32 = vector.load %arg19[%c0_19, %c0_20] : memref<2x32xf32, #tpu.memory_space<vmem>>, vector<2x32xf32>
    %c0_21 = arith.constant 0 : index
    %c0_22 = arith.constant 0 : index
    %c0_23 = arith.constant 0 : index
    %33 = vector.load %arg14[%c0_21, %c0_22, %c0_23] : memref<2x32x32xf32, #tpu.memory_space<vmem>>, vector<2x32x32xf32>
    %c0_24 = arith.constant 0 : index
    %c0_25 = arith.constant 0 : index
    %34 = vector.load %arg15[%c0_24, %c0_25] : memref<2x32xf32, #tpu.memory_space<vmem>>, vector<2x32xf32>
    %c0_26 = arith.constant 0 : index
    %c0_27 = arith.constant 0 : index
    %35 = vector.load %arg16[%c0_26, %c0_27] : memref<2x32xf32, #tpu.memory_space<vmem>>, vector<2x32xf32>
    %36 = vector.extract_strided_slice %33 {offsets = [0, 0, 0], sizes = [1, 32, 32], strides = [1, 1, 1]} : vector<2x32x32xf32> to vector<1x32x32xf32>
    %37 = vector.shape_cast %36 : vector<1x32x32xf32> to vector<32x32xf32>
    %cst_28 = arith.constant dense<0.000000e+00> : vector<64x32xf32>
    %38 = tpu.matmul %1, %37, %cst_28 {dimension_numbers = #tpu.dot_dimension_numbers<[1], [0], [0], [1], [0, 0, 1, 1], [], []>} : vector<64x32xf32>, vector<32x32xf32>, vector<64x32xf32> -> vector<64x32xf32>
    %cst_29 = arith.constant dense<0.000000e+00> : vector<64x32xf32>
    %39 = tpu.matmul %18, %38, %cst_29 {dimension_numbers = #tpu.dot_dimension_numbers<[1], [0], [0], [1], [0, 0, 1, 1], [], []>} : vector<64x64xf32>, vector<64x32xf32>, vector<64x32xf32> -> vector<64x32xf32>
    %cst_30 = arith.constant dense<0.000000e+00> : vector<64xf32>
    %40 = vector.multi_reduction <add>, %39, %cst_30 [1] : vector<64x32xf32> to vector<64xf32>
    %41 = vector.shape_cast %40 : vector<64xf32> to vector<64x1xf32>
    %cst_31 = arith.constant 3.200000e+01 : f32
    %42 = vector.broadcast %cst_31 : f32 to vector<64x1xf32>
    %43 = arith.divf %41, %42 : vector<64x1xf32>
    %44 = vector.broadcast %43 : vector<64x1xf32> to vector<64x32xf32>
    %45 = arith.subf %39, %44 : vector<64x32xf32>
    %46 = arith.mulf %45, %45 : vector<64x32xf32>
    %cst_32 = arith.constant dense<0.000000e+00> : vector<64xf32>
    %47 = vector.multi_reduction <add>, %46, %cst_32 [1] : vector<64x32xf32> to vector<64xf32>
    %48 = vector.shape_cast %47 : vector<64xf32> to vector<64x1xf32>
    %cst_33 = arith.constant 3.200000e+01 : f32
    %49 = vector.broadcast %cst_33 : f32 to vector<64x1xf32>
    %50 = arith.divf %48, %49 : vector<64x1xf32>
    %cst_34 = arith.constant 9.99999974E-6 : f32
    %51 = vector.broadcast %cst_34 : f32 to vector<64x1xf32>
    %52 = arith.addf %50, %51 : vector<64x1xf32>
    %53 = math.rsqrt %52 : vector<64x1xf32>
    %54 = vector.broadcast %53 : vector<64x1xf32> to vector<64x32xf32>
    %55 = arith.mulf %45, %54 : vector<64x32xf32>
    %56 = vector.extract_strided_slice %34 {offsets = [0, 0], sizes = [1, 32], strides = [1, 1]} : vector<2x32xf32> to vector<1x32xf32>
    %57 = vector.shape_cast %56 : vector<1x32xf32> to vector<32xf32>
    %58 = vector.shape_cast %57 : vector<32xf32> to vector<1x32xf32>
    %59 = vector.broadcast %58 : vector<1x32xf32> to vector<64x32xf32>
    %60 = arith.mulf %55, %59 : vector<64x32xf32>
    %61 = vector.extract_strided_slice %35 {offsets = [0, 0], sizes = [1, 32], strides = [1, 1]} : vector<2x32xf32> to vector<1x32xf32>
    %62 = vector.shape_cast %61 : vector<1x32xf32> to vector<32xf32>
    %63 = vector.shape_cast %62 : vector<32xf32> to vector<1x32xf32>
    %64 = vector.broadcast %63 : vector<1x32xf32> to vector<64x32xf32>
    %65 = arith.addf %60, %64 : vector<64x32xf32>
    %cst_35 = arith.constant 0.000000e+00 : f32
    %66 = vector.broadcast %cst_35 : f32 to vector<64x32xf32>
    %67 = arith.maximumf %65, %66 : vector<64x32xf32>
    %68 = vector.extract_strided_slice %33 {offsets = [1, 0, 0], sizes = [1, 32, 32], strides = [1, 1, 1]} : vector<2x32x32xf32> to vector<1x32x32xf32>
    %69 = vector.shape_cast %68 : vector<1x32x32xf32> to vector<32x32xf32>
    %cst_36 = arith.constant dense<0.000000e+00> : vector<64x32xf32>
    %70 = tpu.matmul %67, %69, %cst_36 {dimension_numbers = #tpu.dot_dimension_numbers<[1], [0], [0], [1], [0, 0, 1, 1], [], []>} : vector<64x32xf32>, vector<32x32xf32>, vector<64x32xf32> -> vector<64x32xf32>
    %cst_37 = arith.constant dense<0.000000e+00> : vector<64x32xf32>
    %71 = tpu.matmul %18, %70, %cst_37 {dimension_numbers = #tpu.dot_dimension_numbers<[1], [0], [0], [1], [0, 0, 1, 1], [], []>} : vector<64x64xf32>, vector<64x32xf32>, vector<64x32xf32> -> vector<64x32xf32>
    %cst_38 = arith.constant dense<0.000000e+00> : vector<64xf32>
    %72 = vector.multi_reduction <add>, %71, %cst_38 [1] : vector<64x32xf32> to vector<64xf32>
    %73 = vector.shape_cast %72 : vector<64xf32> to vector<64x1xf32>
    %cst_39 = arith.constant 3.200000e+01 : f32
    %74 = vector.broadcast %cst_39 : f32 to vector<64x1xf32>
    %75 = arith.divf %73, %74 : vector<64x1xf32>
    %76 = vector.broadcast %75 : vector<64x1xf32> to vector<64x32xf32>
    %77 = arith.subf %71, %76 : vector<64x32xf32>
    %78 = arith.mulf %77, %77 : vector<64x32xf32>
    %cst_40 = arith.constant dense<0.000000e+00> : vector<64xf32>
    %79 = vector.multi_reduction <add>, %78, %cst_40 [1] : vector<64x32xf32> to vector<64xf32>
    %80 = vector.shape_cast %79 : vector<64xf32> to vector<64x1xf32>
    %cst_41 = arith.constant 3.200000e+01 : f32
    %81 = vector.broadcast %cst_41 : f32 to vector<64x1xf32>
    %82 = arith.divf %80, %81 : vector<64x1xf32>
    %cst_42 = arith.constant 9.99999974E-6 : f32
    %83 = vector.broadcast %cst_42 : f32 to vector<64x1xf32>
    %84 = arith.addf %82, %83 : vector<64x1xf32>
    %85 = math.rsqrt %84 : vector<64x1xf32>
    %86 = vector.broadcast %85 : vector<64x1xf32> to vector<64x32xf32>
    %87 = arith.mulf %77, %86 : vector<64x32xf32>
    %88 = vector.extract_strided_slice %34 {offsets = [1, 0], sizes = [1, 32], strides = [1, 1]} : vector<2x32xf32> to vector<1x32xf32>
    %89 = vector.shape_cast %88 : vector<1x32xf32> to vector<32xf32>
    %90 = vector.shape_cast %89 : vector<32xf32> to vector<1x32xf32>
    %91 = vector.broadcast %90 : vector<1x32xf32> to vector<64x32xf32>
    %92 = arith.mulf %87, %91 : vector<64x32xf32>
    %93 = vector.extract_strided_slice %35 {offsets = [1, 0], sizes = [1, 32], strides = [1, 1]} : vector<2x32xf32> to vector<1x32xf32>
    %94 = vector.shape_cast %93 : vector<1x32xf32> to vector<32xf32>
    %95 = vector.shape_cast %94 : vector<32xf32> to vector<1x32xf32>
    %96 = vector.broadcast %95 : vector<1x32xf32> to vector<64x32xf32>
    %97 = arith.addf %92, %96 : vector<64x32xf32>
    %cst_43 = arith.constant 0.000000e+00 : f32
    %98 = vector.broadcast %cst_43 : f32 to vector<64x32xf32>
    %99 = arith.maximumf %97, %98 : vector<64x32xf32>
    %100 = vector.extract_strided_slice %30 {offsets = [0, 0, 0], sizes = [1, 32, 32], strides = [1, 1, 1]} : vector<2x32x32xf32> to vector<1x32x32xf32>
    %101 = vector.shape_cast %100 : vector<1x32x32xf32> to vector<32x32xf32>
    %cst_44 = arith.constant dense<0.000000e+00> : vector<64x32xf32>
    %102 = tpu.matmul %1, %101, %cst_44 {dimension_numbers = #tpu.dot_dimension_numbers<[1], [0], [0], [1], [0, 0, 1, 1], [], []>} : vector<64x32xf32>, vector<32x32xf32>, vector<64x32xf32> -> vector<64x32xf32>
    %cst_45 = arith.constant dense<0.000000e+00> : vector<64x32xf32>
    %103 = tpu.matmul %29, %102, %cst_45 {dimension_numbers = #tpu.dot_dimension_numbers<[1], [0], [0], [1], [0, 0, 1, 1], [], []>} : vector<64x64xf32>, vector<64x32xf32>, vector<64x32xf32> -> vector<64x32xf32>
    %cst_46 = arith.constant dense<0.000000e+00> : vector<64xf32>
    %104 = vector.multi_reduction <add>, %103, %cst_46 [1] : vector<64x32xf32> to vector<64xf32>
    %105 = vector.shape_cast %104 : vector<64xf32> to vector<64x1xf32>
    %cst_47 = arith.constant 3.200000e+01 : f32
    %106 = vector.broadcast %cst_47 : f32 to vector<64x1xf32>
    %107 = arith.divf %105, %106 : vector<64x1xf32>
    %108 = vector.broadcast %107 : vector<64x1xf32> to vector<64x32xf32>
    %109 = arith.subf %103, %108 : vector<64x32xf32>
    %110 = arith.mulf %109, %109 : vector<64x32xf32>
    %cst_48 = arith.constant dense<0.000000e+00> : vector<64xf32>
    %111 = vector.multi_reduction <add>, %110, %cst_48 [1] : vector<64x32xf32> to vector<64xf32>
    %112 = vector.shape_cast %111 : vector<64xf32> to vector<64x1xf32>
    %cst_49 = arith.constant 3.200000e+01 : f32
    %113 = vector.broadcast %cst_49 : f32 to vector<64x1xf32>
    %114 = arith.divf %112, %113 : vector<64x1xf32>
    %cst_50 = arith.constant 9.99999974E-6 : f32
    %115 = vector.broadcast %cst_50 : f32 to vector<64x1xf32>
    %116 = arith.addf %114, %115 : vector<64x1xf32>
    %117 = math.rsqrt %116 : vector<64x1xf32>
    %118 = vector.broadcast %117 : vector<64x1xf32> to vector<64x32xf32>
    %119 = arith.mulf %109, %118 : vector<64x32xf32>
    %120 = vector.extract_strided_slice %31 {offsets = [0, 0], sizes = [1, 32], strides = [1, 1]} : vector<2x32xf32> to vector<1x32xf32>
    %121 = vector.shape_cast %120 : vector<1x32xf32> to vector<32xf32>
    %122 = vector.shape_cast %121 : vector<32xf32> to vector<1x32xf32>
    %123 = vector.broadcast %122 : vector<1x32xf32> to vector<64x32xf32>
    %124 = arith.mulf %119, %123 : vector<64x32xf32>
    %125 = vector.extract_strided_slice %32 {offsets = [0, 0], sizes = [1, 32], strides = [1, 1]} : vector<2x32xf32> to vector<1x32xf32>
    %126 = vector.shape_cast %125 : vector<1x32xf32> to vector<32xf32>
    %127 = vector.shape_cast %126 : vector<32xf32> to vector<1x32xf32>
    %128 = vector.broadcast %127 : vector<1x32xf32> to vector<64x32xf32>
    %129 = arith.addf %124, %128 : vector<64x32xf32>
    %cst_51 = arith.constant 0.000000e+00 : f32
    %130 = vector.broadcast %cst_51 : f32 to vector<64x32xf32>
    %131 = arith.maximumf %129, %130 : vector<64x32xf32>
    %132 = vector.extract_strided_slice %30 {offsets = [1, 0, 0], sizes = [1, 32, 32], strides = [1, 1, 1]} : vector<2x32x32xf32> to vector<1x32x32xf32>
    %133 = vector.shape_cast %132 : vector<1x32x32xf32> to vector<32x32xf32>
    %cst_52 = arith.constant dense<0.000000e+00> : vector<64x32xf32>
    %134 = tpu.matmul %131, %133, %cst_52 {dimension_numbers = #tpu.dot_dimension_numbers<[1], [0], [0], [1], [0, 0, 1, 1], [], []>} : vector<64x32xf32>, vector<32x32xf32>, vector<64x32xf32> -> vector<64x32xf32>
    %cst_53 = arith.constant dense<0.000000e+00> : vector<64x32xf32>
    %135 = tpu.matmul %29, %134, %cst_53 {dimension_numbers = #tpu.dot_dimension_numbers<[1], [0], [0], [1], [0, 0, 1, 1], [], []>} : vector<64x64xf32>, vector<64x32xf32>, vector<64x32xf32> -> vector<64x32xf32>
    %cst_54 = arith.constant dense<0.000000e+00> : vector<64xf32>
    %136 = vector.multi_reduction <add>, %135, %cst_54 [1] : vector<64x32xf32> to vector<64xf32>
    %137 = vector.shape_cast %136 : vector<64xf32> to vector<64x1xf32>
    %cst_55 = arith.constant 3.200000e+01 : f32
    %138 = vector.broadcast %cst_55 : f32 to vector<64x1xf32>
    %139 = arith.divf %137, %138 : vector<64x1xf32>
    %140 = vector.broadcast %139 : vector<64x1xf32> to vector<64x32xf32>
    %141 = arith.subf %135, %140 : vector<64x32xf32>
    %142 = arith.mulf %141, %141 : vector<64x32xf32>
    %cst_56 = arith.constant dense<0.000000e+00> : vector<64xf32>
    %143 = vector.multi_reduction <add>, %142, %cst_56 [1] : vector<64x32xf32> to vector<64xf32>
    %144 = vector.shape_cast %143 : vector<64xf32> to vector<64x1xf32>
    %cst_57 = arith.constant 3.200000e+01 : f32
    %145 = vector.broadcast %cst_57 : f32 to vector<64x1xf32>
    %146 = arith.divf %144, %145 : vector<64x1xf32>
    %cst_58 = arith.constant 9.99999974E-6 : f32
    %147 = vector.broadcast %cst_58 : f32 to vector<64x1xf32>
    %148 = arith.addf %146, %147 : vector<64x1xf32>
    %149 = math.rsqrt %148 : vector<64x1xf32>
    %150 = vector.broadcast %149 : vector<64x1xf32> to vector<64x32xf32>
    %151 = arith.mulf %141, %150 : vector<64x32xf32>
    %152 = vector.extract_strided_slice %31 {offsets = [1, 0], sizes = [1, 32], strides = [1, 1]} : vector<2x32xf32> to vector<1x32xf32>
    %153 = vector.shape_cast %152 : vector<1x32xf32> to vector<32xf32>
    %154 = vector.shape_cast %153 : vector<32xf32> to vector<1x32xf32>
    %155 = vector.broadcast %154 : vector<1x32xf32> to vector<64x32xf32>
    %156 = arith.mulf %151, %155 : vector<64x32xf32>
    %157 = vector.extract_strided_slice %32 {offsets = [1, 0], sizes = [1, 32], strides = [1, 1]} : vector<2x32xf32> to vector<1x32xf32>
    %158 = vector.shape_cast %157 : vector<1x32xf32> to vector<32xf32>
    %159 = vector.shape_cast %158 : vector<32xf32> to vector<1x32xf32>
    %160 = vector.broadcast %159 : vector<1x32xf32> to vector<64x32xf32>
    %161 = arith.addf %156, %160 : vector<64x32xf32>
    %cst_59 = arith.constant 0.000000e+00 : f32
    %162 = vector.broadcast %cst_59 : f32 to vector<64x32xf32>
    %163 = arith.maximumf %161, %162 : vector<64x32xf32>
    %c0_60 = arith.constant 0 : index
    %c0_61 = arith.constant 0 : index
    %164 = vector.load %arg7[%c0_60, %c0_61] : memref<2x64xf32, #tpu.memory_space<vmem>>, vector<2x64xf32>
    %cst_62 = arith.constant dense<0.000000e+00> : vector<2x32xf32>
    %165 = tpu.matmul %164, %99, %cst_62 {dimension_numbers = #tpu.dot_dimension_numbers<[1], [0], [0], [1], [0, 0, 1, 1], [], []>} : vector<2x64xf32>, vector<64x32xf32>, vector<2x32xf32> -> vector<2x32xf32>
    %c0_63 = arith.constant 0 : index
    %c0_64 = arith.constant 0 : index
    %166 = vector.load %arg5[%c0_63, %c0_64] : memref<24x64xf32, #tpu.memory_space<vmem>>, vector<24x64xf32>
    %cst_65 = arith.constant dense<0.000000e+00> : vector<24x32xf32>
    %167 = tpu.matmul %166, %163, %cst_65 {dimension_numbers = #tpu.dot_dimension_numbers<[1], [0], [0], [1], [0, 0, 1, 1], [], []>} : vector<24x64xf32>, vector<64x32xf32>, vector<24x32xf32> -> vector<24x32xf32>
    %c0_66 = arith.constant 0 : index
    %c0_67 = arith.constant 0 : index
    %168 = vector.load %arg6[%c0_66, %c0_67] : memref<24x16xf32, #tpu.memory_space<vmem>>, vector<24x16xf32>
    %c0_68 = arith.constant 0 : index
    %c0_69 = arith.constant 0 : index
    %c0_70 = arith.constant 0 : index
    %169 = vector.load %arg2[%c0_68, %c0_69, %c0_70] : memref<1x16x32xf32, #tpu.memory_space<vmem>>, vector<1x16x32xf32>
    %170 = vector.shape_cast %169 : vector<1x16x32xf32> to vector<16x32xf32>
    %cst_71 = arith.constant dense<0.000000e+00> : vector<24x32xf32>
    %171 = tpu.matmul %168, %170, %cst_71 {dimension_numbers = #tpu.dot_dimension_numbers<[1], [0], [0], [1], [0, 0, 1, 1], [], []>} : vector<24x16xf32>, vector<16x32xf32>, vector<24x32xf32> -> vector<24x32xf32>
    %172 = arith.addf %167, %171 : vector<24x32xf32>
    %c0_72 = arith.constant 0 : index
    %c0_73 = arith.constant 0 : index
    %173 = vector.load %arg12[%c0_72, %c0_73] : memref<32x64xf32, #tpu.memory_space<vmem>>, vector<32x64xf32>
    %cst_74 = arith.constant dense<0.000000e+00> : vector<24x64xf32>
    %174 = tpu.matmul %172, %173, %cst_74 {dimension_numbers = #tpu.dot_dimension_numbers<[1], [0], [0], [1], [0, 0, 1, 1], [], []>} : vector<24x32xf32>, vector<32x64xf32>, vector<24x64xf32> -> vector<24x64xf32>
    %c0_75 = arith.constant 0 : index
    %c0_76 = arith.constant 0 : index
    %175 = vector.load %arg13[%c0_75, %c0_76] : memref<1x64xf32, #tpu.memory_space<vmem>>, vector<1x64xf32>
    %176 = vector.broadcast %175 : vector<1x64xf32> to vector<24x64xf32>
    %177 = arith.addf %174, %176 : vector<24x64xf32>
    %178 = vector.extract_strided_slice %177 {offsets = [0, 0], sizes = [24, 32], strides = [1, 1]} : vector<24x64xf32> to vector<24x32xf32>
    %179 = vector.extract_strided_slice %177 {offsets = [0, 32], sizes = [24, 32], strides = [1, 1]} : vector<24x64xf32> to vector<24x32xf32>
    %c0_77 = arith.constant 0 : index
    %c0_78 = arith.constant 0 : index
    %180 = vector.load %arg4[%c0_77, %c0_78] : memref<24x24xf32, #tpu.memory_space<vmem>>, vector<24x24xf32>
    "tpu.trace_start"() <{level = 10 : i32, message = "ik,jk->ij"}> : () -> ()
    %cst_79 = arith.constant dense<0.000000e+00> : vector<24x24xf32>
    %181 = tpu.matmul %178, %179, %cst_79 {dimension_numbers = #tpu.dot_dimension_numbers<[1], [1], [0], [0], [0, 0, 1, 0], [], []>} : vector<24x32xf32>, vector<24x32xf32>, vector<24x24xf32> -> vector<24x24xf32>
    "tpu.trace_stop"() : () -> ()
    %182 = arith.mulf %181, %181 : vector<24x24xf32>
    %183 = arith.mulf %182, %180 : vector<24x24xf32>
    %cst_80 = arith.constant dense<0.000000e+00> : vector<24xf32>
    %184 = vector.multi_reduction <add>, %183, %cst_80 [1] : vector<24x24xf32> to vector<24xf32>
    %185 = vector.shape_cast %184 : vector<24xf32> to vector<24x1xf32>
    %cst_81 = arith.constant 9.99999996E-13 : f32
    %186 = vector.broadcast %cst_81 : f32 to vector<24x1xf32>
    %187 = arith.maximumf %185, %186 : vector<24x1xf32>
    %188 = vector.broadcast %187 : vector<24x1xf32> to vector<24x24xf32>
    %189 = arith.divf %183, %188 : vector<24x24xf32>
    %190 = vector.extract_strided_slice %30 {offsets = [0, 0, 0], sizes = [1, 32, 32], strides = [1, 1, 1]} : vector<2x32x32xf32> to vector<1x32x32xf32>
    %191 = vector.shape_cast %190 : vector<1x32x32xf32> to vector<32x32xf32>
    %cst_82 = arith.constant dense<0.000000e+00> : vector<24x32xf32>
    %192 = tpu.matmul %172, %191, %cst_82 {dimension_numbers = #tpu.dot_dimension_numbers<[1], [0], [0], [1], [0, 0, 1, 1], [], []>} : vector<24x32xf32>, vector<32x32xf32>, vector<24x32xf32> -> vector<24x32xf32>
    %cst_83 = arith.constant dense<0.000000e+00> : vector<24x32xf32>
    %193 = tpu.matmul %189, %192, %cst_83 {dimension_numbers = #tpu.dot_dimension_numbers<[1], [0], [0], [1], [0, 0, 1, 1], [], []>} : vector<24x24xf32>, vector<24x32xf32>, vector<24x32xf32> -> vector<24x32xf32>
    %cst_84 = arith.constant dense<0.000000e+00> : vector<24xf32>
    %194 = vector.multi_reduction <add>, %193, %cst_84 [1] : vector<24x32xf32> to vector<24xf32>
    %195 = vector.shape_cast %194 : vector<24xf32> to vector<24x1xf32>
    %cst_85 = arith.constant 3.200000e+01 : f32
    %196 = vector.broadcast %cst_85 : f32 to vector<24x1xf32>
    %197 = arith.divf %195, %196 : vector<24x1xf32>
    %198 = vector.broadcast %197 : vector<24x1xf32> to vector<24x32xf32>
    %199 = arith.subf %193, %198 : vector<24x32xf32>
    %200 = arith.mulf %199, %199 : vector<24x32xf32>
    %cst_86 = arith.constant dense<0.000000e+00> : vector<24xf32>
    %201 = vector.multi_reduction <add>, %200, %cst_86 [1] : vector<24x32xf32> to vector<24xf32>
    %202 = vector.shape_cast %201 : vector<24xf32> to vector<24x1xf32>
    %cst_87 = arith.constant 3.200000e+01 : f32
    %203 = vector.broadcast %cst_87 : f32 to vector<24x1xf32>
    %204 = arith.divf %202, %203 : vector<24x1xf32>
    %cst_88 = arith.constant 9.99999974E-6 : f32
    %205 = vector.broadcast %cst_88 : f32 to vector<24x1xf32>
    %206 = arith.addf %204, %205 : vector<24x1xf32>
    %207 = math.rsqrt %206 : vector<24x1xf32>
    %208 = vector.broadcast %207 : vector<24x1xf32> to vector<24x32xf32>
    %209 = arith.mulf %199, %208 : vector<24x32xf32>
    %210 = vector.extract_strided_slice %31 {offsets = [0, 0], sizes = [1, 32], strides = [1, 1]} : vector<2x32xf32> to vector<1x32xf32>
    %211 = vector.shape_cast %210 : vector<1x32xf32> to vector<32xf32>
    %212 = vector.shape_cast %211 : vector<32xf32> to vector<1x32xf32>
    %213 = vector.broadcast %212 : vector<1x32xf32> to vector<24x32xf32>
    %214 = arith.mulf %209, %213 : vector<24x32xf32>
    %215 = vector.extract_strided_slice %32 {offsets = [0, 0], sizes = [1, 32], strides = [1, 1]} : vector<2x32xf32> to vector<1x32xf32>
    %216 = vector.shape_cast %215 : vector<1x32xf32> to vector<32xf32>
    %217 = vector.shape_cast %216 : vector<32xf32> to vector<1x32xf32>
    %218 = vector.broadcast %217 : vector<1x32xf32> to vector<24x32xf32>
    %219 = arith.addf %214, %218 : vector<24x32xf32>
    %cst_89 = arith.constant 0.000000e+00 : f32
    %220 = vector.broadcast %cst_89 : f32 to vector<24x32xf32>
    %221 = arith.maximumf %219, %220 : vector<24x32xf32>
    %222 = vector.extract_strided_slice %30 {offsets = [1, 0, 0], sizes = [1, 32, 32], strides = [1, 1, 1]} : vector<2x32x32xf32> to vector<1x32x32xf32>
    %223 = vector.shape_cast %222 : vector<1x32x32xf32> to vector<32x32xf32>
    %cst_90 = arith.constant dense<0.000000e+00> : vector<24x32xf32>
    %224 = tpu.matmul %221, %223, %cst_90 {dimension_numbers = #tpu.dot_dimension_numbers<[1], [0], [0], [1], [0, 0, 1, 1], [], []>} : vector<24x32xf32>, vector<32x32xf32>, vector<24x32xf32> -> vector<24x32xf32>
    %cst_91 = arith.constant dense<0.000000e+00> : vector<24x32xf32>
    %225 = tpu.matmul %189, %224, %cst_91 {dimension_numbers = #tpu.dot_dimension_numbers<[1], [0], [0], [1], [0, 0, 1, 1], [], []>} : vector<24x24xf32>, vector<24x32xf32>, vector<24x32xf32> -> vector<24x32xf32>
    %cst_92 = arith.constant dense<0.000000e+00> : vector<24xf32>
    %226 = vector.multi_reduction <add>, %225, %cst_92 [1] : vector<24x32xf32> to vector<24xf32>
    %227 = vector.shape_cast %226 : vector<24xf32> to vector<24x1xf32>
    %cst_93 = arith.constant 3.200000e+01 : f32
    %228 = vector.broadcast %cst_93 : f32 to vector<24x1xf32>
    %229 = arith.divf %227, %228 : vector<24x1xf32>
    %230 = vector.broadcast %229 : vector<24x1xf32> to vector<24x32xf32>
    %231 = arith.subf %225, %230 : vector<24x32xf32>
    %232 = arith.mulf %231, %231 : vector<24x32xf32>
    %cst_94 = arith.constant dense<0.000000e+00> : vector<24xf32>
    %233 = vector.multi_reduction <add>, %232, %cst_94 [1] : vector<24x32xf32> to vector<24xf32>
    %234 = vector.shape_cast %233 : vector<24xf32> to vector<24x1xf32>
    %cst_95 = arith.constant 3.200000e+01 : f32
    %235 = vector.broadcast %cst_95 : f32 to vector<24x1xf32>
    %236 = arith.divf %234, %235 : vector<24x1xf32>
    %cst_96 = arith.constant 9.99999974E-6 : f32
    %237 = vector.broadcast %cst_96 : f32 to vector<24x1xf32>
    %238 = arith.addf %236, %237 : vector<24x1xf32>
    %239 = math.rsqrt %238 : vector<24x1xf32>
    %240 = vector.broadcast %239 : vector<24x1xf32> to vector<24x32xf32>
    %241 = arith.mulf %231, %240 : vector<24x32xf32>
    %242 = vector.extract_strided_slice %31 {offsets = [1, 0], sizes = [1, 32], strides = [1, 1]} : vector<2x32xf32> to vector<1x32xf32>
    %243 = vector.shape_cast %242 : vector<1x32xf32> to vector<32xf32>
    %244 = vector.shape_cast %243 : vector<32xf32> to vector<1x32xf32>
    %245 = vector.broadcast %244 : vector<1x32xf32> to vector<24x32xf32>
    %246 = arith.mulf %241, %245 : vector<24x32xf32>
    %247 = vector.extract_strided_slice %32 {offsets = [1, 0], sizes = [1, 32], strides = [1, 1]} : vector<2x32xf32> to vector<1x32xf32>
    %248 = vector.shape_cast %247 : vector<1x32xf32> to vector<32xf32>
    %249 = vector.shape_cast %248 : vector<32xf32> to vector<1x32xf32>
    %250 = vector.broadcast %249 : vector<1x32xf32> to vector<24x32xf32>
    %251 = arith.addf %246, %250 : vector<24x32xf32>
    %cst_97 = arith.constant 0.000000e+00 : f32
    %252 = vector.broadcast %cst_97 : f32 to vector<24x32xf32>
    %253 = arith.maximumf %251, %252 : vector<24x32xf32>
    %c0_98 = arith.constant 0 : index
    %c0_99 = arith.constant 0 : index
    %254 = vector.load %arg8[%c0_98, %c0_99] : memref<2x24xf32, #tpu.memory_space<vmem>>, vector<2x24xf32>
    %cst_100 = arith.constant dense<0.000000e+00> : vector<2x32xf32>
    %255 = tpu.matmul %254, %253, %cst_100 {dimension_numbers = #tpu.dot_dimension_numbers<[1], [0], [0], [1], [0, 0, 1, 1], [], []>} : vector<2x24xf32>, vector<24x32xf32>, vector<2x32xf32> -> vector<2x32xf32>
    %c0_101 = arith.constant 0 : index
    %c0_102 = arith.constant 0 : index
    %256 = vector.load %arg9[%c0_101, %c0_102] : memref<2x24xf32, #tpu.memory_space<vmem>>, vector<2x24xf32>
    %cst_103 = arith.constant dense<0.000000e+00> : vector<2x32xf32>
    %257 = tpu.matmul %256, %253, %cst_103 {dimension_numbers = #tpu.dot_dimension_numbers<[1], [0], [0], [1], [0, 0, 1, 1], [], []>} : vector<2x24xf32>, vector<24x32xf32>, vector<2x32xf32> -> vector<2x32xf32>
    %c0_104 = arith.constant 0 : index
    %c0_105 = arith.constant 0 : index
    %258 = vector.load %arg20[%c0_104, %c0_105] : memref<96x32xf32, #tpu.memory_space<vmem>>, vector<96x32xf32>
    %259 = vector.extract_strided_slice %258 {offsets = [0, 0], sizes = [32, 32], strides = [1, 1]} : vector<96x32xf32> to vector<32x32xf32>
    %cst_106 = arith.constant dense<0.000000e+00> : vector<2x32xf32>
    %260 = tpu.matmul %255, %259, %cst_106 {dimension_numbers = #tpu.dot_dimension_numbers<[1], [0], [0], [1], [0, 0, 1, 1], [], []>} : vector<2x32xf32>, vector<32x32xf32>, vector<2x32xf32> -> vector<2x32xf32>
    %261 = vector.extract_strided_slice %258 {offsets = [32, 0], sizes = [32, 32], strides = [1, 1]} : vector<96x32xf32> to vector<32x32xf32>
    %cst_107 = arith.constant dense<0.000000e+00> : vector<2x32xf32>
    %262 = tpu.matmul %165, %261, %cst_107 {dimension_numbers = #tpu.dot_dimension_numbers<[1], [0], [0], [1], [0, 0, 1, 1], [], []>} : vector<2x32xf32>, vector<32x32xf32>, vector<2x32xf32> -> vector<2x32xf32>
    %263 = arith.addf %260, %262 : vector<2x32xf32>
    %264 = vector.extract_strided_slice %258 {offsets = [64, 0], sizes = [32, 32], strides = [1, 1]} : vector<96x32xf32> to vector<32x32xf32>
    %cst_108 = arith.constant dense<0.000000e+00> : vector<2x32xf32>
    %265 = tpu.matmul %257, %264, %cst_108 {dimension_numbers = #tpu.dot_dimension_numbers<[1], [0], [0], [1], [0, 0, 1, 1], [], []>} : vector<2x32xf32>, vector<32x32xf32>, vector<2x32xf32> -> vector<2x32xf32>
    %266 = arith.addf %263, %265 : vector<2x32xf32>
    %c0_109 = arith.constant 0 : index
    %c0_110 = arith.constant 0 : index
    %267 = vector.load %arg21[%c0_109, %c0_110] : memref<1x32xf32, #tpu.memory_space<vmem>>, vector<1x32xf32>
    %268 = vector.broadcast %267 : vector<1x32xf32> to vector<2x32xf32>
    %269 = arith.addf %266, %268 : vector<2x32xf32>
    %cst_111 = arith.constant 0.000000e+00 : f32
    %270 = vector.broadcast %cst_111 : f32 to vector<2x32xf32>
    %271 = arith.maximumf %269, %270 : vector<2x32xf32>
    %c0_112 = arith.constant 0 : index
    %c0_113 = arith.constant 0 : index
    %272 = vector.load %arg22[%c0_112, %c0_113] : memref<32x128xf32, #tpu.memory_space<vmem>>, vector<32x128xf32>
    %cst_114 = arith.constant dense<0.000000e+00> : vector<2x128xf32>
    %273 = tpu.matmul %271, %272, %cst_114 {dimension_numbers = #tpu.dot_dimension_numbers<[1], [0], [0], [1], [0, 0, 1, 1], [], []>} : vector<2x32xf32>, vector<32x128xf32>, vector<2x128xf32> -> vector<2x128xf32>
    %c0_115 = arith.constant 0 : index
    %c0_116 = arith.constant 0 : index
    %274 = vector.load %arg23[%c0_115, %c0_116] : memref<1x128xf32, #tpu.memory_space<vmem>>, vector<1x128xf32>
    %275 = vector.broadcast %274 : vector<1x128xf32> to vector<2x128xf32>
    %276 = arith.addf %273, %275 : vector<2x128xf32>
    %c0_117 = arith.constant 0 : index
    %c0_118 = arith.constant 0 : index
    %c0_119 = arith.constant 0 : index
    %277 = vector.load %arg24[%c0_117, %c0_118, %c0_119] : memref<1x2x128xf32, #tpu.memory_space<vmem>>, vector<1x2x128xf32>
    %278 = vector.shape_cast %277 : vector<1x2x128xf32> to vector<2x128xf32>
    %279 = vector.shape_cast %276 : vector<2x128xf32> to vector<1x2x128xf32>
    tpu.vector_store %arg24[%c0_117, %c0_118, %c0_119], %279 {strides = array<i32>} : memref<1x2x128xf32, #tpu.memory_space<vmem>>, vector<1x2x128xf32>,
    return
  }
  func.func @transform_0(%arg0: i32) -> (i32, i32, i32) {
    %c0_i32 = arith.constant 0 : i32
    %c0_i32_0 = arith.constant 0 : i32
    %c0_i32_1 = arith.constant 0 : i32
    return %arg0, %c0_i32, %c0_i32_0 : i32, i32, i32
  }
  func.func @transform_1(%arg0: i32) -> (i32, i32, i32) {
    %c0_i32 = arith.constant 0 : i32
    %c0_i32_0 = arith.constant 0 : i32
    %c0_i32_1 = arith.constant 0 : i32
    return %arg0, %c0_i32, %c0_i32_0 : i32, i32, i32
  }
  func.func @transform_2(%arg0: i32) -> (i32, i32) {
    %c0_i32 = arith.constant 0 : i32
    %c0_i32_0 = arith.constant 0 : i32
    %c0_i32_1 = arith.constant 0 : i32
    return %c0_i32, %c0_i32_0 : i32, i32
  }
  func.func @transform_3(%arg0: i32) -> (i32, i32) {
    %c0_i32 = arith.constant 0 : i32
    %c0_i32_0 = arith.constant 0 : i32
    %c0_i32_1 = arith.constant 0 : i32
    return %c0_i32, %c0_i32_0 : i32, i32
  }
  func.func @transform_4(%arg0: i32) -> (i32, i32) {
    %c0_i32 = arith.constant 0 : i32
    %c0_i32_0 = arith.constant 0 : i32
    %c0_i32_1 = arith.constant 0 : i32
    return %c0_i32, %c0_i32_0 : i32, i32
  }
  func.func @transform_5(%arg0: i32) -> (i32, i32) {
    %c0_i32 = arith.constant 0 : i32
    %c0_i32_0 = arith.constant 0 : i32
    %c0_i32_1 = arith.constant 0 : i32
    return %c0_i32, %c0_i32_0 : i32, i32
  }
  func.func @transform_6(%arg0: i32) -> (i32, i32) {
    %c0_i32 = arith.constant 0 : i32
    %c0_i32_0 = arith.constant 0 : i32
    %c0_i32_1 = arith.constant 0 : i32
    return %c0_i32, %c0_i32_0 : i32, i32
  }
  func.func @transform_7(%arg0: i32) -> (i32, i32) {
    %c0_i32 = arith.constant 0 : i32
    %c0_i32_0 = arith.constant 0 : i32
    %c0_i32_1 = arith.constant 0 : i32
    return %c0_i32, %c0_i32_0 : i32, i32
  }
  func.func @transform_8(%arg0: i32) -> (i32, i32) {
    %c0_i32 = arith.constant 0 : i32
    %c0_i32_0 = arith.constant 0 : i32
    %c0_i32_1 = arith.constant 0 : i32
    return %c0_i32, %c0_i32_0 : i32, i32
  }
  func.func @transform_9(%arg0: i32) -> (i32, i32) {
    %c0_i32 = arith.constant 0 : i32
    %c0_i32_0 = arith.constant 0 : i32
    %c0_i32_1 = arith.constant 0 : i32
    return %c0_i32, %c0_i32_0 : i32, i32
  }
  func.func @transform_10(%arg0: i32) -> (i32, i32) {
    %c0_i32 = arith.constant 0 : i32
    %c0_i32_0 = arith.constant 0 : i32
    %c0_i32_1 = arith.constant 0 : i32
    return %c0_i32, %c0_i32_0 : i32, i32
  }
  func.func @transform_11(%arg0: i32) -> (i32, i32) {
    %c0_i32 = arith.constant 0 : i32
    %c0_i32_0 = arith.constant 0 : i32
    %c0_i32_1 = arith.constant 0 : i32
    return %c0_i32, %c0_i32_0 : i32, i32
  }
  func.func @transform_12(%arg0: i32) -> (i32, i32) {
    %c0_i32 = arith.constant 0 : i32
    %c0_i32_0 = arith.constant 0 : i32
    %c0_i32_1 = arith.constant 0 : i32
    return %c0_i32, %c0_i32_0 : i32, i32
  }
  func.func @transform_13(%arg0: i32) -> (i32, i32, i32) {
    %c0_i32 = arith.constant 0 : i32
    %c0_i32_0 = arith.constant 0 : i32
    %c0_i32_1 = arith.constant 0 : i32
    %c0_i32_2 = arith.constant 0 : i32
    return %c0_i32, %c0_i32_0, %c0_i32_1 : i32, i32, i32
  }
  func.func @transform_14(%arg0: i32) -> (i32, i32) {
    %c0_i32 = arith.constant 0 : i32
    %c0_i32_0 = arith.constant 0 : i32
    %c0_i32_1 = arith.constant 0 : i32
    return %c0_i32, %c0_i32_0 : i32, i32
  }
  func.func @transform_15(%arg0: i32) -> (i32, i32) {
    %c0_i32 = arith.constant 0 : i32
    %c0_i32_0 = arith.constant 0 : i32
    %c0_i32_1 = arith.constant 0 : i32
    return %c0_i32, %c0_i32_0 : i32, i32
  }
  func.func @transform_16(%arg0: i32) -> (i32, i32, i32) {
    %c0_i32 = arith.constant 0 : i32
    %c0_i32_0 = arith.constant 0 : i32
    %c0_i32_1 = arith.constant 0 : i32
    %c0_i32_2 = arith.constant 0 : i32
    return %c0_i32, %c0_i32_0, %c0_i32_1 : i32, i32, i32
  }
  func.func @transform_17(%arg0: i32) -> (i32, i32) {
    %c0_i32 = arith.constant 0 : i32
    %c0_i32_0 = arith.constant 0 : i32
    %c0_i32_1 = arith.constant 0 : i32
    return %c0_i32, %c0_i32_0 : i32, i32
  }
  func.func @transform_18(%arg0: i32) -> (i32, i32) {
    %c0_i32 = arith.constant 0 : i32
    %c0_i32_0 = arith.constant 0 : i32
    %c0_i32_1 = arith.constant 0 : i32
    return %c0_i32, %c0_i32_0 : i32, i32
  }
  func.func @transform_19(%arg0: i32) -> (i32, i32) {
    %c0_i32 = arith.constant 0 : i32
    %c0_i32_0 = arith.constant 0 : i32
    %c0_i32_1 = arith.constant 0 : i32
    return %c0_i32, %c0_i32_0 : i32, i32
  }
  func.func @transform_20(%arg0: i32) -> (i32, i32) {
    %c0_i32 = arith.constant 0 : i32
    %c0_i32_0 = arith.constant 0 : i32
    %c0_i32_1 = arith.constant 0 : i32
    return %c0_i32, %c0_i32_0 : i32, i32
  }
  func.func @transform_21(%arg0: i32) -> (i32, i32) {
    %c0_i32 = arith.constant 0 : i32
    %c0_i32_0 = arith.constant 0 : i32
    %c0_i32_1 = arith.constant 0 : i32
    return %c0_i32, %c0_i32_0 : i32, i32
  }
  func.func @transform_22(%arg0: i32) -> (i32, i32) {
    %c0_i32 = arith.constant 0 : i32
    %c0_i32_0 = arith.constant 0 : i32
    %c0_i32_1 = arith.constant 0 : i32
    return %c0_i32, %c0_i32_0 : i32, i32
  }
  func.func @transform_23(%arg0: i32) -> (i32, i32, i32) {
    %c0_i32 = arith.constant 0 : i32
    %c0_i32_0 = arith.constant 0 : i32
    %c0_i32_1 = arith.constant 0 : i32
    return %arg0, %c0_i32, %c0_i32_0 : i32, i32, i32
  }
}

</mosaic_0001>

<llo_original>
// kernel: tokens_as_extra_graph_mean_forward.1
$region0: #{tokens_as_extra_graph_mean_forward.1}
  #allocation0 [shape = 'u32[]', space=smem, size = 0x4, offset = 0x4, fixed_abs, tag = 'smem constant byte address 0x4 - core index']
  #allocation1 [shape = 'u32[144,128]{1,0:T(1,128)}', space=vmem, size = 0x12000, scoped, tag = 'internal scratch']
  %s0 = inlined_call_operand.vmem [shape: f32[1,64,32], index: 0, kind: input, shape index: {}]
  %s1 = inlined_call_operand.vmem [shape: f32[1,16,32], index: 1, kind: input, shape index: {}]
  %s2 = inlined_call_operand.vmem [shape: f32[64,64], index: 2, kind: input, shape index: {}]
  %s3 = inlined_call_operand.vmem [shape: f32[24,24], index: 3, kind: input, shape index: {}]
  %s4 = inlined_call_operand.vmem [shape: f32[24,64], index: 4, kind: input, shape index: {}]
  %s5 = inlined_call_operand.vmem [shape: f32[24,16], index: 5, kind: input, shape index: {}]
  %s6 = inlined_call_operand.vmem [shape: f32[2,64], index: 6, kind: input, shape index: {}]
  %s7 = inlined_call_operand.vmem [shape: f32[2,24], index: 7, kind: input, shape index: {}]
  %s8 = inlined_call_operand.vmem [shape: f32[2,24], index: 8, kind: input, shape index: {}]
  %s9 = inlined_call_operand.vmem [shape: f32[32,128], index: 9, kind: input, shape index: {}]
  %s10 = inlined_call_operand.vmem [shape: f32[1,128], index: 10, kind: input, shape index: {}]
  %s11 = inlined_call_operand.vmem [shape: f32[32,64], index: 11, kind: input, shape index: {}]
  %s12 = inlined_call_operand.vmem [shape: f32[1,64], index: 12, kind: input, shape index: {}]
  %s13 = inlined_call_operand.vmem [shape: f32[2,32,32], index: 13, kind: input, shape index: {}]
  %s14 = inlined_call_operand.vmem [shape: f32[2,32], index: 14, kind: input, shape index: {}]
  %s15 = inlined_call_operand.vmem [shape: f32[2,32], index: 15, kind: input, shape index: {}]
  %s16 = inlined_call_operand.vmem [shape: f32[2,32,32], index: 16, kind: input, shape index: {}]
  %s17 = inlined_call_operand.vmem [shape: f32[2,32], index: 17, kind: input, shape index: {}]
  %s18 = inlined_call_operand.vmem [shape: f32[2,32], index: 18, kind: input, shape index: {}]
  %s19 = inlined_call_operand.vmem [shape: f32[96,32], index: 19, kind: input, shape index: {}]
  %s20 = inlined_call_operand.vmem [shape: f32[1,32], index: 20, kind: input, shape index: {}]
  %s21 = inlined_call_operand.vmem [shape: f32[32,128], index: 21, kind: input, shape index: {}]
  %s22 = inlined_call_operand.vmem [shape: f32[1,128], index: 22, kind: input, shape index: {}]
  %s23 = inlined_call_operand.hbm [shape: f32[1,2,128], index: 23, kind: output, shape index: {}]
  %s24 = sld [smem:[#allocation0]]
  $region102: #{tokens_as_extra_graph_mean_forward.1} parent=0
    _
  %s26 = ssub.s32 1, %s24
  %s27 = scalar_select 0, %s26, %s24
  $region1: #{tokens_as_extra_graph_mean_forward.1} parent=0
    #allocation2 [shape = 'u8[1024]{0}', space=vmem, size = 0x400, scoped, tag = 'output window, operand 0, single buffered']
    #allocation3 [shape = 's32[1]{0}', space=sflag, size = 0x4, scoped, tag = 'scoped memory for tokens_as_extra_graph_mean_forward.1']
    %28 = vsyncpa [#allocation3], 0
    // Predicated region
    $region2: #{tokens_as_extra_graph_mean_forward.1} parent=1 // pred_check
      _
    $region3: #{tokens_as_extra_graph_mean_forward.1} parent=1 // pred_check_branch
      %30 = sbr.rel (0) target = $region5
    $region4: #{tokens_as_extra_graph_mean_forward.1} parent=1 // pred_region
      _
    $region5: #{tokens_as_extra_graph_mean_forward.1} parent=1 // pred_fallthru
      _
    // Predicated region
    $region6: #{tokens_as_extra_graph_mean_forward.1} parent=1 // pred_check
      _
    $region7: #{tokens_as_extra_graph_mean_forward.1} parent=1 // pred_check_branch
      %32 = sbr.rel (0) target = $region9
    $region8: #{tokens_as_extra_graph_mean_forward.1} parent=1 // pred_region
      _
    $region9: #{tokens_as_extra_graph_mean_forward.1} parent=1 // pred_fallthru
      _
    // Predicated region
    $region10: #{tokens_as_extra_graph_mean_forward.1} parent=1 // pred_check
      _
    $region11: #{tokens_as_extra_graph_mean_forward.1} parent=1 // pred_check_branch
      %34 = sbr.rel (0) target = $region13
    $region12: #{tokens_as_extra_graph_mean_forward.1} parent=1 // pred_region
      _
    $region13: #{tokens_as_extra_graph_mean_forward.1} parent=1 // pred_fallthru
      _
    // Predicated region
    $region14: #{tokens_as_extra_graph_mean_forward.1} parent=1 // pred_check
      _
    $region15: #{tokens_as_extra_graph_mean_forward.1} parent=1 // pred_check_branch
      %36 = sbr.rel (0) target = $region17
    $region16: #{tokens_as_extra_graph_mean_forward.1} parent=1 // pred_region
      _
    $region17: #{tokens_as_extra_graph_mean_forward.1} parent=1 // pred_fallthru
      _
    // Predicated region
    $region18: #{tokens_as_extra_graph_mean_forward.1} parent=1 // pred_check
      _
    $region19: #{tokens_as_extra_graph_mean_forward.1} parent=1 // pred_check_branch
      %38 = sbr.rel (0) target = $region21
    $region20: #{tokens_as_extra_graph_mean_forward.1} parent=1 // pred_region
      _
    $region21: #{tokens_as_extra_graph_mean_forward.1} parent=1 // pred_fallthru
      _
    // Predicated region
    $region22: #{tokens_as_extra_graph_mean_forward.1} parent=1 // pred_check
      _
    $region23: #{tokens_as_extra_graph_mean_forward.1} parent=1 // pred_check_branch
      %40 = sbr.rel (0) target = $region25
    $region24: #{tokens_as_extra_graph_mean_forward.1} parent=1 // pred_region
      _
    $region25: #{tokens_as_extra_graph_mean_forward.1} parent=1 // pred_fallthru
      _
    // Predicated region
    $region26: #{tokens_as_extra_graph_mean_forward.1} parent=1 // pred_check
      _
    $region27: #{tokens_as_extra_graph_mean_forward.1} parent=1 // pred_check_branch
      %42 = sbr.rel (0) target = $region29
    $region28: #{tokens_as_extra_graph_mean_forward.1} parent=1 // pred_region
      _
    $region29: #{tokens_as_extra_graph_mean_forward.1} parent=1 // pred_fallthru
      _
    // Predicated region
    $region30: #{tokens_as_extra_graph_mean_forward.1} parent=1 // pred_check
      _
    $region31: #{tokens_as_extra_graph_mean_forward.1} parent=1 // pred_check_branch
      %44 = sbr.rel (0) target = $region33
    $region32: #{tokens_as_extra_graph_mean_forward.1} parent=1 // pred_region
      _
    $region33: #{tokens_as_extra_graph_mean_forward.1} parent=1 // pred_fallthru
      _
    // Predicated region
    $region34: #{tokens_as_extra_graph_mean_forward.1} parent=1 // pred_check
      _
    $region35: #{tokens_as_extra_graph_mean_forward.1} parent=1 // pred_check_branch
      %46 = sbr.rel (0) target = $region37
    $region36: #{tokens_as_extra_graph_mean_forward.1} parent=1 // pred_region
      _
    $region37: #{tokens_as_extra_graph_mean_forward.1} parent=1 // pred_fallthru
      _
    // Predicated region
    $region38: #{tokens_as_extra_graph_mean_forward.1} parent=1 // pred_check
      _
    $region39: #{tokens_as_extra_graph_mean_forward.1} parent=1 // pred_check_branch
      %48 = sbr.rel (0) target = $region41
    $region40: #{tokens_as_extra_graph_mean_forward.1} parent=1 // pred_region
      _
    $region41: #{tokens_as_extra_graph_mean_forward.1} parent=1 // pred_fallthru
      _
    // Predicated region
    $region42: #{tokens_as_extra_graph_mean_forward.1} parent=1 // pred_check
      _
    $region43: #{tokens_as_extra_graph_mean_forward.1} parent=1 // pred_check_branch
      %50 = sbr.rel (0) target = $region45
    $region44: #{tokens_as_extra_graph_mean_forward.1} parent=1 // pred_region
      _
    $region45: #{tokens_as_extra_graph_mean_forward.1} parent=1 // pred_fallthru
      _
    // Predicated region
    $region46: #{tokens_as_extra_graph_mean_forward.1} parent=1 // pred_check
      _
    $region47: #{tokens_as_extra_graph_mean_forward.1} parent=1 // pred_check_branch
      %52 = sbr.rel (0) target = $region49
    $region48: #{tokens_as_extra_graph_mean_forward.1} parent=1 // pred_region
      _
    $region49: #{tokens_as_extra_graph_mean_forward.1} parent=1 // pred_fallthru
      _
    // Predicated region
    $region50: #{tokens_as_extra_graph_mean_forward.1} parent=1 // pred_check
      _
    $region51: #{tokens_as_extra_graph_mean_forward.1} parent=1 // pred_check_branch
      %54 = sbr.rel (0) target = $region53
    $region52: #{tokens_as_extra_graph_mean_forward.1} parent=1 // pred_region
      _
    $region53: #{tokens_as_extra_graph_mean_forward.1} parent=1 // pred_fallthru
      _
    // Predicated region
    $region54: #{tokens_as_extra_graph_mean_forward.1} parent=1 // pred_check
      _
    $region55: #{tokens_as_extra_graph_mean_forward.1} parent=1 // pred_check_branch
      %56 = sbr.rel (0) target = $region57
    $region56: #{tokens_as_extra_graph_mean_forward.1} parent=1 // pred_region
      _
    $region57: #{tokens_as_extra_graph_mean_forward.1} parent=1 // pred_fallthru
      _
    // Predicated region
    $region58: #{tokens_as_extra_graph_mean_forward.1} parent=1 // pred_check
      _
    $region59: #{tokens_as_extra_graph_mean_forward.1} parent=1 // pred_check_branch
      %58 = sbr.rel (0) target = $region61
    $region60: #{tokens_as_extra_graph_mean_forward.1} parent=1 // pred_region
      _
    $region61: #{tokens_as_extra_graph_mean_forward.1} parent=1 // pred_fallthru
      _
    // Predicated region
    $region62: #{tokens_as_extra_graph_mean_forward.1} parent=1 // pred_check
      _
    $region63: #{tokens_as_extra_graph_mean_forward.1} parent=1 // pred_check_branch
      %60 = sbr.rel (0) target = $region65
    $region64: #{tokens_as_extra_graph_mean_forward.1} parent=1 // pred_region
      _
    $region65: #{tokens_as_extra_graph_mean_forward.1} parent=1 // pred_fallthru
      _
    // Predicated region
    $region66: #{tokens_as_extra_graph_mean_forward.1} parent=1 // pred_check
      _
    $region67: #{tokens_as_extra_graph_mean_forward.1} parent=1 // pred_check_branch
      %62 = sbr.rel (0) target = $region69
    $region68: #{tokens_as_extra_graph_mean_forward.1} parent=1 // pred_region
      _
    $region69: #{tokens_as_extra_graph_mean_forward.1} parent=1 // pred_fallthru
      _
    // Predicated region
    $region70: #{tokens_as_extra_graph_mean_forward.1} parent=1 // pred_check
      _
    $region71: #{tokens_as_extra_graph_mean_forward.1} parent=1 // pred_check_branch
      %64 = sbr.rel (0) target = $region73
    $region72: #{tokens_as_extra_graph_mean_forward.1} parent=1 // pred_region
      _
    $region73: #{tokens_as_extra_graph_mean_forward.1} parent=1 // pred_fallthru
      _
    // Predicated region
    $region74: #{tokens_as_extra_graph_mean_forward.1} parent=1 // pred_check
      _
    $region75: #{tokens_as_extra_graph_mean_forward.1} parent=1 // pred_check_branch
      %66 = sbr.rel (0) target = $region77
    $region76: #{tokens_as_extra_graph_mean_forward.1} parent=1 // pred_region
      _
    $region77: #{tokens_as_extra_graph_mean_forward.1} parent=1 // pred_fallthru
      _
    // Predicated region
    $region78: #{tokens_as_extra_graph_mean_forward.1} parent=1 // pred_check
      _
    $region79: #{tokens_as_extra_graph_mean_forward.1} parent=1 // pred_check_branch
      %68 = sbr.rel (0) target = $region81
    $region80: #{tokens_as_extra_graph_mean_forward.1} parent=1 // pred_region
      _
    $region81: #{tokens_as_extra_graph_mean_forward.1} parent=1 // pred_fallthru
      _
    // Predicated region
    $region82: #{tokens_as_extra_graph_mean_forward.1} parent=1 // pred_check
      _
    $region83: #{tokens_as_extra_graph_mean_forward.1} parent=1 // pred_check_branch
      %70 = sbr.rel (0) target = $region85
    $region84: #{tokens_as_extra_graph_mean_forward.1} parent=1 // pred_region
      _
    $region85: #{tokens_as_extra_graph_mean_forward.1} parent=1 // pred_fallthru
      _
    // Predicated region
    $region86: #{tokens_as_extra_graph_mean_forward.1} parent=1 // pred_check
      _
    $region87: #{tokens_as_extra_graph_mean_forward.1} parent=1 // pred_check_branch
      %72 = sbr.rel (0) target = $region89
    $region88: #{tokens_as_extra_graph_mean_forward.1} parent=1 // pred_region
      _
    $region89: #{tokens_as_extra_graph_mean_forward.1} parent=1 // pred_fallthru
      _
    // Predicated region
    $region90: #{tokens_as_extra_graph_mean_forward.1} parent=1 // pred_check
      _
    $region91: #{tokens_as_extra_graph_mean_forward.1} parent=1 // pred_check_branch
      %74 = sbr.rel (0) target = $region93
    $region92: #{tokens_as_extra_graph_mean_forward.1} parent=1 // pred_region
      _
    $region93: #{tokens_as_extra_graph_mean_forward.1} parent=1 // pred_fallthru
      _
    %v75 = vld [vmem:[%s0] sm:$0xff]
    %v76 = vld [vmem:[%s0 + $0x8] sm:$0xff]
    %v77 = vld [vmem:[%s0 + $0x10] sm:$0xff]
    %v78 = vld [vmem:[%s0 + $0x18] sm:$0xff]
    %v79 = vld [vmem:[%s0 + $0x20] sm:$0xff]
    %v80 = vld [vmem:[%s0 + $0x28] sm:$0xff]
    %v81 = vld [vmem:[%s0 + $0x30] sm:$0xff]
    %v82 = vld [vmem:[%s0 + $0x38] sm:$0xff]
    %v83 = vld [vmem:[%s2] sm:$0xff]
    %v84 = vld [vmem:[%s2 + $0x8] sm:$0xff]
    %v85 = vld [vmem:[%s2 + $0x10] sm:$0xff]
    %v86 = vld [vmem:[%s2 + $0x18] sm:$0xff]
    %v87 = vld [vmem:[%s2 + $0x20] sm:$0xff]
    %v88 = vld [vmem:[%s2 + $0x28] sm:$0xff]
    %v89 = vld [vmem:[%s2 + $0x30] sm:$0xff]
    %v90 = vld [vmem:[%s2 + $0x38] sm:$0xff]
    %v91 = vld [vmem:[%s9] sm:$0xff]
    %v92 = vld [vmem:[%s9 + $0x8] sm:$0xff]
    %v93 = vld [vmem:[%s9 + $0x10] sm:$0xff]
    %v94 = vld [vmem:[%s9 + $0x18] sm:$0xff]
    %v95 = vld [vmem:[%s10] sm:$0x1]
    %v97 = vlaneseq
    %v98 = vshrl.u32 %v97, 7
    %v99 = vsub.s32 0, %v98
    %v100 = vrot.slane %v95, %v99
    %vm102 = vcmask 261120
    %v104 = vsel %vm102, %v75, 0
    %v107 = vsel %vm102, %v76, 0
    %v110 = vsel %vm102, %v77, 0
    %v113 = vsel %vm102, %v78, 0
    %v116 = vsel %vm102, %v79, 0
    %v119 = vsel %vm102, %v80, 0
    %v122 = vsel %vm102, %v81, 0
    %v125 = vsel %vm102, %v82, 0
    %127 = vmatprep.subr.mxu0 0.0
    %128 = vmatpush1.msra.mxu0 0.0
    %129 = vmatprep.subr.mxu0 0.0
    %130 = vmatpush1.msra.mxu0 0.0
    %131 = vmatprep.subr.mxu0 0.0
    %132 = vmatpush1.msra.mxu0 0.0
    %133 = vmatprep.subr.mxu0 0.0
    %134 = vmatpush1.msra.mxu0 0.0
    %135 = vmatprep.subr.mxu0 0.0
    %136 = vmatpush1.msra.mxu0 0.0
    %137 = vmatprep.subr.mxu0 0.0
    %138 = vmatpush1.msra.mxu0 0.0
    %139 = vmatprep.subr.mxu0 0.0
    %140 = vmatpush1.msra.mxu0 0.0
    %141 = vmatprep.subr.mxu0 0.0
    %142 = vmatpush1.msra.mxu0 0.0
    %143 = vmatprep.subr.mxu0 0.0
    %144 = vmatpush1.msra.mxu0 0.0
    %145 = vmatprep.subr.mxu0 0.0
    %146 = vmatpush1.msra.mxu0 0.0
    %147 = vmatprep.subr.mxu0 0.0
    %148 = vmatpush1.msra.mxu0 0.0
    %149 = vmatprep.subr.mxu0 0.0
    %150 = vmatpush1.msra.mxu0 0.0
    %151 = vmatprep.subr.mxu0 0.0
    %152 = vmatpush1.msra.mxu0 %v94
    %153 = vmatprep.subr.mxu0 0.0
    %154 = vmatpush1.msra.mxu0 %v93
    %155 = vmatprep.subr.mxu0 0.0
    %156 = vmatpush1.msra.mxu0 %v92
    %157 = vmatprep.subr.mxu0 0.0
    %158 = vmatpush1.msra.mxu0 %v91
    %159 = vmatprep.subr.mxu0 0.0
    %160 = vmatpush2.msra.mxu0 0.0
    %161 = vmatprep.subr.mxu0 0.0
    %162 = vmatpush2.msra.mxu0 0.0
    %163 = vmatprep.subr.mxu0 0.0
    %164 = vmatpush2.msra.mxu0 0.0
    %165 = vmatprep.subr.mxu0 0.0
    %166 = vmatpush2.msra.mxu0 0.0
    %167 = vmatprep.subr.mxu0 0.0
    %168 = vmatpush2.msra.mxu0 0.0
    %169 = vmatprep.subr.mxu0 0.0
    %170 = vmatpush2.msra.mxu0 0.0
    %171 = vmatprep.subr.mxu0 0.0
    %172 = vmatpush2.msra.mxu0 0.0
    %173 = vmatprep.subr.mxu0 0.0
    %174 = vmatpush2.msra.mxu0 0.0
    %175 = vmatprep.subr.mxu0 0.0
    %176 = vmatpush2.msra.mxu0 0.0
    %177 = vmatprep.subr.mxu0 0.0
    %178 = vmatpush2.msra.mxu0 0.0
    %179 = vmatprep.subr.mxu0 0.0
    %180 = vmatpush2.msra.mxu0 0.0
    %181 = vmatprep.subr.mxu0 0.0
    %182 = vmatpush2.msra.mxu0 0.0
    %183 = vmatprep.subr.mxu0 0.0
    %184 = vmatpush2.msra.mxu0 0.0
    %185 = vmatprep.subr.mxu0 0.0
    %186 = vmatpush2.msra.mxu0 0.0
    %187 = vmatprep.subr.mxu0 0.0
    %188 = vmatpush2.msra.mxu0 0.0
    %189 = vmatprep.subr.mxu0 0.0
    %190 = vmatpush2.msra.mxu0 0.0
    %191 = vmatprep.mubr.f32.mxu0 0.0
    %192 = vmatmul.mubr.f32.gmra.mxu0 %v104
    %v193 = vpop.f32.mrf.mxu0
    %v194 = vadd.f32 %v100, %v193
    %v195 = vpop.f32.mrf.mxu0
    %196 = vmatprep.mubr.f32.mxu0 0.0
    %197 = vmatmul.mubr.f32.gmra.mxu0 %v107
    %v198 = vpop.f32.mrf.mxu0
    %v199 = vadd.f32 %v100, %v198
    %v200 = vpop.f32.mrf.mxu0
    %201 = vmatprep.mubr.f32.mxu0 0.0
    %202 = vmatmul.mubr.f32.gmra.mxu0 %v110
    %v203 = vpop.f32.mrf.mxu0
    %v204 = vadd.f32 %v100, %v203
    %v205 = vpop.f32.mrf.mxu0
    %206 = vmatprep.mubr.f32.mxu0 0.0
    %207 = vmatmul.mubr.f32.gmra.mxu0 %v113
    %v208 = vpop.f32.mrf.mxu0
    %v209 = vadd.f32 %v100, %v208
    %v210 = vpop.f32.mrf.mxu0
    %211 = vmatprep.mubr.f32.mxu0 0.0
    %212 = vmatmul.mubr.f32.gmra.mxu0 %v116
    %v213 = vpop.f32.mrf.mxu0
    %v214 = vadd.f32 %v100, %v213
    %v215 = vpop.f32.mrf.mxu0
    %216 = vmatprep.mubr.f32.mxu0 0.0
    %217 = vmatmul.mubr.f32.gmra.mxu0 %v119
    %v218 = vpop.f32.mrf.mxu0
    %v219 = vadd.f32 %v100, %v218
    %v220 = vpop.f32.mrf.mxu0
    %221 = vmatprep.mubr.f32.mxu0 0.0
    %222 = vmatmul.mubr.f32.gmra.mxu0 %v122
    %v223 = vpop.f32.mrf.mxu0
    %v224 = vadd.f32 %v100, %v223
    %v225 = vpop.f32.mrf.mxu0
    %226 = vmatprep.mubr.f32.mxu0 0.0
    %227 = vmatmul.mubr.f32.gmra.mxu0 %v125
    %v228 = vpop.f32.mrf.mxu0
    %v229 = vadd.f32 %v100, %v228
    %v230 = vpop.f32.mrf.mxu0
    %231 = vdwg.mxu0
    %240 = vrot.lane.b32.xlu0 %v194, 96
    %v241 = vpop.permute.xlu0 %240
    %242 = vrot.lane.b32.xlu0 %v199, 96
    %v243 = vpop.permute.xlu0 %242
    %244 = vrot.lane.b32.xlu0 %v204, 96
    %v245 = vpop.permute.xlu0 %244
    %246 = vrot.lane.b32.xlu0 %v209, 96
    %v247 = vpop.permute.xlu0 %246
    %248 = vrot.lane.b32.xlu0 %v214, 96
    %v249 = vpop.permute.xlu0 %248
    %250 = vrot.lane.b32.xlu0 %v219, 96
    %v251 = vpop.permute.xlu0 %250
    %252 = vrot.lane.b32.xlu0 %v224, 96
    %v253 = vpop.permute.xlu0 %252
    %254 = vrot.lane.b32.xlu0 %v229, 96
    %v255 = vpop.permute.xlu0 %254
    %v256 = vsel %vm102, %v194, 0
    %v258 = vsel %vm102, %v199, 0
    %v260 = vsel %vm102, %v204, 0
    %v262 = vsel %vm102, %v209, 0
    %v264 = vsel %vm102, %v214, 0
    %v266 = vsel %vm102, %v219, 0
    %v268 = vsel %vm102, %v224, 0
    %v270 = vsel %vm102, %v229, 0
    %v272 = vsel %vm102, %v241, 0
    %v274 = vsel %vm102, %v243, 0
    %v276 = vsel %vm102, %v245, 0
    %v278 = vsel %vm102, %v247, 0
    %v280 = vsel %vm102, %v249, 0
    %v282 = vsel %vm102, %v251, 0
    %v284 = vsel %vm102, %v253, 0
    %v286 = vsel %vm102, %v255, 0
    %288 = vmatprep.subr.mxu0 0.0
    %289 = vmatpush1.xpose.msra.mxu0 0.0
    %290 = vmatprep.subr.mxu0 0.0
    %291 = vmatpush1.xpose.msra.mxu0 0.0
    %292 = vmatprep.subr.mxu0 0.0
    %293 = vmatpush1.xpose.msra.mxu0 0.0
    %294 = vmatprep.subr.mxu0 0.0
    %295 = vmatpush1.xpose.msra.mxu0 0.0
    %296 = vmatprep.subr.mxu0 0.0
    %297 = vmatpush1.xpose.msra.mxu0 0.0
    %298 = vmatprep.subr.mxu0 0.0
    %299 = vmatpush1.xpose.msra.mxu0 0.0
    %300 = vmatprep.subr.mxu0 0.0
    %301 = vmatpush1.xpose.msra.mxu0 0.0
    %302 = vmatprep.subr.mxu0 0.0
    %303 = vmatpush1.xpose.msra.mxu0 0.0
    %304 = vmatprep.subr.mxu0 0.0
    %305 = vmatpush1.xpose.msra.mxu0 %v286
    %306 = vmatprep.subr.mxu0 0.0
    %307 = vmatpush1.xpose.msra.mxu0 %v284
    %308 = vmatprep.subr.mxu0 0.0
    %309 = vmatpush1.xpose.msra.mxu0 %v282
    %310 = vmatprep.subr.mxu0 0.0
    %311 = vmatpush1.xpose.msra.mxu0 %v280
    %312 = vmatprep.subr.mxu0 0.0
    %313 = vmatpush1.xpose.msra.mxu0 %v278
    %314 = vmatprep.subr.mxu0 0.0
    %315 = vmatpush1.xpose.msra.mxu0 %v276
    %316 = vmatprep.subr.mxu0 0.0
    %317 = vmatpush1.xpose.msra.mxu0 %v274
    %318 = vmatprep.subr.mxu0 0.0
    %319 = vmatpush1.xpose.msra.mxu0 %v272
    %320 = vmatprep.subr.mxu0 0.0
    %321 = vmatpush2.xpose.msra.mxu0 0.0
    %322 = vmatprep.subr.mxu0 0.0
    %323 = vmatpush2.xpose.msra.mxu0 0.0
    %324 = vmatprep.subr.mxu0 0.0
    %325 = vmatpush2.xpose.msra.mxu0 0.0
    %326 = vmatprep.subr.mxu0 0.0
    %327 = vmatpush2.xpose.msra.mxu0 0.0
    %328 = vmatprep.subr.mxu0 0.0
    %329 = vmatpush2.xpose.msra.mxu0 0.0
    %330 = vmatprep.subr.mxu0 0.0
    %331 = vmatpush2.xpose.msra.mxu0 0.0
    %332 = vmatprep.subr.mxu0 0.0
    %333 = vmatpush2.xpose.msra.mxu0 0.0
    %334 = vmatprep.subr.mxu0 0.0
    %335 = vmatpush2.xpose.msra.mxu0 0.0
    %336 = vmatprep.subr.mxu0 0.0
    %337 = vmatpush2.xpose.msra.mxu0 0.0
    %338 = vmatprep.subr.mxu0 0.0
    %339 = vmatpush2.xpose.msra.mxu0 0.0
    %340 = vmatprep.subr.mxu0 0.0
    %341 = vmatpush2.xpose.msra.mxu0 0.0
    %342 = vmatprep.subr.mxu0 0.0
    %343 = vmatpush2.xpose.msra.mxu0 0.0
    %344 = vmatprep.subr.mxu0 0.0
    %345 = vmatpush2.xpose.msra.mxu0 0.0
    %346 = vmatprep.subr.mxu0 0.0
    %347 = vmatpush2.xpose.msra.mxu0 0.0
    %348 = vmatprep.subr.mxu0 0.0
    %349 = vmatpush2.xpose.msra.mxu0 0.0
    %350 = vmatprep.subr.mxu0 0.0
    %351 = vmatpush2.xpose.msra.mxu0 0.0
    %352 = vmatprep.mubr.f32.mxu0 0.0
    %353 = vmatmul.mubr.f32.gmra.mxu0 %v256
    %v354 = vpop.f32.mrf.mxu0
    %v355 = vadd.f32 0.0, %v354
    %v356 = vpop.f32.mrf.mxu0
    %357 = vmatprep.mubr.f32.mxu0 0.0
    %358 = vmatmul.mubr.f32.gmra.mxu0 %v258
    %v359 = vpop.f32.mrf.mxu0
    %v360 = vadd.f32 0.0, %v359
    %v361 = vpop.f32.mrf.mxu0
    %362 = vmatprep.mubr.f32.mxu0 0.0
    %363 = vmatmul.mubr.f32.gmra.mxu0 %v260
    %v364 = vpop.f32.mrf.mxu0
    %v365 = vadd.f32 0.0, %v364
    %v366 = vpop.f32.mrf.mxu0
    %367 = vmatprep.mubr.f32.mxu0 0.0
    %368 = vmatmul.mubr.f32.gmra.mxu0 %v262
    %v369 = vpop.f32.mrf.mxu0
    %v370 = vadd.f32 0.0, %v369
    %v371 = vpop.f32.mrf.mxu0
    %372 = vmatprep.mubr.f32.mxu0 0.0
    %373 = vmatmul.mubr.f32.gmra.mxu0 %v264
    %v374 = vpop.f32.mrf.mxu0
    %v375 = vadd.f32 0.0, %v374
    %v376 = vpop.f32.mrf.mxu0
    %377 = vmatprep.mubr.f32.mxu0 0.0
    %378 = vmatmul.mubr.f32.gmra.mxu0 %v266
    %v379 = vpop.f32.mrf.mxu0
    %v380 = vadd.f32 0.0, %v379
    %v381 = vpop.f32.mrf.mxu0
    %382 = vmatprep.mubr.f32.mxu0 0.0
    %383 = vmatmul.mubr.f32.gmra.mxu0 %v268
    %v384 = vpop.f32.mrf.mxu0
    %v385 = vadd.f32 0.0, %v384
    %v386 = vpop.f32.mrf.mxu0
    %387 = vmatprep.mubr.f32.mxu0 0.0
    %388 = vmatmul.mubr.f32.gmra.mxu0 %v270
    %v389 = vpop.f32.mrf.mxu0
    %v390 = vadd.f32 0.0, %v389
    %v391 = vpop.f32.mrf.mxu0
    %392 = vdwg.mxu0
    %v393 = vmul.f32 %v355, %v355
    %v394 = vmul.f32 %v360, %v360
    %v395 = vmul.f32 %v365, %v365
    %v396 = vmul.f32 %v370, %v370
    %v397 = vmul.f32 %v375, %v375
    %v398 = vmul.f32 %v380, %v380
    %v399 = vmul.f32 %v385, %v385
    %v400 = vmul.f32 %v390, %v390
    %v401 = vmul.f32 %v393, %v83
    %v402 = vmul.f32 %v394, %v84
    %v403 = vmul.f32 %v395, %v85
    %v404 = vmul.f32 %v396, %v86
    %v405 = vmul.f32 %v397, %v87
    %v406 = vmul.f32 %v398, %v88
    %v407 = vmul.f32 %v399, %v89
    %v408 = vmul.f32 %v400, %v90
    %vm409 = vcmask 523264
    %v410 = vsel %vm409, %v401, 0.0
    %411 = vadd.xlane.f32.xlu0 %v410
    %v412 = vpop.xlane.xlu0 %411
    %v413 = vsel %vm409, %v402, 0.0
    %414 = vadd.xlane.f32.xlu0 %v413
    %v415 = vpop.xlane.xlu0 %414
    %v416 = vsel %vm409, %v403, 0.0
    %417 = vadd.xlane.f32.xlu0 %v416
    %v418 = vpop.xlane.xlu0 %417
    %v419 = vsel %vm409, %v404, 0.0
    %420 = vadd.xlane.f32.xlu0 %v419
    %v421 = vpop.xlane.xlu0 %420
    %v422 = vsel %vm409, %v405, 0.0
    %423 = vadd.xlane.f32.xlu0 %v422
    %v424 = vpop.xlane.xlu0 %423
    %v425 = vsel %vm409, %v406, 0.0
    %426 = vadd.xlane.f32.xlu0 %v425
    %v427 = vpop.xlane.xlu0 %426
    %v428 = vsel %vm409, %v407, 0.0
    %429 = vadd.xlane.f32.xlu0 %v428
    %v430 = vpop.xlane.xlu0 %429
    %v431 = vsel %vm409, %v408, 0.0
    %432 = vadd.xlane.f32.xlu0 %v431
    %v433 = vpop.xlane.xlu0 %432
    %v434 = vmax.f32 %v412, 1e-12
    %v435 = vmax.f32 %v415, 1e-12
    %v436 = vmax.f32 %v418, 1e-12
    %v437 = vmax.f32 %v421, 1e-12
    %v438 = vmax.f32 %v424, 1e-12
    %v439 = vmax.f32 %v427, 1e-12
    %v440 = vmax.f32 %v430, 1e-12
    %v441 = vmax.f32 %v433, 1e-12
    %v442 = vrcp.pop %v434
    %v443 = vmul.f32 %v401, %v442
    %v444 = vrcp.pop %v435
    %v445 = vmul.f32 %v402, %v444
    %v446 = vrcp.pop %v436
    %v447 = vmul.f32 %v403, %v446
    %v448 = vrcp.pop %v437
    %v449 = vmul.f32 %v404, %v448
    %v450 = vrcp.pop %v438
    %v451 = vmul.f32 %v405, %v450
    %v452 = vrcp.pop %v439
    %v453 = vmul.f32 %v406, %v452
    %v454 = vrcp.pop %v440
    %v455 = vmul.f32 %v407, %v454
    %v456 = vrcp.pop %v441
    %v457 = vmul.f32 %v408, %v456
    %458 = vrot.lane.b32.xlu0 %v194, 64
    %v459 = vpop.permute.xlu0 %458
    %460 = vrot.lane.b32.xlu0 %v199, 64
    %v461 = vpop.permute.xlu0 %460
    %462 = vrot.lane.b32.xlu0 %v204, 64
    %v463 = vpop.permute.xlu0 %462
    %464 = vrot.lane.b32.xlu0 %v209, 64
    %v465 = vpop.permute.xlu0 %464
    %466 = vrot.lane.b32.xlu0 %v214, 64
    %v467 = vpop.permute.xlu0 %466
    %468 = vrot.lane.b32.xlu0 %v219, 64
    %v469 = vpop.permute.xlu0 %468
    %470 = vrot.lane.b32.xlu0 %v224, 64
    %v471 = vpop.permute.xlu0 %470
    %472 = vrot.lane.b32.xlu0 %v229, 64
    %v473 = vpop.permute.xlu0 %472
    %474 = vrot.lane.b32.xlu0 %v194, 32
    %v475 = vpop.permute.xlu0 %474
    %476 = vrot.lane.b32.xlu0 %v199, 32
    %v477 = vpop.permute.xlu0 %476
    %478 = vrot.lane.b32.xlu0 %v204, 32
    %v479 = vpop.permute.xlu0 %478
    %480 = vrot.lane.b32.xlu0 %v209, 32
    %v481 = vpop.permute.xlu0 %480
    %482 = vrot.lane.b32.xlu0 %v214, 32
    %v483 = vpop.permute.xlu0 %482
    %484 = vrot.lane.b32.xlu0 %v219, 32
    %v485 = vpop.permute.xlu0 %484
    %486 = vrot.lane.b32.xlu0 %v224, 32
    %v487 = vpop.permute.xlu0 %486
    %488 = vrot.lane.b32.xlu0 %v229, 32
    %v489 = vpop.permute.xlu0 %488
    %v490 = vsel %vm102, %v459, 0
    %v492 = vsel %vm102, %v461, 0
    %v494 = vsel %vm102, %v463, 0
    %v496 = vsel %vm102, %v465, 0
    %v498 = vsel %vm102, %v467, 0
    %v500 = vsel %vm102, %v469, 0
    %v502 = vsel %vm102, %v471, 0
    %v504 = vsel %vm102, %v473, 0
    %v506 = vsel %vm102, %v475, 0
    %v508 = vsel %vm102, %v477, 0
    %v510 = vsel %vm102, %v479, 0
    %v512 = vsel %vm102, %v481, 0
    %v514 = vsel %vm102, %v483, 0
    %v516 = vsel %vm102, %v485, 0
    %v518 = vsel %vm102, %v487, 0
    %v520 = vsel %vm102, %v489, 0
    %522 = vmatprep.subr.mxu0 0.0
    %523 = vmatpush1.xpose.msra.mxu0 0.0
    %524 = vmatprep.subr.mxu0 0.0
    %525 = vmatpush1.xpose.msra.mxu0 0.0
    %526 = vmatprep.subr.mxu0 0.0
    %527 = vmatpush1.xpose.msra.mxu0 0.0
    %528 = vmatprep.subr.mxu0 0.0
    %529 = vmatpush1.xpose.msra.mxu0 0.0
    %530 = vmatprep.subr.mxu0 0.0
    %531 = vmatpush1.xpose.msra.mxu0 0.0
    %532 = vmatprep.subr.mxu0 0.0
    %533 = vmatpush1.xpose.msra.mxu0 0.0
    %534 = vmatprep.subr.mxu0 0.0
    %535 = vmatpush1.xpose.msra.mxu0 0.0
    %536 = vmatprep.subr.mxu0 0.0
    %537 = vmatpush1.xpose.msra.mxu0 0.0
    %538 = vmatprep.subr.mxu0 0.0
    %539 = vmatpush1.xpose.msra.mxu0 %v520
    %540 = vmatprep.subr.mxu0 0.0
    %541 = vmatpush1.xpose.msra.mxu0 %v518
    %542 = vmatprep.subr.mxu0 0.0
    %543 = vmatpush1.xpose.msra.mxu0 %v516
    %544 = vmatprep.subr.mxu0 0.0
    %545 = vmatpush1.xpose.msra.mxu0 %v514
    %546 = vmatprep.subr.mxu0 0.0
    %547 = vmatpush1.xpose.msra.mxu0 %v512
    %548 = vmatprep.subr.mxu0 0.0
    %549 = vmatpush1.xpose.msra.mxu0 %v510
    %550 = vmatprep.subr.mxu0 0.0
    %551 = vmatpush1.xpose.msra.mxu0 %v508
    %552 = vmatprep.subr.mxu0 0.0
    %553 = vmatpush1.xpose.msra.mxu0 %v506
    %554 = vmatprep.subr.mxu0 0.0
    %555 = vmatpush2.xpose.msra.mxu0 0.0
    %556 = vmatprep.subr.mxu0 0.0
    %557 = vmatpush2.xpose.msra.mxu0 0.0
    %558 = vmatprep.subr.mxu0 0.0
    %559 = vmatpush2.xpose.msra.mxu0 0.0
    %560 = vmatprep.subr.mxu0 0.0
    %561 = vmatpush2.xpose.msra.mxu0 0.0
    %562 = vmatprep.subr.mxu0 0.0
    %563 = vmatpush2.xpose.msra.mxu0 0.0
    %564 = vmatprep.subr.mxu0 0.0
    %565 = vmatpush2.xpose.msra.mxu0 0.0
    %566 = vmatprep.subr.mxu0 0.0
    %567 = vmatpush2.xpose.msra.mxu0 0.0
    %568 = vmatprep.subr.mxu0 0.0
    %569 = vmatpush2.xpose.msra.mxu0 0.0
    %570 = vmatprep.subr.mxu0 0.0
    %571 = vmatpush2.xpose.msra.mxu0 0.0
    %572 = vmatprep.subr.mxu0 0.0
    %573 = vmatpush2.xpose.msra.mxu0 0.0
    %574 = vmatprep.subr.mxu0 0.0
    %575 = vmatpush2.xpose.msra.mxu0 0.0
    %576 = vmatprep.subr.mxu0 0.0
    %577 = vmatpush2.xpose.msra.mxu0 0.0
    %578 = vmatprep.subr.mxu0 0.0
    %579 = vmatpush2.xpose.msra.mxu0 0.0
    %580 = vmatprep.subr.mxu0 0.0
    %581 = vmatpush2.xpose.msra.mxu0 0.0
    %582 = vmatprep.subr.mxu0 0.0
    %583 = vmatpush2.xpose.msra.mxu0 0.0
    %584 = vmatprep.subr.mxu0 0.0
    %585 = vmatpush2.xpose.msra.mxu0 0.0
    %586 = vmatprep.mubr.f32.mxu0 0.0
    %587 = vmatmul.mubr.f32.gmra.mxu0 %v490
    %v588 = vpop.f32.mrf.mxu0
    %v589 = vadd.f32 0.0, %v588
    %v590 = vpop.f32.mrf.mxu0
    %591 = vmatprep.mubr.f32.mxu0 0.0
    %592 = vmatmul.mubr.f32.gmra.mxu0 %v492
    %v593 = vpop.f32.mrf.mxu0
    %v594 = vadd.f32 0.0, %v593
    %v595 = vpop.f32.mrf.mxu0
    %596 = vmatprep.mubr.f32.mxu0 0.0
    %597 = vmatmul.mubr.f32.gmra.mxu0 %v494
    %v598 = vpop.f32.mrf.mxu0
    %v599 = vadd.f32 0.0, %v598
    %v600 = vpop.f32.mrf.mxu0
    %601 = vmatprep.mubr.f32.mxu0 0.0
    %602 = vmatmul.mubr.f32.gmra.mxu0 %v496
    %v603 = vpop.f32.mrf.mxu0
    %v604 = vadd.f32 0.0, %v603
    %v605 = vpop.f32.mrf.mxu0
    %606 = vmatprep.mubr.f32.mxu0 0.0
    %607 = vmatmul.mubr.f32.gmra.mxu0 %v498
    %v608 = vpop.f32.mrf.mxu0
    %v609 = vadd.f32 0.0, %v608
    %v610 = vpop.f32.mrf.mxu0
    %611 = vmatprep.mubr.f32.mxu0 0.0
    %612 = vmatmul.mubr.f32.gmra.mxu0 %v500
    %v613 = vpop.f32.mrf.mxu0
    %v614 = vadd.f32 0.0, %v613
    %v615 = vpop.f32.mrf.mxu0
    %616 = vmatprep.mubr.f32.mxu0 0.0
    %617 = vmatmul.mubr.f32.gmra.mxu0 %v502
    %v618 = vpop.f32.mrf.mxu0
    %v619 = vadd.f32 0.0, %v618
    %v620 = vpop.f32.mrf.mxu0
    %621 = vmatprep.mubr.f32.mxu0 0.0
    %622 = vmatmul.mubr.f32.gmra.mxu0 %v504
    %v623 = vpop.f32.mrf.mxu0
    %v624 = vadd.f32 0.0, %v623
    %v625 = vpop.f32.mrf.mxu0
    %626 = vdwg.mxu0
    %v627 = vmul.f32 %v589, %v589
    %v628 = vmul.f32 %v594, %v594
    %v629 = vmul.f32 %v599, %v599
    %v630 = vmul.f32 %v604, %v604
    %v631 = vmul.f32 %v609, %v609
    %v632 = vmul.f32 %v614, %v614
    %v633 = vmul.f32 %v619, %v619
    %v634 = vmul.f32 %v624, %v624
    %v635 = vmul.f32 %v627, %v83
    %v636 = vmul.f32 %v628, %v84
    %v637 = vmul.f32 %v629, %v85
    %v638 = vmul.f32 %v630, %v86
    %v639 = vmul.f32 %v631, %v87
    %v640 = vmul.f32 %v632, %v88
    %v641 = vmul.f32 %v633, %v89
    %v642 = vmul.f32 %v634, %v90
    %v643 = vsel %vm409, %v635, 0.0
    %644 = vadd.xlane.f32.xlu0 %v643
    %v645 = vpop.xlane.xlu0 %644
    %v646 = vsel %vm409, %v636, 0.0
    %647 = vadd.xlane.f32.xlu0 %v646
    %v648 = vpop.xlane.xlu0 %647
    %v649 = vsel %vm409, %v637, 0.0
    %650 = vadd.xlane.f32.xlu0 %v649
    %v651 = vpop.xlane.xlu0 %650
    %v652 = vsel %vm409, %v638, 0.0
    %653 = vadd.xlane.f32.xlu0 %v652
    %v654 = vpop.xlane.xlu0 %653
    %v655 = vsel %vm409, %v639, 0.0
    %656 = vadd.xlane.f32.xlu0 %v655
    %v657 = vpop.xlane.xlu0 %656
    %v658 = vsel %vm409, %v640, 0.0
    %659 = vadd.xlane.f32.xlu0 %v658
    %v660 = vpop.xlane.xlu0 %659
    %v661 = vsel %vm409, %v641, 0.0
    %662 = vadd.xlane.f32.xlu0 %v661
    %v663 = vpop.xlane.xlu0 %662
    %v664 = vsel %vm409, %v642, 0.0
    %665 = vadd.xlane.f32.xlu0 %v664
    %v666 = vpop.xlane.xlu0 %665
    %v667 = vmax.f32 %v645, 1e-12
    %v668 = vmax.f32 %v648, 1e-12
    %v669 = vmax.f32 %v651, 1e-12
    %v670 = vmax.f32 %v654, 1e-12
    %v671 = vmax.f32 %v657, 1e-12
    %v672 = vmax.f32 %v660, 1e-12
    %v673 = vmax.f32 %v663, 1e-12
    %v674 = vmax.f32 %v666, 1e-12
    %v675 = vrcp.pop %v667
    %v676 = vmul.f32 %v635, %v675
    %v677 = vrcp.pop %v668
    %v678 = vmul.f32 %v636, %v677
    %v679 = vrcp.pop %v669
    %v680 = vmul.f32 %v637, %v679
    %v681 = vrcp.pop %v670
    %v682 = vmul.f32 %v638, %v681
    %v683 = vrcp.pop %v671
    %v684 = vmul.f32 %v639, %v683
    %v685 = vrcp.pop %v672
    %v686 = vmul.f32 %v640, %v685
    %v687 = vrcp.pop %v673
    %v688 = vmul.f32 %v641, %v687
    %v689 = vrcp.pop %v674
    %v690 = vmul.f32 %v642, %v689
    %v691 = vld [vmem:[%s16] sm:$0xff]
    %v692 = vld [vmem:[%s16 + $0x8] sm:$0xff]
    %v693 = vld [vmem:[%s16 + $0x10] sm:$0xff]
    %v694 = vld [vmem:[%s16 + $0x18] sm:$0xff]
    %v695 = vld [vmem:[%s16 + $0x20] sm:$0xff]
    %v696 = vld [vmem:[%s16 + $0x28] sm:$0xff]
    %v697 = vld [vmem:[%s16 + $0x30] sm:$0xff]
    %v698 = vld [vmem:[%s16 + $0x38] sm:$0xff]
    %v699 = vld [vmem:[%s17] sm:$0x3]
    %v700 = vld [vmem:[%s18] sm:$0x3]
    %v701 = vld [vmem:[%s13] sm:$0xff]
    %v702 = vld [vmem:[%s13 + $0x8] sm:$0xff]
    %v703 = vld [vmem:[%s13 + $0x10] sm:$0xff]
    %v704 = vld [vmem:[%s13 + $0x18] sm:$0xff]
    %v705 = vld [vmem:[%s13 + $0x20] sm:$0xff]
    %v706 = vld [vmem:[%s13 + $0x28] sm:$0xff]
    %v707 = vld [vmem:[%s13 + $0x30] sm:$0xff]
    %v708 = vld [vmem:[%s13 + $0x38] sm:$0xff]
    %v709 = vld [vmem:[%s14] sm:$0x3]
    %v710 = vld [vmem:[%s15] sm:$0x3]
    %711 = vmatprep.subr.mxu0 0.0
    %712 = vmatpush1.msra.mxu0 0.0
    %713 = vmatprep.subr.mxu0 0.0
    %714 = vmatpush1.msra.mxu0 0.0
    %715 = vmatprep.subr.mxu0 0.0
    %716 = vmatpush1.msra.mxu0 0.0
    %717 = vmatprep.subr.mxu0 0.0
    %718 = vmatpush1.msra.mxu0 0.0
    %719 = vmatprep.subr.mxu0 0.0
    %720 = vmatpush1.msra.mxu0 0.0
    %721 = vmatprep.subr.mxu0 0.0
    %722 = vmatpush1.msra.mxu0 0.0
    %723 = vmatprep.subr.mxu0 0.0
    %724 = vmatpush1.msra.mxu0 0.0
    %725 = vmatprep.subr.mxu0 0.0
    %726 = vmatpush1.msra.mxu0 0.0
    %727 = vmatprep.subr.mxu0 0.0
    %728 = vmatpush1.msra.mxu0 0.0
    %729 = vmatprep.subr.mxu0 0.0
    %730 = vmatpush1.msra.mxu0 0.0
    %731 = vmatprep.subr.mxu0 0.0
    %732 = vmatpush1.msra.mxu0 0.0
    %733 = vmatprep.subr.mxu0 0.0
    %734 = vmatpush1.msra.mxu0 0.0
    %735 = vmatprep.subr.mxu0 0.0
    %736 = vmatpush1.msra.mxu0 %v704
    %737 = vmatprep.subr.mxu0 0.0
    %738 = vmatpush1.msra.mxu0 %v703
    %739 = vmatprep.subr.mxu0 0.0
    %740 = vmatpush1.msra.mxu0 %v702
    %741 = vmatprep.subr.mxu0 0.0
    %742 = vmatpush1.msra.mxu0 %v701
    %743 = vmatprep.subr.mxu0 0.0
    %744 = vmatpush2.msra.mxu0 0.0
    %745 = vmatprep.subr.mxu0 0.0
    %746 = vmatpush2.msra.mxu0 0.0
    %747 = vmatprep.subr.mxu0 0.0
    %748 = vmatpush2.msra.mxu0 0.0
    %749 = vmatprep.subr.mxu0 0.0
    %750 = vmatpush2.msra.mxu0 0.0
    %751 = vmatprep.subr.mxu0 0.0
    %752 = vmatpush2.msra.mxu0 0.0
    %753 = vmatprep.subr.mxu0 0.0
    %754 = vmatpush2.msra.mxu0 0.0
    %755 = vmatprep.subr.mxu0 0.0
    %756 = vmatpush2.msra.mxu0 0.0
    %757 = vmatprep.subr.mxu0 0.0
    %758 = vmatpush2.msra.mxu0 0.0
    %759 = vmatprep.subr.mxu0 0.0
    %760 = vmatpush2.msra.mxu0 0.0
    %761 = vmatprep.subr.mxu0 0.0
    %762 = vmatpush2.msra.mxu0 0.0
    %763 = vmatprep.subr.mxu0 0.0
    %764 = vmatpush2.msra.mxu0 0.0
    %765 = vmatprep.subr.mxu0 0.0
    %766 = vmatpush2.msra.mxu0 0.0
    %767 = vmatprep.subr.mxu0 0.0
    %768 = vmatpush2.msra.mxu0 0.0
    %769 = vmatprep.subr.mxu0 0.0
    %770 = vmatpush2.msra.mxu0 0.0
    %771 = vmatprep.subr.mxu0 0.0
    %772 = vmatpush2.msra.mxu0 0.0
    %773 = vmatprep.subr.mxu0 0.0
    %774 = vmatpush2.msra.mxu0 0.0
    %775 = vmatprep.mubr.f32.mxu0 0.0
    %776 = vmatmul.mubr.f32.gmra.mxu0 %v104
    %v777 = vpop.f32.mrf.mxu0
    %v778 = vadd.f32 0.0, %v777
    %v779 = vpop.f32.mrf.mxu0
    %780 = vmatprep.mubr.f32.mxu0 0.0
    %781 = vmatmul.mubr.f32.gmra.mxu0 %v107
    %v782 = vpop.f32.mrf.mxu0
    %v783 = vadd.f32 0.0, %v782
    %v784 = vpop.f32.mrf.mxu0
    %785 = vmatprep.mubr.f32.mxu0 0.0
    %786 = vmatmul.mubr.f32.gmra.mxu0 %v110
    %v787 = vpop.f32.mrf.mxu0
    %v788 = vadd.f32 0.0, %v787
    %v789 = vpop.f32.mrf.mxu0
    %790 = vmatprep.mubr.f32.mxu0 0.0
    %791 = vmatmul.mubr.f32.gmra.mxu0 %v113
    %v792 = vpop.f32.mrf.mxu0
    %v793 = vadd.f32 0.0, %v792
    %v794 = vpop.f32.mrf.mxu0
    %795 = vmatprep.mubr.f32.mxu0 0.0
    %796 = vmatmul.mubr.f32.gmra.mxu0 %v116
    %v797 = vpop.f32.mrf.mxu0
    %v798 = vadd.f32 0.0, %v797
    %v799 = vpop.f32.mrf.mxu0
    %800 = vmatprep.mubr.f32.mxu0 0.0
    %801 = vmatmul.mubr.f32.gmra.mxu0 %v119
    %v802 = vpop.f32.mrf.mxu0
    %v803 = vadd.f32 0.0, %v802
    %v804 = vpop.f32.mrf.mxu0
    %805 = vmatprep.mubr.f32.mxu0 0.0
    %806 = vmatmul.mubr.f32.gmra.mxu0 %v122
    %v807 = vpop.f32.mrf.mxu0
    %v808 = vadd.f32 0.0, %v807
    %v809 = vpop.f32.mrf.mxu0
    %810 = vmatprep.mubr.f32.mxu0 0.0
    %811 = vmatmul.mubr.f32.gmra.mxu0 %v125
    %v812 = vpop.f32.mrf.mxu0
    %v813 = vadd.f32 0.0, %v812
    %v814 = vpop.f32.mrf.mxu0
    %815 = vdwg.mxu0
    %v817 = vsel %vm409, %v443, 0
    %v820 = vsel %vm409, %v445, 0
    %v823 = vsel %vm409, %v447, 0
    %v826 = vsel %vm409, %v449, 0
    %v829 = vsel %vm409, %v451, 0
    %v832 = vsel %vm409, %v453, 0
    %v835 = vsel %vm409, %v455, 0
    %v838 = vsel %vm409, %v457, 0
    %840 = vmatprep.subr.mxu0 0.0
    %841 = vmatpush1.msra.mxu0 0.0
    %842 = vmatprep.subr.mxu0 0.0
    %843 = vmatpush1.msra.mxu0 0.0
    %844 = vmatprep.subr.mxu0 0.0
    %845 = vmatpush1.msra.mxu0 0.0
    %846 = vmatprep.subr.mxu0 0.0
    %847 = vmatpush1.msra.mxu0 0.0
    %848 = vmatprep.subr.mxu0 0.0
    %849 = vmatpush1.msra.mxu0 0.0
    %850 = vmatprep.subr.mxu0 0.0
    %851 = vmatpush1.msra.mxu0 0.0
    %852 = vmatprep.subr.mxu0 0.0
    %853 = vmatpush1.msra.mxu0 0.0
    %854 = vmatprep.subr.mxu0 0.0
    %855 = vmatpush1.msra.mxu0 0.0
    %856 = vmatprep.subr.mxu0 0.0
    %857 = vmatpush1.msra.mxu0 %v813
    %858 = vmatprep.subr.mxu0 0.0
    %859 = vmatpush1.msra.mxu0 %v808
    %860 = vmatprep.subr.mxu0 0.0
    %861 = vmatpush1.msra.mxu0 %v803
    %862 = vmatprep.subr.mxu0 0.0
    %863 = vmatpush1.msra.mxu0 %v798
    %864 = vmatprep.subr.mxu0 0.0
    %865 = vmatpush1.msra.mxu0 %v793
    %866 = vmatprep.subr.mxu0 0.0
    %867 = vmatpush1.msra.mxu0 %v788
    %868 = vmatprep.subr.mxu0 0.0
    %869 = vmatpush1.msra.mxu0 %v783
    %870 = vmatprep.subr.mxu0 0.0
    %871 = vmatpush1.msra.mxu0 %v778
    %872 = vmatprep.subr.mxu0 0.0
    %873 = vmatpush2.msra.mxu0 0.0
    %874 = vmatprep.subr.mxu0 0.0
    %875 = vmatpush2.msra.mxu0 0.0
    %876 = vmatprep.subr.mxu0 0.0
    %877 = vmatpush2.msra.mxu0 0.0
    %878 = vmatprep.subr.mxu0 0.0
    %879 = vmatpush2.msra.mxu0 0.0
    %880 = vmatprep.subr.mxu0 0.0
    %881 = vmatpush2.msra.mxu0 0.0
    %882 = vmatprep.subr.mxu0 0.0
    %883 = vmatpush2.msra.mxu0 0.0
    %884 = vmatprep.subr.mxu0 0.0
    %885 = vmatpush2.msra.mxu0 0.0
    %886 = vmatprep.subr.mxu0 0.0
    %887 = vmatpush2.msra.mxu0 0.0
    %888 = vmatprep.subr.mxu0 0.0
    %889 = vmatpush2.msra.mxu0 0.0
    %890 = vmatprep.subr.mxu0 0.0
    %891 = vmatpush2.msra.mxu0 0.0
    %892 = vmatprep.subr.mxu0 0.0
    %893 = vmatpush2.msra.mxu0 0.0
    %894 = vmatprep.subr.mxu0 0.0
    %895 = vmatpush2.msra.mxu0 0.0
    %896 = vmatprep.subr.mxu0 0.0
    %897 = vmatpush2.msra.mxu0 0.0
    %898 = vmatprep.subr.mxu0 0.0
    %899 = vmatpush2.msra.mxu0 0.0
    %900 = vmatprep.subr.mxu0 0.0
    %901 = vmatpush2.msra.mxu0 0.0
    %902 = vmatprep.subr.mxu0 0.0
    %903 = vmatpush2.msra.mxu0 0.0
    %904 = vmatprep.mubr.f32.mxu0 0.0
    %905 = vmatmul.mubr.f32.gmra.mxu0 %v817
    %v906 = vpop.f32.mrf.mxu0
    %v907 = vadd.f32 0.0, %v906
    %v908 = vpop.f32.mrf.mxu0
    %909 = vmatprep.mubr.f32.mxu0 0.0
    %910 = vmatmul.mubr.f32.gmra.mxu0 %v820
    %v911 = vpop.f32.mrf.mxu0
    %v912 = vadd.f32 0.0, %v911
    %v913 = vpop.f32.mrf.mxu0
    %914 = vmatprep.mubr.f32.mxu0 0.0
    %915 = vmatmul.mubr.f32.gmra.mxu0 %v823
    %v916 = vpop.f32.mrf.mxu0
    %v917 = vadd.f32 0.0, %v916
    %v918 = vpop.f32.mrf.mxu0
    %919 = vmatprep.mubr.f32.mxu0 0.0
    %920 = vmatmul.mubr.f32.gmra.mxu0 %v826
    %v921 = vpop.f32.mrf.mxu0
    %v922 = vadd.f32 0.0, %v921
    %v923 = vpop.f32.mrf.mxu0
    %924 = vmatprep.mubr.f32.mxu0 0.0
    %925 = vmatmul.mubr.f32.gmra.mxu0 %v829
    %v926 = vpop.f32.mrf.mxu0
    %v927 = vadd.f32 0.0, %v926
    %v928 = vpop.f32.mrf.mxu0
    %929 = vmatprep.mubr.f32.mxu0 0.0
    %930 = vmatmul.mubr.f32.gmra.mxu0 %v832
    %v931 = vpop.f32.mrf.mxu0
    %v932 = vadd.f32 0.0, %v931
    %v933 = vpop.f32.mrf.mxu0
    %934 = vmatprep.mubr.f32.mxu0 0.0
    %935 = vmatmul.mubr.f32.gmra.mxu0 %v835
    %v936 = vpop.f32.mrf.mxu0
    %v937 = vadd.f32 0.0, %v936
    %v938 = vpop.f32.mrf.mxu0
    %939 = vmatprep.mubr.f32.mxu0 0.0
    %940 = vmatmul.mubr.f32.gmra.mxu0 %v838
    %v941 = vpop.f32.mrf.mxu0
    %v942 = vadd.f32 0.0, %v941
    %v943 = vpop.f32.mrf.mxu0
    %944 = vdwg.mxu0
    %v945 = vsel %vm102, %v907, 0.0
    %946 = vadd.xlane.f32.xlu0 %v945
    %v947 = vpop.xlane.xlu0 %946
    %v948 = vsel %vm102, %v912, 0.0
    %949 = vadd.xlane.f32.xlu0 %v948
    %v950 = vpop.xlane.xlu0 %949
    %v951 = vsel %vm102, %v917, 0.0
    %952 = vadd.xlane.f32.xlu0 %v951
    %v953 = vpop.xlane.xlu0 %952
    %v954 = vsel %vm102, %v922, 0.0
    %955 = vadd.xlane.f32.xlu0 %v954
    %v956 = vpop.xlane.xlu0 %955
    %v957 = vsel %vm102, %v927, 0.0
    %958 = vadd.xlane.f32.xlu0 %v957
    %v959 = vpop.xlane.xlu0 %958
    %v960 = vsel %vm102, %v932, 0.0
    %961 = vadd.xlane.f32.xlu0 %v960
    %v962 = vpop.xlane.xlu0 %961
    %v963 = vsel %vm102, %v937, 0.0
    %964 = vadd.xlane.f32.xlu0 %v963
    %v965 = vpop.xlane.xlu0 %964
    %v966 = vsel %vm102, %v942, 0.0
    %967 = vadd.xlane.f32.xlu0 %v966
    %v968 = vpop.xlane.xlu0 %967
    %v969 = vrcp.pop 32.0
    %v970 = vmul.f32 %v947, %v969
    %v971 = vmul.f32 %v950, %v969
    %v972 = vmul.f32 %v953, %v969
    %v973 = vmul.f32 %v956, %v969
    %v974 = vmul.f32 %v959, %v969
    %v975 = vmul.f32 %v962, %v969
    %v976 = vmul.f32 %v965, %v969
    %v977 = vmul.f32 %v968, %v969
    %v978 = vsub.f32 %v907, %v970
    %v979 = vsub.f32 %v912, %v971
    %v980 = vsub.f32 %v917, %v972
    %v981 = vsub.f32 %v922, %v973
    %v982 = vsub.f32 %v927, %v974
    %v983 = vsub.f32 %v932, %v975
    %v984 = vsub.f32 %v937, %v976
    %v985 = vsub.f32 %v942, %v977
    %v986 = vmul.f32 %v978, %v978
    %v987 = vmul.f32 %v979, %v979
    %v988 = vmul.f32 %v980, %v980
    %v989 = vmul.f32 %v981, %v981
    %v990 = vmul.f32 %v982, %v982
    %v991 = vmul.f32 %v983, %v983
    %v992 = vmul.f32 %v984, %v984
    %v993 = vmul.f32 %v985, %v985
    %v994 = vsel %vm102, %v986, 0.0
    %995 = vadd.xlane.f32.xlu0 %v994
    %v996 = vpop.xlane.xlu0 %995
    %v997 = vsel %vm102, %v987, 0.0
    %998 = vadd.xlane.f32.xlu0 %v997
    %v999 = vpop.xlane.xlu0 %998
    %v1000 = vsel %vm102, %v988, 0.0
    %1001 = vadd.xlane.f32.xlu0 %v1000
    %v1002 = vpop.xlane.xlu0 %1001
    %v1003 = vsel %vm102, %v989, 0.0
    %1004 = vadd.xlane.f32.xlu0 %v1003
    %v1005 = vpop.xlane.xlu0 %1004
    %v1006 = vsel %vm102, %v990, 0.0
    %1007 = vadd.xlane.f32.xlu0 %v1006
    %v1008 = vpop.xlane.xlu0 %1007
    %v1009 = vsel %vm102, %v991, 0.0
    %1010 = vadd.xlane.f32.xlu0 %v1009
    %v1011 = vpop.xlane.xlu0 %1010
    %v1012 = vsel %vm102, %v992, 0.0
    %1013 = vadd.xlane.f32.xlu0 %v1012
    %v1014 = vpop.xlane.xlu0 %1013
    %v1015 = vsel %vm102, %v993, 0.0
    %1016 = vadd.xlane.f32.xlu0 %v1015
    %v1017 = vpop.xlane.xlu0 %1016
    %v1018 = vmul.f32 %v996, %v969
    %v1019 = vmul.f32 %v999, %v969
    %v1020 = vmul.f32 %v1002, %v969
    %v1021 = vmul.f32 %v1005, %v969
    %v1022 = vmul.f32 %v1008, %v969
    %v1023 = vmul.f32 %v1011, %v969
    %v1024 = vmul.f32 %v1014, %v969
    %v1025 = vmul.f32 %v1017, %v969
    %v1026 = vadd.f32 %v1018, 1e-05
    %v1027 = vadd.f32 %v1019, 1e-05
    %v1028 = vadd.f32 %v1020, 1e-05
    %v1029 = vadd.f32 %v1021, 1e-05
    %v1030 = vadd.f32 %v1022, 1e-05
    %v1031 = vadd.f32 %v1023, 1e-05
    %v1032 = vadd.f32 %v1024, 1e-05
    %v1033 = vadd.f32 %v1025, 1e-05
    %v1034 = vrsqrt.pop %v1026
    %v1035 = vrsqrt.pop %v1027
    %v1036 = vrsqrt.pop %v1028
    %v1037 = vrsqrt.pop %v1029
    %v1038 = vrsqrt.pop %v1030
    %v1039 = vrsqrt.pop %v1031
    %v1040 = vrsqrt.pop %v1032
    %v1041 = vrsqrt.pop %v1033
    %v1042 = vmul.f32 %v978, %v1034
    %v1043 = vmul.f32 %v979, %v1035
    %v1044 = vmul.f32 %v980, %v1036
    %v1045 = vmul.f32 %v981, %v1037
    %v1046 = vmul.f32 %v982, %v1038
    %v1047 = vmul.f32 %v983, %v1039
    %v1048 = vmul.f32 %v984, %v1040
    %v1049 = vmul.f32 %v985, %v1041
    %v1050 = vlaneseq
    %v1051 = vshrl.u32 %v1050, 7
    %v1052 = vsub.s32 0, %v1051
    %v1053 = vrot.slane %v709, %v1052
    %v1054 = vmul.f32 %v1042, %v1053
    %v1055 = vmul.f32 %v1043, %v1053
    %v1056 = vmul.f32 %v1044, %v1053
    %v1057 = vmul.f32 %v1045, %v1053
    %v1058 = vmul.f32 %v1046, %v1053
    %v1059 = vmul.f32 %v1047, %v1053
    %v1060 = vmul.f32 %v1048, %v1053
    %v1061 = vmul.f32 %v1049, %v1053
    %v1062 = vlaneseq
    %v1063 = vshrl.u32 %v1062, 7
    %v1064 = vsub.s32 0, %v1063
    %v1065 = vrot.slane %v710, %v1064
    %v1066 = vadd.f32 %v1054, %v1065
    %v1067 = vadd.f32 %v1055, %v1065
    %v1068 = vadd.f32 %v1056, %v1065
    %v1069 = vadd.f32 %v1057, %v1065
    %v1070 = vadd.f32 %v1058, %v1065
    %v1071 = vadd.f32 %v1059, %v1065
    %v1072 = vadd.f32 %v1060, %v1065
    %v1073 = vadd.f32 %v1061, %v1065
    %v1074 = vmax.f32 %v1066, 0.0
    %v1075 = vmax.f32 %v1067, 0.0
    %v1076 = vmax.f32 %v1068, 0.0
    %v1077 = vmax.f32 %v1069, 0.0
    %v1078 = vmax.f32 %v1070, 0.0
    %v1079 = vmax.f32 %v1071, 0.0
    %v1080 = vmax.f32 %v1072, 0.0
    %v1081 = vmax.f32 %v1073, 0.0
    %v1083 = vsel %vm102, %v1074, 0
    %v1086 = vsel %vm102, %v1075, 0
    %v1089 = vsel %vm102, %v1076, 0
    %v1092 = vsel %vm102, %v1077, 0
    %v1095 = vsel %vm102, %v1078, 0
    %v1098 = vsel %vm102, %v1079, 0
    %v1101 = vsel %vm102, %v1080, 0
    %v1104 = vsel %vm102, %v1081, 0
    %1106 = vmatprep.subr.mxu0 0.0
    %1107 = vmatpush1.msra.mxu0 0.0
    %1108 = vmatprep.subr.mxu0 0.0
    %1109 = vmatpush1.msra.mxu0 0.0
    %1110 = vmatprep.subr.mxu0 0.0
    %1111 = vmatpush1.msra.mxu0 0.0
    %1112 = vmatprep.subr.mxu0 0.0
    %1113 = vmatpush1.msra.mxu0 0.0
    %1114 = vmatprep.subr.mxu0 0.0
    %1115 = vmatpush1.msra.mxu0 0.0
    %1116 = vmatprep.subr.mxu0 0.0
    %1117 = vmatpush1.msra.mxu0 0.0
    %1118 = vmatprep.subr.mxu0 0.0
    %1119 = vmatpush1.msra.mxu0 0.0
    %1120 = vmatprep.subr.mxu0 0.0
    %1121 = vmatpush1.msra.mxu0 0.0
    %1122 = vmatprep.subr.mxu0 0.0
    %1123 = vmatpush1.msra.mxu0 0.0
    %1124 = vmatprep.subr.mxu0 0.0
    %1125 = vmatpush1.msra.mxu0 0.0
    %1126 = vmatprep.subr.mxu0 0.0
    %1127 = vmatpush1.msra.mxu0 0.0
    %1128 = vmatprep.subr.mxu0 0.0
    %1129 = vmatpush1.msra.mxu0 0.0
    %1130 = vmatprep.subr.mxu0 0.0
    %1131 = vmatpush1.msra.mxu0 %v708
    %1132 = vmatprep.subr.mxu0 0.0
    %1133 = vmatpush1.msra.mxu0 %v707
    %1134 = vmatprep.subr.mxu0 0.0
    %1135 = vmatpush1.msra.mxu0 %v706
    %1136 = vmatprep.subr.mxu0 0.0
    %1137 = vmatpush1.msra.mxu0 %v705
    %1138 = vmatprep.subr.mxu0 0.0
    %1139 = vmatpush2.msra.mxu0 0.0
    %1140 = vmatprep.subr.mxu0 0.0
    %1141 = vmatpush2.msra.mxu0 0.0
    %1142 = vmatprep.subr.mxu0 0.0
    %1143 = vmatpush2.msra.mxu0 0.0
    %1144 = vmatprep.subr.mxu0 0.0
    %1145 = vmatpush2.msra.mxu0 0.0
    %1146 = vmatprep.subr.mxu0 0.0
    %1147 = vmatpush2.msra.mxu0 0.0
    %1148 = vmatprep.subr.mxu0 0.0
    %1149 = vmatpush2.msra.mxu0 0.0
    %1150 = vmatprep.subr.mxu0 0.0
    %1151 = vmatpush2.msra.mxu0 0.0
    %1152 = vmatprep.subr.mxu0 0.0
    %1153 = vmatpush2.msra.mxu0 0.0
    %1154 = vmatprep.subr.mxu0 0.0
    %1155 = vmatpush2.msra.mxu0 0.0
    %1156 = vmatprep.subr.mxu0 0.0
    %1157 = vmatpush2.msra.mxu0 0.0
    %1158 = vmatprep.subr.mxu0 0.0
    %1159 = vmatpush2.msra.mxu0 0.0
    %1160 = vmatprep.subr.mxu0 0.0
    %1161 = vmatpush2.msra.mxu0 0.0
    %1162 = vmatprep.subr.mxu0 0.0
    %1163 = vmatpush2.msra.mxu0 0.0
    %1164 = vmatprep.subr.mxu0 0.0
    %1165 = vmatpush2.msra.mxu0 0.0
    %1166 = vmatprep.subr.mxu0 0.0
    %1167 = vmatpush2.msra.mxu0 0.0
    %1168 = vmatprep.subr.mxu0 0.0
    %1169 = vmatpush2.msra.mxu0 0.0
    %1170 = vmatprep.mubr.f32.mxu0 0.0
    %1171 = vmatmul.mubr.f32.gmra.mxu0 %v1083
    %v1172 = vpop.f32.mrf.mxu0
    %v1173 = vadd.f32 0.0, %v1172
    %v1174 = vpop.f32.mrf.mxu0
    %1175 = vmatprep.mubr.f32.mxu0 0.0
    %1176 = vmatmul.mubr.f32.gmra.mxu0 %v1086
    %v1177 = vpop.f32.mrf.mxu0
    %v1178 = vadd.f32 0.0, %v1177
    %v1179 = vpop.f32.mrf.mxu0
    %1180 = vmatprep.mubr.f32.mxu0 0.0
    %1181 = vmatmul.mubr.f32.gmra.mxu0 %v1089
    %v1182 = vpop.f32.mrf.mxu0
    %v1183 = vadd.f32 0.0, %v1182
    %v1184 = vpop.f32.mrf.mxu0
    %1185 = vmatprep.mubr.f32.mxu0 0.0
    %1186 = vmatmul.mubr.f32.gmra.mxu0 %v1092
    %v1187 = vpop.f32.mrf.mxu0
    %v1188 = vadd.f32 0.0, %v1187
    %v1189 = vpop.f32.mrf.mxu0
    %1190 = vmatprep.mubr.f32.mxu0 0.0
    %1191 = vmatmul.mubr.f32.gmra.mxu0 %v1095
    %v1192 = vpop.f32.mrf.mxu0
    %v1193 = vadd.f32 0.0, %v1192
    %v1194 = vpop.f32.mrf.mxu0
    %1195 = vmatprep.mubr.f32.mxu0 0.0
    %1196 = vmatmul.mubr.f32.gmra.mxu0 %v1098
    %v1197 = vpop.f32.mrf.mxu0
    %v1198 = vadd.f32 0.0, %v1197
    %v1199 = vpop.f32.mrf.mxu0
    %1200 = vmatprep.mubr.f32.mxu0 0.0
    %1201 = vmatmul.mubr.f32.gmra.mxu0 %v1101
    %v1202 = vpop.f32.mrf.mxu0
    %v1203 = vadd.f32 0.0, %v1202
    %v1204 = vpop.f32.mrf.mxu0
    %1205 = vmatprep.mubr.f32.mxu0 0.0
    %1206 = vmatmul.mubr.f32.gmra.mxu0 %v1104
    %v1207 = vpop.f32.mrf.mxu0
    %v1208 = vadd.f32 0.0, %v1207
    %v1209 = vpop.f32.mrf.mxu0
    %1210 = vdwg.mxu0
    %1211 = vmatprep.subr.mxu0 0.0
    %1212 = vmatpush1.msra.mxu0 0.0
    %1213 = vmatprep.subr.mxu0 0.0
    %1214 = vmatpush1.msra.mxu0 0.0
    %1215 = vmatprep.subr.mxu0 0.0
    %1216 = vmatpush1.msra.mxu0 0.0
    %1217 = vmatprep.subr.mxu0 0.0
    %1218 = vmatpush1.msra.mxu0 0.0
    %1219 = vmatprep.subr.mxu0 0.0
    %1220 = vmatpush1.msra.mxu0 0.0
    %1221 = vmatprep.subr.mxu0 0.0
    %1222 = vmatpush1.msra.mxu0 0.0
    %1223 = vmatprep.subr.mxu0 0.0
    %1224 = vmatpush1.msra.mxu0 0.0
    %1225 = vmatprep.subr.mxu0 0.0
    %1226 = vmatpush1.msra.mxu0 0.0
    %1227 = vmatprep.subr.mxu0 0.0
    %1228 = vmatpush1.msra.mxu0 %v1208
    %1229 = vmatprep.subr.mxu0 0.0
    %1230 = vmatpush1.msra.mxu0 %v1203
    %1231 = vmatprep.subr.mxu0 0.0
    %1232 = vmatpush1.msra.mxu0 %v1198
    %1233 = vmatprep.subr.mxu0 0.0
    %1234 = vmatpush1.msra.mxu0 %v1193
    %1235 = vmatprep.subr.mxu0 0.0
    %1236 = vmatpush1.msra.mxu0 %v1188
    %1237 = vmatprep.subr.mxu0 0.0
    %1238 = vmatpush1.msra.mxu0 %v1183
    %1239 = vmatprep.subr.mxu0 0.0
    %1240 = vmatpush1.msra.mxu0 %v1178
    %1241 = vmatprep.subr.mxu0 0.0
    %1242 = vmatpush1.msra.mxu0 %v1173
    %1243 = vmatprep.subr.mxu0 0.0
    %1244 = vmatpush2.msra.mxu0 0.0
    %1245 = vmatprep.subr.mxu0 0.0
    %1246 = vmatpush2.msra.mxu0 0.0
    %1247 = vmatprep.subr.mxu0 0.0
    %1248 = vmatpush2.msra.mxu0 0.0
    %1249 = vmatprep.subr.mxu0 0.0
    %1250 = vmatpush2.msra.mxu0 0.0
    %1251 = vmatprep.subr.mxu0 0.0
    %1252 = vmatpush2.msra.mxu0 0.0
    %1253 = vmatprep.subr.mxu0 0.0
    %1254 = vmatpush2.msra.mxu0 0.0
    %1255 = vmatprep.subr.mxu0 0.0
    %1256 = vmatpush2.msra.mxu0 0.0
    %1257 = vmatprep.subr.mxu0 0.0
    %1258 = vmatpush2.msra.mxu0 0.0
    %1259 = vmatprep.subr.mxu0 0.0
    %1260 = vmatpush2.msra.mxu0 0.0
    %1261 = vmatprep.subr.mxu0 0.0
    %1262 = vmatpush2.msra.mxu0 0.0
    %1263 = vmatprep.subr.mxu0 0.0
    %1264 = vmatpush2.msra.mxu0 0.0
    %1265 = vmatprep.subr.mxu0 0.0
    %1266 = vmatpush2.msra.mxu0 0.0
    %1267 = vmatprep.subr.mxu0 0.0
    %1268 = vmatpush2.msra.mxu0 0.0
    %1269 = vmatprep.subr.mxu0 0.0
    %1270 = vmatpush2.msra.mxu0 0.0
    %1271 = vmatprep.subr.mxu0 0.0
    %1272 = vmatpush2.msra.mxu0 0.0
    %1273 = vmatprep.subr.mxu0 0.0
    %1274 = vmatpush2.msra.mxu0 0.0
    %1275 = vmatprep.mubr.f32.mxu0 0.0
    %1276 = vmatmul.mubr.f32.gmra.mxu0 %v817
    %v1277 = vpop.f32.mrf.mxu0
    %v1278 = vadd.f32 0.0, %v1277
    %v1279 = vpop.f32.mrf.mxu0
    %1280 = vmatprep.mubr.f32.mxu0 0.0
    %1281 = vmatmul.mubr.f32.gmra.mxu0 %v820
    %v1282 = vpop.f32.mrf.mxu0
    %v1283 = vadd.f32 0.0, %v1282
    %v1284 = vpop.f32.mrf.mxu0
    %1285 = vmatprep.mubr.f32.mxu0 0.0
    %1286 = vmatmul.mubr.f32.gmra.mxu0 %v823
    %v1287 = vpop.f32.mrf.mxu0
    %v1288 = vadd.f32 0.0, %v1287
    %v1289 = vpop.f32.mrf.mxu0
    %1290 = vmatprep.mubr.f32.mxu0 0.0
    %1291 = vmatmul.mubr.f32.gmra.mxu0 %v826
    %v1292 = vpop.f32.mrf.mxu0
    %v1293 = vadd.f32 0.0, %v1292
    %v1294 = vpop.f32.mrf.mxu0
    %1295 = vmatprep.mubr.f32.mxu0 0.0
    %1296 = vmatmul.mubr.f32.gmra.mxu0 %v829
    %v1297 = vpop.f32.mrf.mxu0
    %v1298 = vadd.f32 0.0, %v1297
    %v1299 = vpop.f32.mrf.mxu0
    %1300 = vmatprep.mubr.f32.mxu0 0.0
    %1301 = vmatmul.mubr.f32.gmra.mxu0 %v832
    %v1302 = vpop.f32.mrf.mxu0
    %v1303 = vadd.f32 0.0, %v1302
    %v1304 = vpop.f32.mrf.mxu0
    %1305 = vmatprep.mubr.f32.mxu0 0.0
    %1306 = vmatmul.mubr.f32.gmra.mxu0 %v835
    %v1307 = vpop.f32.mrf.mxu0
    %v1308 = vadd.f32 0.0, %v1307
    %v1309 = vpop.f32.mrf.mxu0
    %1310 = vmatprep.mubr.f32.mxu0 0.0
    %1311 = vmatmul.mubr.f32.gmra.mxu0 %v838
    %v1312 = vpop.f32.mrf.mxu0
    %v1313 = vadd.f32 0.0, %v1312
    %v1314 = vpop.f32.mrf.mxu0
    %1315 = vdwg.mxu0
    %v1316 = vsel %vm102, %v1278, 0.0
    %1317 = vadd.xlane.f32.xlu0 %v1316
    %v1318 = vpop.xlane.xlu0 %1317
    %v1319 = vsel %vm102, %v1283, 0.0
    %1320 = vadd.xlane.f32.xlu0 %v1319
    %v1321 = vpop.xlane.xlu0 %1320
    %v1322 = vsel %vm102, %v1288, 0.0
    %1323 = vadd.xlane.f32.xlu0 %v1322
    %v1324 = vpop.xlane.xlu0 %1323
    %v1325 = vsel %vm102, %v1293, 0.0
    %1326 = vadd.xlane.f32.xlu0 %v1325
    %v1327 = vpop.xlane.xlu0 %1326
    %v1328 = vsel %vm102, %v1298, 0.0
    %1329 = vadd.xlane.f32.xlu0 %v1328
    %v1330 = vpop.xlane.xlu0 %1329
    %v1331 = vsel %vm102, %v1303, 0.0
    %1332 = vadd.xlane.f32.xlu0 %v1331
    %v1333 = vpop.xlane.xlu0 %1332
    %v1334 = vsel %vm102, %v1308, 0.0
    %1335 = vadd.xlane.f32.xlu0 %v1334
    %v1336 = vpop.xlane.xlu0 %1335
    %v1337 = vsel %vm102, %v1313, 0.0
    %1338 = vadd.xlane.f32.xlu0 %v1337
    %v1339 = vpop.xlane.xlu0 %1338
    %v1340 = vmul.f32 %v1318, %v969
    %v1341 = vmul.f32 %v1321, %v969
    %v1342 = vmul.f32 %v1324, %v969
    %v1343 = vmul.f32 %v1327, %v969
    %v1344 = vmul.f32 %v1330, %v969
    %v1345 = vmul.f32 %v1333, %v969
    %v1346 = vmul.f32 %v1336, %v969
    %v1347 = vmul.f32 %v1339, %v969
    %v1348 = vsub.f32 %v1278, %v1340
    %v1349 = vsub.f32 %v1283, %v1341
    %v1350 = vsub.f32 %v1288, %v1342
    %v1351 = vsub.f32 %v1293, %v1343
    %v1352 = vsub.f32 %v1298, %v1344
    %v1353 = vsub.f32 %v1303, %v1345
    %v1354 = vsub.f32 %v1308, %v1346
    %v1355 = vsub.f32 %v1313, %v1347
    %v1356 = vmul.f32 %v1348, %v1348
    %v1357 = vmul.f32 %v1349, %v1349
    %v1358 = vmul.f32 %v1350, %v1350
    %v1359 = vmul.f32 %v1351, %v1351
    %v1360 = vmul.f32 %v1352, %v1352
    %v1361 = vmul.f32 %v1353, %v1353
    %v1362 = vmul.f32 %v1354, %v1354
    %v1363 = vmul.f32 %v1355, %v1355
    %v1364 = vsel %vm102, %v1356, 0.0
    %1365 = vadd.xlane.f32.xlu0 %v1364
    %v1366 = vpop.xlane.xlu0 %1365
    %v1367 = vsel %vm102, %v1357, 0.0
    %1368 = vadd.xlane.f32.xlu0 %v1367
    %v1369 = vpop.xlane.xlu0 %1368
    %v1370 = vsel %vm102, %v1358, 0.0
    %1371 = vadd.xlane.f32.xlu0 %v1370
    %v1372 = vpop.xlane.xlu0 %1371
    %v1373 = vsel %vm102, %v1359, 0.0
    %1374 = vadd.xlane.f32.xlu0 %v1373
    %v1375 = vpop.xlane.xlu0 %1374
    %v1376 = vsel %vm102, %v1360, 0.0
    %1377 = vadd.xlane.f32.xlu0 %v1376
    %v1378 = vpop.xlane.xlu0 %1377
    %v1379 = vsel %vm102, %v1361, 0.0
    %1380 = vadd.xlane.f32.xlu0 %v1379
    %v1381 = vpop.xlane.xlu0 %1380
    %v1382 = vsel %vm102, %v1362, 0.0
    %1383 = vadd.xlane.f32.xlu0 %v1382
    %v1384 = vpop.xlane.xlu0 %1383
    %v1385 = vsel %vm102, %v1363, 0.0
    %1386 = vadd.xlane.f32.xlu0 %v1385
    %v1387 = vpop.xlane.xlu0 %1386
    %v1388 = vmul.f32 %v1366, %v969
    %v1389 = vmul.f32 %v1369, %v969
    %v1390 = vmul.f32 %v1372, %v969
    %v1391 = vmul.f32 %v1375, %v969
    %v1392 = vmul.f32 %v1378, %v969
    %v1393 = vmul.f32 %v1381, %v969
    %v1394 = vmul.f32 %v1384, %v969
    %v1395 = vmul.f32 %v1387, %v969
    %v1396 = vadd.f32 %v1388, 1e-05
    %v1397 = vadd.f32 %v1389, 1e-05
    %v1398 = vadd.f32 %v1390, 1e-05
    %v1399 = vadd.f32 %v1391, 1e-05
    %v1400 = vadd.f32 %v1392, 1e-05
    %v1401 = vadd.f32 %v1393, 1e-05
    %v1402 = vadd.f32 %v1394, 1e-05
    %v1403 = vadd.f32 %v1395, 1e-05
    %v1404 = vrsqrt.pop %v1396
    %v1405 = vrsqrt.pop %v1397
    %v1406 = vrsqrt.pop %v1398
    %v1407 = vrsqrt.pop %v1399
    %v1408 = vrsqrt.pop %v1400
    %v1409 = vrsqrt.pop %v1401
    %v1410 = vrsqrt.pop %v1402
    %v1411 = vrsqrt.pop %v1403
    %v1412 = vmul.f32 %v1348, %v1404
    %v1413 = vmul.f32 %v1349, %v1405
    %v1414 = vmul.f32 %v1350, %v1406
    %v1415 = vmul.f32 %v1351, %v1407
    %v1416 = vmul.f32 %v1352, %v1408
    %v1417 = vmul.f32 %v1353, %v1409
    %v1418 = vmul.f32 %v1354, %v1410
    %v1419 = vmul.f32 %v1355, %v1411
    %v1420 = vlaneseq
    %v1421 = vshrl.u32 %v1420, 7
    %v1422 = vsub.s32 1, %v1421
    %v1423 = vrot.slane %v709, %v1422
    %v1424 = vmul.f32 %v1412, %v1423
    %v1425 = vmul.f32 %v1413, %v1423
    %v1426 = vmul.f32 %v1414, %v1423
    %v1427 = vmul.f32 %v1415, %v1423
    %v1428 = vmul.f32 %v1416, %v1423
    %v1429 = vmul.f32 %v1417, %v1423
    %v1430 = vmul.f32 %v1418, %v1423
    %v1431 = vmul.f32 %v1419, %v1423
    %v1432 = vlaneseq
    %v1433 = vshrl.u32 %v1432, 7
    %v1434 = vsub.s32 1, %v1433
    %v1435 = vrot.slane %v710, %v1434
    %v1436 = vadd.f32 %v1424, %v1435
    %v1437 = vadd.f32 %v1425, %v1435
    %v1438 = vadd.f32 %v1426, %v1435
    %v1439 = vadd.f32 %v1427, %v1435
    %v1440 = vadd.f32 %v1428, %v1435
    %v1441 = vadd.f32 %v1429, %v1435
    %v1442 = vadd.f32 %v1430, %v1435
    %v1443 = vadd.f32 %v1431, %v1435
    %v1444 = vmax.f32 %v1436, 0.0
    %v1445 = vmax.f32 %v1437, 0.0
    %v1446 = vmax.f32 %v1438, 0.0
    %v1447 = vmax.f32 %v1439, 0.0
    %v1448 = vmax.f32 %v1440, 0.0
    %v1449 = vmax.f32 %v1441, 0.0
    %v1450 = vmax.f32 %v1442, 0.0
    %v1451 = vmax.f32 %v1443, 0.0
    %1452 = vmatprep.subr.mxu0 0.0
    %1453 = vmatpush1.msra.mxu0 0.0
    %1454 = vmatprep.subr.mxu0 0.0
    %1455 = vmatpush1.msra.mxu0 0.0
    %1456 = vmatprep.subr.mxu0 0.0
    %1457 = vmatpush1.msra.mxu0 0.0
    %1458 = vmatprep.subr.mxu0 0.0
    %1459 = vmatpush1.msra.mxu0 0.0
    %1460 = vmatprep.subr.mxu0 0.0
    %1461 = vmatpush1.msra.mxu0 0.0
    %1462 = vmatprep.subr.mxu0 0.0
    %1463 = vmatpush1.msra.mxu0 0.0
    %1464 = vmatprep.subr.mxu0 0.0
    %1465 = vmatpush1.msra.mxu0 0.0
    %1466 = vmatprep.subr.mxu0 0.0
    %1467 = vmatpush1.msra.mxu0 0.0
    %1468 = vmatprep.subr.mxu0 0.0
    %1469 = vmatpush1.msra.mxu0 0.0
    %1470 = vmatprep.subr.mxu0 0.0
    %1471 = vmatpush1.msra.mxu0 0.0
    %1472 = vmatprep.subr.mxu0 0.0
    %1473 = vmatpush1.msra.mxu0 0.0
    %1474 = vmatprep.subr.mxu0 0.0
    %1475 = vmatpush1.msra.mxu0 0.0
    %1476 = vmatprep.subr.mxu0 0.0
    %1477 = vmatpush1.msra.mxu0 %v694
    %1478 = vmatprep.subr.mxu0 0.0
    %1479 = vmatpush1.msra.mxu0 %v693
    %1480 = vmatprep.subr.mxu0 0.0
    %1481 = vmatpush1.msra.mxu0 %v692
    %1482 = vmatprep.subr.mxu0 0.0
    %1483 = vmatpush1.msra.mxu0 %v691
    %1484 = vmatprep.subr.mxu0 0.0
    %1485 = vmatpush2.msra.mxu0 0.0
    %1486 = vmatprep.subr.mxu0 0.0
    %1487 = vmatpush2.msra.mxu0 0.0
    %1488 = vmatprep.subr.mxu0 0.0
    %1489 = vmatpush2.msra.mxu0 0.0
    %1490 = vmatprep.subr.mxu0 0.0
    %1491 = vmatpush2.msra.mxu0 0.0
    %1492 = vmatprep.subr.mxu0 0.0
    %1493 = vmatpush2.msra.mxu0 0.0
    %1494 = vmatprep.subr.mxu0 0.0
    %1495 = vmatpush2.msra.mxu0 0.0
    %1496 = vmatprep.subr.mxu0 0.0
    %1497 = vmatpush2.msra.mxu0 0.0
    %1498 = vmatprep.subr.mxu0 0.0
    %1499 = vmatpush2.msra.mxu0 0.0
    %1500 = vmatprep.subr.mxu0 0.0
    %1501 = vmatpush2.msra.mxu0 0.0
    %1502 = vmatprep.subr.mxu0 0.0
    %1503 = vmatpush2.msra.mxu0 0.0
    %1504 = vmatprep.subr.mxu0 0.0
    %1505 = vmatpush2.msra.mxu0 0.0
    %1506 = vmatprep.subr.mxu0 0.0
    %1507 = vmatpush2.msra.mxu0 0.0
    %1508 = vmatprep.subr.mxu0 0.0
    %1509 = vmatpush2.msra.mxu0 0.0
    %1510 = vmatprep.subr.mxu0 0.0
    %1511 = vmatpush2.msra.mxu0 0.0
    %1512 = vmatprep.subr.mxu0 0.0
    %1513 = vmatpush2.msra.mxu0 0.0
    %1514 = vmatprep.subr.mxu0 0.0
    %1515 = vmatpush2.msra.mxu0 0.0
    %1516 = vmatprep.mubr.f32.mxu0 0.0
    %1517 = vmatmul.mubr.f32.gmra.mxu0 %v104
    %v1518 = vpop.f32.mrf.mxu0
    %v1519 = vadd.f32 0.0, %v1518
    %v1520 = vpop.f32.mrf.mxu0
    %1521 = vmatprep.mubr.f32.mxu0 0.0
    %1522 = vmatmul.mubr.f32.gmra.mxu0 %v107
    %v1523 = vpop.f32.mrf.mxu0
    %v1524 = vadd.f32 0.0, %v1523
    %v1525 = vpop.f32.mrf.mxu0
    %1526 = vmatprep.mubr.f32.mxu0 0.0
    %1527 = vmatmul.mubr.f32.gmra.mxu0 %v110
    %v1528 = vpop.f32.mrf.mxu0
    %v1529 = vadd.f32 0.0, %v1528
    %v1530 = vpop.f32.mrf.mxu0
    %1531 = vmatprep.mubr.f32.mxu0 0.0
    %1532 = vmatmul.mubr.f32.gmra.mxu0 %v113
    %v1533 = vpop.f32.mrf.mxu0
    %v1534 = vadd.f32 0.0, %v1533
    %v1535 = vpop.f32.mrf.mxu0
    %1536 = vmatprep.mubr.f32.mxu0 0.0
    %1537 = vmatmul.mubr.f32.gmra.mxu0 %v116
    %v1538 = vpop.f32.mrf.mxu0
    %v1539 = vadd.f32 0.0, %v1538
    %v1540 = vpop.f32.mrf.mxu0
    %1541 = vmatprep.mubr.f32.mxu0 0.0
    %1542 = vmatmul.mubr.f32.gmra.mxu0 %v119
    %v1543 = vpop.f32.mrf.mxu0
    %v1544 = vadd.f32 0.0, %v1543
    %v1545 = vpop.f32.mrf.mxu0
    %1546 = vmatprep.mubr.f32.mxu0 0.0
    %1547 = vmatmul.mubr.f32.gmra.mxu0 %v122
    %v1548 = vpop.f32.mrf.mxu0
    %v1549 = vadd.f32 0.0, %v1548
    %v1550 = vpop.f32.mrf.mxu0
    %1551 = vmatprep.mubr.f32.mxu0 0.0
    %1552 = vmatmul.mubr.f32.gmra.mxu0 %v125
    %v1553 = vpop.f32.mrf.mxu0
    %v1554 = vadd.f32 0.0, %v1553
    %v1555 = vpop.f32.mrf.mxu0
    %1556 = vdwg.mxu0
    %v1558 = vsel %vm409, %v676, 0
    %v1561 = vsel %vm409, %v678, 0
    %v1564 = vsel %vm409, %v680, 0
    %v1567 = vsel %vm409, %v682, 0
    %v1570 = vsel %vm409, %v684, 0
    %v1573 = vsel %vm409, %v686, 0
    %v1576 = vsel %vm409, %v688, 0
    %v1579 = vsel %vm409, %v690, 0
    %1581 = vmatprep.subr.mxu0 0.0
    %1582 = vmatpush1.msra.mxu0 0.0
    %1583 = vmatprep.subr.mxu0 0.0
    %1584 = vmatpush1.msra.mxu0 0.0
    %1585 = vmatprep.subr.mxu0 0.0
    %1586 = vmatpush1.msra.mxu0 0.0
    %1587 = vmatprep.subr.mxu0 0.0
    %1588 = vmatpush1.msra.mxu0 0.0
    %1589 = vmatprep.subr.mxu0 0.0
    %1590 = vmatpush1.msra.mxu0 0.0
    %1591 = vmatprep.subr.mxu0 0.0
    %1592 = vmatpush1.msra.mxu0 0.0
    %1593 = vmatprep.subr.mxu0 0.0
    %1594 = vmatpush1.msra.mxu0 0.0
    %1595 = vmatprep.subr.mxu0 0.0
    %1596 = vmatpush1.msra.mxu0 0.0
    %1597 = vmatprep.subr.mxu0 0.0
    %1598 = vmatpush1.msra.mxu0 %v1554
    %1599 = vmatprep.subr.mxu0 0.0
    %1600 = vmatpush1.msra.mxu0 %v1549
    %1601 = vmatprep.subr.mxu0 0.0
    %1602 = vmatpush1.msra.mxu0 %v1544
    %1603 = vmatprep.subr.mxu0 0.0
    %1604 = vmatpush1.msra.mxu0 %v1539
    %1605 = vmatprep.subr.mxu0 0.0
    %1606 = vmatpush1.msra.mxu0 %v1534
    %1607 = vmatprep.subr.mxu0 0.0
    %1608 = vmatpush1.msra.mxu0 %v1529
    %1609 = vmatprep.subr.mxu0 0.0
    %1610 = vmatpush1.msra.mxu0 %v1524
    %1611 = vmatprep.subr.mxu0 0.0
    %1612 = vmatpush1.msra.mxu0 %v1519
    %1613 = vmatprep.subr.mxu0 0.0
    %1614 = vmatpush2.msra.mxu0 0.0
    %1615 = vmatprep.subr.mxu0 0.0
    %1616 = vmatpush2.msra.mxu0 0.0
    %1617 = vmatprep.subr.mxu0 0.0
    %1618 = vmatpush2.msra.mxu0 0.0
    %1619 = vmatprep.subr.mxu0 0.0
    %1620 = vmatpush2.msra.mxu0 0.0
    %1621 = vmatprep.subr.mxu0 0.0
    %1622 = vmatpush2.msra.mxu0 0.0
    %1623 = vmatprep.subr.mxu0 0.0
    %1624 = vmatpush2.msra.mxu0 0.0
    %1625 = vmatprep.subr.mxu0 0.0
    %1626 = vmatpush2.msra.mxu0 0.0
    %1627 = vmatprep.subr.mxu0 0.0
    %1628 = vmatpush2.msra.mxu0 0.0
    %1629 = vmatprep.subr.mxu0 0.0
    %1630 = vmatpush2.msra.mxu0 0.0
    %1631 = vmatprep.subr.mxu0 0.0
    %1632 = vmatpush2.msra.mxu0 0.0
    %1633 = vmatprep.subr.mxu0 0.0
    %1634 = vmatpush2.msra.mxu0 0.0
    %1635 = vmatprep.subr.mxu0 0.0
    %1636 = vmatpush2.msra.mxu0 0.0
    %1637 = vmatprep.subr.mxu0 0.0
    %1638 = vmatpush2.msra.mxu0 0.0
    %1639 = vmatprep.subr.mxu0 0.0
    %1640 = vmatpush2.msra.mxu0 0.0
    %1641 = vmatprep.subr.mxu0 0.0
    %1642 = vmatpush2.msra.mxu0 0.0
    %1643 = vmatprep.subr.mxu0 0.0
    %1644 = vmatpush2.msra.mxu0 0.0
    %1645 = vmatprep.mubr.f32.mxu0 0.0
    %1646 = vmatmul.mubr.f32.gmra.mxu0 %v1558
    %v1647 = vpop.f32.mrf.mxu0
    %v1648 = vadd.f32 0.0, %v1647
    %v1649 = vpop.f32.mrf.mxu0
    %1650 = vmatprep.mubr.f32.mxu0 0.0
    %1651 = vmatmul.mubr.f32.gmra.mxu0 %v1561
    %v1652 = vpop.f32.mrf.mxu0
    %v1653 = vadd.f32 0.0, %v1652
    %v1654 = vpop.f32.mrf.mxu0
    %1655 = vmatprep.mubr.f32.mxu0 0.0
    %1656 = vmatmul.mubr.f32.gmra.mxu0 %v1564
    %v1657 = vpop.f32.mrf.mxu0
    %v1658 = vadd.f32 0.0, %v1657
    %v1659 = vpop.f32.mrf.mxu0
    %1660 = vmatprep.mubr.f32.mxu0 0.0
    %1661 = vmatmul.mubr.f32.gmra.mxu0 %v1567
    %v1662 = vpop.f32.mrf.mxu0
    %v1663 = vadd.f32 0.0, %v1662
    %v1664 = vpop.f32.mrf.mxu0
    %1665 = vmatprep.mubr.f32.mxu0 0.0
    %1666 = vmatmul.mubr.f32.gmra.mxu0 %v1570
    %v1667 = vpop.f32.mrf.mxu0
    %v1668 = vadd.f32 0.0, %v1667
    %v1669 = vpop.f32.mrf.mxu0
    %1670 = vmatprep.mubr.f32.mxu0 0.0
    %1671 = vmatmul.mubr.f32.gmra.mxu0 %v1573
    %v1672 = vpop.f32.mrf.mxu0
    %v1673 = vadd.f32 0.0, %v1672
    %v1674 = vpop.f32.mrf.mxu0
    %1675 = vmatprep.mubr.f32.mxu0 0.0
    %1676 = vmatmul.mubr.f32.gmra.mxu0 %v1576
    %v1677 = vpop.f32.mrf.mxu0
    %v1678 = vadd.f32 0.0, %v1677
    %v1679 = vpop.f32.mrf.mxu0
    %1680 = vmatprep.mubr.f32.mxu0 0.0
    %1681 = vmatmul.mubr.f32.gmra.mxu0 %v1579
    %v1682 = vpop.f32.mrf.mxu0
    %v1683 = vadd.f32 0.0, %v1682
    %v1684 = vpop.f32.mrf.mxu0
    %1685 = vdwg.mxu0
    %v1686 = vsel %vm102, %v1648, 0.0
    %1687 = vadd.xlane.f32.xlu0 %v1686
    %v1688 = vpop.xlane.xlu0 %1687
    %v1689 = vsel %vm102, %v1653, 0.0
    %1690 = vadd.xlane.f32.xlu0 %v1689
    %v1691 = vpop.xlane.xlu0 %1690
    %v1692 = vsel %vm102, %v1658, 0.0
    %1693 = vadd.xlane.f32.xlu0 %v1692
    %v1694 = vpop.xlane.xlu0 %1693
    %v1695 = vsel %vm102, %v1663, 0.0
    %1696 = vadd.xlane.f32.xlu0 %v1695
    %v1697 = vpop.xlane.xlu0 %1696
    %v1698 = vsel %vm102, %v1668, 0.0
    %1699 = vadd.xlane.f32.xlu0 %v1698
    %v1700 = vpop.xlane.xlu0 %1699
    %v1701 = vsel %vm102, %v1673, 0.0
    %1702 = vadd.xlane.f32.xlu0 %v1701
    %v1703 = vpop.xlane.xlu0 %1702
    %v1704 = vsel %vm102, %v1678, 0.0
    %1705 = vadd.xlane.f32.xlu0 %v1704
    %v1706 = vpop.xlane.xlu0 %1705
    %v1707 = vsel %vm102, %v1683, 0.0
    %1708 = vadd.xlane.f32.xlu0 %v1707
    %v1709 = vpop.xlane.xlu0 %1708
    %v1710 = vmul.f32 %v1688, %v969
    %v1711 = vmul.f32 %v1691, %v969
    %v1712 = vmul.f32 %v1694, %v969
    %v1713 = vmul.f32 %v1697, %v969
    %v1714 = vmul.f32 %v1700, %v969
    %v1715 = vmul.f32 %v1703, %v969
    %v1716 = vmul.f32 %v1706, %v969
    %v1717 = vmul.f32 %v1709, %v969
    %v1718 = vsub.f32 %v1648, %v1710
    %v1719 = vsub.f32 %v1653, %v1711
    %v1720 = vsub.f32 %v1658, %v1712
    %v1721 = vsub.f32 %v1663, %v1713
    %v1722 = vsub.f32 %v1668, %v1714
    %v1723 = vsub.f32 %v1673, %v1715
    %v1724 = vsub.f32 %v1678, %v1716
    %v1725 = vsub.f32 %v1683, %v1717
    %v1726 = vmul.f32 %v1718, %v1718
    %v1727 = vmul.f32 %v1719, %v1719
    %v1728 = vmul.f32 %v1720, %v1720
    %v1729 = vmul.f32 %v1721, %v1721
    %v1730 = vmul.f32 %v1722, %v1722
    %v1731 = vmul.f32 %v1723, %v1723
    %v1732 = vmul.f32 %v1724, %v1724
    %v1733 = vmul.f32 %v1725, %v1725
    %v1734 = vsel %vm102, %v1726, 0.0
    %1735 = vadd.xlane.f32.xlu0 %v1734
    %v1736 = vpop.xlane.xlu0 %1735
    %v1737 = vsel %vm102, %v1727, 0.0
    %1738 = vadd.xlane.f32.xlu0 %v1737
    %v1739 = vpop.xlane.xlu0 %1738
    %v1740 = vsel %vm102, %v1728, 0.0
    %1741 = vadd.xlane.f32.xlu0 %v1740
    %v1742 = vpop.xlane.xlu0 %1741
    %v1743 = vsel %vm102, %v1729, 0.0
    %1744 = vadd.xlane.f32.xlu0 %v1743
    %v1745 = vpop.xlane.xlu0 %1744
    %v1746 = vsel %vm102, %v1730, 0.0
    %1747 = vadd.xlane.f32.xlu0 %v1746
    %v1748 = vpop.xlane.xlu0 %1747
    %v1749 = vsel %vm102, %v1731, 0.0
    %1750 = vadd.xlane.f32.xlu0 %v1749
    %v1751 = vpop.xlane.xlu0 %1750
    %v1752 = vsel %vm102, %v1732, 0.0
    %1753 = vadd.xlane.f32.xlu0 %v1752
    %v1754 = vpop.xlane.xlu0 %1753
    %v1755 = vsel %vm102, %v1733, 0.0
    %1756 = vadd.xlane.f32.xlu0 %v1755
    %v1757 = vpop.xlane.xlu0 %1756
    %v1758 = vmul.f32 %v1736, %v969
    %v1759 = vmul.f32 %v1739, %v969
    %v1760 = vmul.f32 %v1742, %v969
    %v1761 = vmul.f32 %v1745, %v969
    %v1762 = vmul.f32 %v1748, %v969
    %v1763 = vmul.f32 %v1751, %v969
    %v1764 = vmul.f32 %v1754, %v969
    %v1765 = vmul.f32 %v1757, %v969
    %v1766 = vadd.f32 %v1758, 1e-05
    %v1767 = vadd.f32 %v1759, 1e-05
    %v1768 = vadd.f32 %v1760, 1e-05
    %v1769 = vadd.f32 %v1761, 1e-05
    %v1770 = vadd.f32 %v1762, 1e-05
    %v1771 = vadd.f32 %v1763, 1e-05
    %v1772 = vadd.f32 %v1764, 1e-05
    %v1773 = vadd.f32 %v1765, 1e-05
    %v1774 = vrsqrt.pop %v1766
    %v1775 = vrsqrt.pop %v1767
    %v1776 = vrsqrt.pop %v1768
    %v1777 = vrsqrt.pop %v1769
    %v1778 = vrsqrt.pop %v1770
    %v1779 = vrsqrt.pop %v1771
    %v1780 = vrsqrt.pop %v1772
    %v1781 = vrsqrt.pop %v1773
    %v1782 = vmul.f32 %v1718, %v1774
    %v1783 = vmul.f32 %v1719, %v1775
    %v1784 = vmul.f32 %v1720, %v1776
    %v1785 = vmul.f32 %v1721, %v1777
    %v1786 = vmul.f32 %v1722, %v1778
    %v1787 = vmul.f32 %v1723, %v1779
    %v1788 = vmul.f32 %v1724, %v1780
    %v1789 = vmul.f32 %v1725, %v1781
    %v1790 = vlaneseq
    %v1791 = vshrl.u32 %v1790, 7
    %v1792 = vsub.s32 0, %v1791
    %v1793 = vrot.slane %v699, %v1792
    %v1794 = vmul.f32 %v1782, %v1793
    %v1795 = vmul.f32 %v1783, %v1793
    %v1796 = vmul.f32 %v1784, %v1793
    %v1797 = vmul.f32 %v1785, %v1793
    %v1798 = vmul.f32 %v1786, %v1793
    %v1799 = vmul.f32 %v1787, %v1793
    %v1800 = vmul.f32 %v1788, %v1793
    %v1801 = vmul.f32 %v1789, %v1793
    %v1802 = vlaneseq
    %v1803 = vshrl.u32 %v1802, 7
    %v1804 = vsub.s32 0, %v1803
    %v1805 = vrot.slane %v700, %v1804
    %v1806 = vadd.f32 %v1794, %v1805
    %v1807 = vadd.f32 %v1795, %v1805
    %v1808 = vadd.f32 %v1796, %v1805
    %v1809 = vadd.f32 %v1797, %v1805
    %v1810 = vadd.f32 %v1798, %v1805
    %v1811 = vadd.f32 %v1799, %v1805
    %v1812 = vadd.f32 %v1800, %v1805
    %v1813 = vadd.f32 %v1801, %v1805
    %v1814 = vmax.f32 %v1806, 0.0
    %v1815 = vmax.f32 %v1807, 0.0
    %v1816 = vmax.f32 %v1808, 0.0
    %v1817 = vmax.f32 %v1809, 0.0
    %v1818 = vmax.f32 %v1810, 0.0
    %v1819 = vmax.f32 %v1811, 0.0
    %v1820 = vmax.f32 %v1812, 0.0
    %v1821 = vmax.f32 %v1813, 0.0
    %v1823 = vsel %vm102, %v1814, 0
    %v1826 = vsel %vm102, %v1815, 0
    %v1829 = vsel %vm102, %v1816, 0
    %v1832 = vsel %vm102, %v1817, 0
    %v1835 = vsel %vm102, %v1818, 0
    %v1838 = vsel %vm102, %v1819, 0
    %v1841 = vsel %vm102, %v1820, 0
    %v1844 = vsel %vm102, %v1821, 0
    %1846 = vmatprep.subr.mxu0 0.0
    %1847 = vmatpush1.msra.mxu0 0.0
    %1848 = vmatprep.subr.mxu0 0.0
    %1849 = vmatpush1.msra.mxu0 0.0
    %1850 = vmatprep.subr.mxu0 0.0
    %1851 = vmatpush1.msra.mxu0 0.0
    %1852 = vmatprep.subr.mxu0 0.0
    %1853 = vmatpush1.msra.mxu0 0.0
    %1854 = vmatprep.subr.mxu0 0.0
    %1855 = vmatpush1.msra.mxu0 0.0
    %1856 = vmatprep.subr.mxu0 0.0
    %1857 = vmatpush1.msra.mxu0 0.0
    %1858 = vmatprep.subr.mxu0 0.0
    %1859 = vmatpush1.msra.mxu0 0.0
    %1860 = vmatprep.subr.mxu0 0.0
    %1861 = vmatpush1.msra.mxu0 0.0
    %1862 = vmatprep.subr.mxu0 0.0
    %1863 = vmatpush1.msra.mxu0 0.0
    %1864 = vmatprep.subr.mxu0 0.0
    %1865 = vmatpush1.msra.mxu0 0.0
    %1866 = vmatprep.subr.mxu0 0.0
    %1867 = vmatpush1.msra.mxu0 0.0
    %1868 = vmatprep.subr.mxu0 0.0
    %1869 = vmatpush1.msra.mxu0 0.0
    %1870 = vmatprep.subr.mxu0 0.0
    %1871 = vmatpush1.msra.mxu0 %v698
    %1872 = vmatprep.subr.mxu0 0.0
    %1873 = vmatpush1.msra.mxu0 %v697
    %1874 = vmatprep.subr.mxu0 0.0
    %1875 = vmatpush1.msra.mxu0 %v696
    %1876 = vmatprep.subr.mxu0 0.0
    %1877 = vmatpush1.msra.mxu0 %v695
    %1878 = vmatprep.subr.mxu0 0.0
    %1879 = vmatpush2.msra.mxu0 0.0
    %1880 = vmatprep.subr.mxu0 0.0
    %1881 = vmatpush2.msra.mxu0 0.0
    %1882 = vmatprep.subr.mxu0 0.0
    %1883 = vmatpush2.msra.mxu0 0.0
    %1884 = vmatprep.subr.mxu0 0.0
    %1885 = vmatpush2.msra.mxu0 0.0
    %1886 = vmatprep.subr.mxu0 0.0
    %1887 = vmatpush2.msra.mxu0 0.0
    %1888 = vmatprep.subr.mxu0 0.0
    %1889 = vmatpush2.msra.mxu0 0.0
    %1890 = vmatprep.subr.mxu0 0.0
    %1891 = vmatpush2.msra.mxu0 0.0
    %1892 = vmatprep.subr.mxu0 0.0
    %1893 = vmatpush2.msra.mxu0 0.0
    %1894 = vmatprep.subr.mxu0 0.0
    %1895 = vmatpush2.msra.mxu0 0.0
    %1896 = vmatprep.subr.mxu0 0.0
    %1897 = vmatpush2.msra.mxu0 0.0
    %1898 = vmatprep.subr.mxu0 0.0
    %1899 = vmatpush2.msra.mxu0 0.0
    %1900 = vmatprep.subr.mxu0 0.0
    %1901 = vmatpush2.msra.mxu0 0.0
    %1902 = vmatprep.subr.mxu0 0.0
    %1903 = vmatpush2.msra.mxu0 0.0
    %1904 = vmatprep.subr.mxu0 0.0
    %1905 = vmatpush2.msra.mxu0 0.0
    %1906 = vmatprep.subr.mxu0 0.0
    %1907 = vmatpush2.msra.mxu0 0.0
    %1908 = vmatprep.subr.mxu0 0.0
    %1909 = vmatpush2.msra.mxu0 0.0
    %1910 = vmatprep.mubr.f32.mxu0 0.0
    %1911 = vmatmul.mubr.f32.gmra.mxu0 %v1823
    %v1912 = vpop.f32.mrf.mxu0
    %v1913 = vadd.f32 0.0, %v1912
    %v1914 = vpop.f32.mrf.mxu0
    %1915 = vmatprep.mubr.f32.mxu0 0.0
    %1916 = vmatmul.mubr.f32.gmra.mxu0 %v1826
    %v1917 = vpop.f32.mrf.mxu0
    %v1918 = vadd.f32 0.0, %v1917
    %v1919 = vpop.f32.mrf.mxu0
    %1920 = vmatprep.mubr.f32.mxu0 0.0
    %1921 = vmatmul.mubr.f32.gmra.mxu0 %v1829
    %v1922 = vpop.f32.mrf.mxu0
    %v1923 = vadd.f32 0.0, %v1922
    %v1924 = vpop.f32.mrf.mxu0
    %1925 = vmatprep.mubr.f32.mxu0 0.0
    %1926 = vmatmul.mubr.f32.gmra.mxu0 %v1832
    %v1927 = vpop.f32.mrf.mxu0
    %v1928 = vadd.f32 0.0, %v1927
    %v1929 = vpop.f32.mrf.mxu0
    %1930 = vmatprep.mubr.f32.mxu0 0.0
    %1931 = vmatmul.mubr.f32.gmra.mxu0 %v1835
    %v1932 = vpop.f32.mrf.mxu0
    %v1933 = vadd.f32 0.0, %v1932
    %v1934 = vpop.f32.mrf.mxu0
    %1935 = vmatprep.mubr.f32.mxu0 0.0
    %1936 = vmatmul.mubr.f32.gmra.mxu0 %v1838
    %v1937 = vpop.f32.mrf.mxu0
    %v1938 = vadd.f32 0.0, %v1937
    %v1939 = vpop.f32.mrf.mxu0
    %1940 = vmatprep.mubr.f32.mxu0 0.0
    %1941 = vmatmul.mubr.f32.gmra.mxu0 %v1841
    %v1942 = vpop.f32.mrf.mxu0
    %v1943 = vadd.f32 0.0, %v1942
    %v1944 = vpop.f32.mrf.mxu0
    %1945 = vmatprep.mubr.f32.mxu0 0.0
    %1946 = vmatmul.mubr.f32.gmra.mxu0 %v1844
    %v1947 = vpop.f32.mrf.mxu0
    %v1948 = vadd.f32 0.0, %v1947
    %v1949 = vpop.f32.mrf.mxu0
    %1950 = vdwg.mxu0
    %1951 = vmatprep.subr.mxu0 0.0
    %1952 = vmatpush1.msra.mxu0 0.0
    %1953 = vmatprep.subr.mxu0 0.0
    %1954 = vmatpush1.msra.mxu0 0.0
    %1955 = vmatprep.subr.mxu0 0.0
    %1956 = vmatpush1.msra.mxu0 0.0
    %1957 = vmatprep.subr.mxu0 0.0
    %1958 = vmatpush1.msra.mxu0 0.0
    %1959 = vmatprep.subr.mxu0 0.0
    %1960 = vmatpush1.msra.mxu0 0.0
    %1961 = vmatprep.subr.mxu0 0.0
    %1962 = vmatpush1.msra.mxu0 0.0
    %1963 = vmatprep.subr.mxu0 0.0
    %1964 = vmatpush1.msra.mxu0 0.0
    %1965 = vmatprep.subr.mxu0 0.0
    %1966 = vmatpush1.msra.mxu0 0.0
    %1967 = vmatprep.subr.mxu0 0.0
    %1968 = vmatpush1.msra.mxu0 %v1948
    %1969 = vmatprep.subr.mxu0 0.0
    %1970 = vmatpush1.msra.mxu0 %v1943
    %1971 = vmatprep.subr.mxu0 0.0
    %1972 = vmatpush1.msra.mxu0 %v1938
    %1973 = vmatprep.subr.mxu0 0.0
    %1974 = vmatpush1.msra.mxu0 %v1933
    %1975 = vmatprep.subr.mxu0 0.0
    %1976 = vmatpush1.msra.mxu0 %v1928
    %1977 = vmatprep.subr.mxu0 0.0
    %1978 = vmatpush1.msra.mxu0 %v1923
    %1979 = vmatprep.subr.mxu0 0.0
    %1980 = vmatpush1.msra.mxu0 %v1918
    %1981 = vmatprep.subr.mxu0 0.0
    %1982 = vmatpush1.msra.mxu0 %v1913
    %1983 = vmatprep.subr.mxu0 0.0
    %1984 = vmatpush2.msra.mxu0 0.0
    %1985 = vmatprep.subr.mxu0 0.0
    %1986 = vmatpush2.msra.mxu0 0.0
    %1987 = vmatprep.subr.mxu0 0.0
    %1988 = vmatpush2.msra.mxu0 0.0
    %1989 = vmatprep.subr.mxu0 0.0
    %1990 = vmatpush2.msra.mxu0 0.0
    %1991 = vmatprep.subr.mxu0 0.0
    %1992 = vmatpush2.msra.mxu0 0.0
    %1993 = vmatprep.subr.mxu0 0.0
    %1994 = vmatpush2.msra.mxu0 0.0
    %1995 = vmatprep.subr.mxu0 0.0
    %1996 = vmatpush2.msra.mxu0 0.0
    %1997 = vmatprep.subr.mxu0 0.0
    %1998 = vmatpush2.msra.mxu0 0.0
    %1999 = vmatprep.subr.mxu0 0.0
    %2000 = vmatpush2.msra.mxu0 0.0
    %2001 = vmatprep.subr.mxu0 0.0
    %2002 = vmatpush2.msra.mxu0 0.0
    %2003 = vmatprep.subr.mxu0 0.0
    %2004 = vmatpush2.msra.mxu0 0.0
    %2005 = vmatprep.subr.mxu0 0.0
    %2006 = vmatpush2.msra.mxu0 0.0
    %2007 = vmatprep.subr.mxu0 0.0
    %2008 = vmatpush2.msra.mxu0 0.0
    %2009 = vmatprep.subr.mxu0 0.0
    %2010 = vmatpush2.msra.mxu0 0.0
    %2011 = vmatprep.subr.mxu0 0.0
    %2012 = vmatpush2.msra.mxu0 0.0
    %2013 = vmatprep.subr.mxu0 0.0
    %2014 = vmatpush2.msra.mxu0 0.0
    %2015 = vmatprep.mubr.f32.mxu0 0.0
    %2016 = vmatmul.mubr.f32.gmra.mxu0 %v1558
    %v2017 = vpop.f32.mrf.mxu0
    %v2018 = vadd.f32 0.0, %v2017
    %v2019 = vpop.f32.mrf.mxu0
    %2020 = vmatprep.mubr.f32.mxu0 0.0
    %2021 = vmatmul.mubr.f32.gmra.mxu0 %v1561
    %v2022 = vpop.f32.mrf.mxu0
    %v2023 = vadd.f32 0.0, %v2022
    %v2024 = vpop.f32.mrf.mxu0
    %2025 = vmatprep.mubr.f32.mxu0 0.0
    %2026 = vmatmul.mubr.f32.gmra.mxu0 %v1564
    %v2027 = vpop.f32.mrf.mxu0
    %v2028 = vadd.f32 0.0, %v2027
    %v2029 = vpop.f32.mrf.mxu0
    %2030 = vmatprep.mubr.f32.mxu0 0.0
    %2031 = vmatmul.mubr.f32.gmra.mxu0 %v1567
    %v2032 = vpop.f32.mrf.mxu0
    %v2033 = vadd.f32 0.0, %v2032
    %v2034 = vpop.f32.mrf.mxu0
    %2035 = vmatprep.mubr.f32.mxu0 0.0
    %2036 = vmatmul.mubr.f32.gmra.mxu0 %v1570
    %v2037 = vpop.f32.mrf.mxu0
    %v2038 = vadd.f32 0.0, %v2037
    %v2039 = vpop.f32.mrf.mxu0
    %2040 = vmatprep.mubr.f32.mxu0 0.0
    %2041 = vmatmul.mubr.f32.gmra.mxu0 %v1573
    %v2042 = vpop.f32.mrf.mxu0
    %v2043 = vadd.f32 0.0, %v2042
    %v2044 = vpop.f32.mrf.mxu0
    %2045 = vmatprep.mubr.f32.mxu0 0.0
    %2046 = vmatmul.mubr.f32.gmra.mxu0 %v1576
    %v2047 = vpop.f32.mrf.mxu0
    %v2048 = vadd.f32 0.0, %v2047
    %v2049 = vpop.f32.mrf.mxu0
    %2050 = vmatprep.mubr.f32.mxu0 0.0
    %2051 = vmatmul.mubr.f32.gmra.mxu0 %v1579
    %v2052 = vpop.f32.mrf.mxu0
    %v2053 = vadd.f32 0.0, %v2052
    %v2054 = vpop.f32.mrf.mxu0
    %2055 = vdwg.mxu0
    %v2056 = vsel %vm102, %v2018, 0.0
    %2057 = vadd.xlane.f32.xlu0 %v2056
    %v2058 = vpop.xlane.xlu0 %2057
    %v2059 = vsel %vm102, %v2023, 0.0
    %2060 = vadd.xlane.f32.xlu0 %v2059
    %v2061 = vpop.xlane.xlu0 %2060
    %v2062 = vsel %vm102, %v2028, 0.0
    %2063 = vadd.xlane.f32.xlu0 %v2062
    %v2064 = vpop.xlane.xlu0 %2063
    %v2065 = vsel %vm102, %v2033, 0.0
    %2066 = vadd.xlane.f32.xlu0 %v2065
    %v2067 = vpop.xlane.xlu0 %2066
    %v2068 = vsel %vm102, %v2038, 0.0
    %2069 = vadd.xlane.f32.xlu0 %v2068
    %v2070 = vpop.xlane.xlu0 %2069
    %v2071 = vsel %vm102, %v2043, 0.0
    %2072 = vadd.xlane.f32.xlu0 %v2071
    %v2073 = vpop.xlane.xlu0 %2072
    %v2074 = vsel %vm102, %v2048, 0.0
    %2075 = vadd.xlane.f32.xlu0 %v2074
    %v2076 = vpop.xlane.xlu0 %2075
    %v2077 = vsel %vm102, %v2053, 0.0
    %2078 = vadd.xlane.f32.xlu0 %v2077
    %v2079 = vpop.xlane.xlu0 %2078
    %v2080 = vmul.f32 %v2058, %v969
    %v2081 = vmul.f32 %v2061, %v969
    %v2082 = vmul.f32 %v2064, %v969
    %v2083 = vmul.f32 %v2067, %v969
    %v2084 = vmul.f32 %v2070, %v969
    %v2085 = vmul.f32 %v2073, %v969
    %v2086 = vmul.f32 %v2076, %v969
    %v2087 = vmul.f32 %v2079, %v969
    %v2088 = vsub.f32 %v2018, %v2080
    %v2089 = vsub.f32 %v2023, %v2081
    %v2090 = vsub.f32 %v2028, %v2082
    %v2091 = vsub.f32 %v2033, %v2083
    %v2092 = vsub.f32 %v2038, %v2084
    %v2093 = vsub.f32 %v2043, %v2085
    %v2094 = vsub.f32 %v2048, %v2086
    %v2095 = vsub.f32 %v2053, %v2087
    %v2096 = vmul.f32 %v2088, %v2088
    %v2097 = vmul.f32 %v2089, %v2089
    %v2098 = vmul.f32 %v2090, %v2090
    %v2099 = vmul.f32 %v2091, %v2091
    %v2100 = vmul.f32 %v2092, %v2092
    %v2101 = vmul.f32 %v2093, %v2093
    %v2102 = vmul.f32 %v2094, %v2094
    %v2103 = vmul.f32 %v2095, %v2095
    %v2104 = vsel %vm102, %v2096, 0.0
    %2105 = vadd.xlane.f32.xlu0 %v2104
    %v2106 = vpop.xlane.xlu0 %2105
    %v2107 = vsel %vm102, %v2097, 0.0
    %2108 = vadd.xlane.f32.xlu0 %v2107
    %v2109 = vpop.xlane.xlu0 %2108
    %v2110 = vsel %vm102, %v2098, 0.0
    %2111 = vadd.xlane.f32.xlu0 %v2110
    %v2112 = vpop.xlane.xlu0 %2111
    %v2113 = vsel %vm102, %v2099, 0.0
    %2114 = vadd.xlane.f32.xlu0 %v2113
    %v2115 = vpop.xlane.xlu0 %2114
    %v2116 = vsel %vm102, %v2100, 0.0
    %2117 = vadd.xlane.f32.xlu0 %v2116
    %v2118 = vpop.xlane.xlu0 %2117
    %v2119 = vsel %vm102, %v2101, 0.0
    %2120 = vadd.xlane.f32.xlu0 %v2119
    %v2121 = vpop.xlane.xlu0 %2120
    %v2122 = vsel %vm102, %v2102, 0.0
    %2123 = vadd.xlane.f32.xlu0 %v2122
    %v2124 = vpop.xlane.xlu0 %2123
    %v2125 = vsel %vm102, %v2103, 0.0
    %2126 = vadd.xlane.f32.xlu0 %v2125
    %v2127 = vpop.xlane.xlu0 %2126
    %v2128 = vmul.f32 %v2106, %v969
    %v2129 = vmul.f32 %v2109, %v969
    %v2130 = vmul.f32 %v2112, %v969
    %v2131 = vmul.f32 %v2115, %v969
    %v2132 = vmul.f32 %v2118, %v969
    %v2133 = vmul.f32 %v2121, %v969
    %v2134 = vmul.f32 %v2124, %v969
    %v2135 = vmul.f32 %v2127, %v969
    %v2136 = vadd.f32 %v2128, 1e-05
    %v2137 = vadd.f32 %v2129, 1e-05
    %v2138 = vadd.f32 %v2130, 1e-05
    %v2139 = vadd.f32 %v2131, 1e-05
    %v2140 = vadd.f32 %v2132, 1e-05
    %v2141 = vadd.f32 %v2133, 1e-05
    %v2142 = vadd.f32 %v2134, 1e-05
    %v2143 = vadd.f32 %v2135, 1e-05
    %v2144 = vrsqrt.pop %v2136
    %v2145 = vrsqrt.pop %v2137
    %v2146 = vrsqrt.pop %v2138
    %v2147 = vrsqrt.pop %v2139
    %v2148 = vrsqrt.pop %v2140
    %v2149 = vrsqrt.pop %v2141
    %v2150 = vrsqrt.pop %v2142
    %v2151 = vrsqrt.pop %v2143
    %v2152 = vmul.f32 %v2088, %v2144
    %v2153 = vmul.f32 %v2089, %v2145
    %v2154 = vmul.f32 %v2090, %v2146
    %v2155 = vmul.f32 %v2091, %v2147
    %v2156 = vmul.f32 %v2092, %v2148
    %v2157 = vmul.f32 %v2093, %v2149
    %v2158 = vmul.f32 %v2094, %v2150
    %v2159 = vmul.f32 %v2095, %v2151
    %v2160 = vlaneseq
    %v2161 = vshrl.u32 %v2160, 7
    %v2162 = vsub.s32 1, %v2161
    %v2163 = vrot.slane %v699, %v2162
    %v2164 = vmul.f32 %v2152, %v2163
    %v2165 = vmul.f32 %v2153, %v2163
    %v2166 = vmul.f32 %v2154, %v2163
    %v2167 = vmul.f32 %v2155, %v2163
    %v2168 = vmul.f32 %v2156, %v2163
    %v2169 = vmul.f32 %v2157, %v2163
    %v2170 = vmul.f32 %v2158, %v2163
    %v2171 = vmul.f32 %v2159, %v2163
    %v2172 = vlaneseq
    %v2173 = vshrl.u32 %v2172, 7
    %v2174 = vsub.s32 1, %v2173
    %v2175 = vrot.slane %v700, %v2174
    %v2176 = vadd.f32 %v2164, %v2175
    %v2177 = vadd.f32 %v2165, %v2175
    %v2178 = vadd.f32 %v2166, %v2175
    %v2179 = vadd.f32 %v2167, %v2175
    %v2180 = vadd.f32 %v2168, %v2175
    %v2181 = vadd.f32 %v2169, %v2175
    %v2182 = vadd.f32 %v2170, %v2175
    %v2183 = vadd.f32 %v2171, %v2175
    %v2184 = vmax.f32 %v2176, 0.0
    %v2185 = vmax.f32 %v2177, 0.0
    %v2186 = vmax.f32 %v2178, 0.0
    %v2187 = vmax.f32 %v2179, 0.0
    %v2188 = vmax.f32 %v2180, 0.0
    %v2189 = vmax.f32 %v2181, 0.0
    %v2190 = vmax.f32 %v2182, 0.0
    %v2191 = vmax.f32 %v2183, 0.0
    %v2192 = vld [vmem:[%s6] sm:$0x3]
    %v2194 = vsel %vm409, %v2192, 0
    %2196 = vmatprep.subr.mxu0 0.0
    %2197 = vmatpush1.msra.mxu0 0.0
    %2198 = vmatprep.subr.mxu0 0.0
    %2199 = vmatpush1.msra.mxu0 0.0
    %2200 = vmatprep.subr.mxu0 0.0
    %2201 = vmatpush1.msra.mxu0 0.0
    %2202 = vmatprep.subr.mxu0 0.0
    %2203 = vmatpush1.msra.mxu0 0.0
    %2204 = vmatprep.subr.mxu0 0.0
    %2205 = vmatpush1.msra.mxu0 0.0
    %2206 = vmatprep.subr.mxu0 0.0
    %2207 = vmatpush1.msra.mxu0 0.0
    %2208 = vmatprep.subr.mxu0 0.0
    %2209 = vmatpush1.msra.mxu0 0.0
    %2210 = vmatprep.subr.mxu0 0.0
    %2211 = vmatpush1.msra.mxu0 0.0
    %2212 = vmatprep.subr.mxu0 0.0
    %2213 = vmatpush1.msra.mxu0 %v1451
    %2214 = vmatprep.subr.mxu0 0.0
    %2215 = vmatpush1.msra.mxu0 %v1450
    %2216 = vmatprep.subr.mxu0 0.0
    %2217 = vmatpush1.msra.mxu0 %v1449
    %2218 = vmatprep.subr.mxu0 0.0
    %2219 = vmatpush1.msra.mxu0 %v1448
    %2220 = vmatprep.subr.mxu0 0.0
    %2221 = vmatpush1.msra.mxu0 %v1447
    %2222 = vmatprep.subr.mxu0 0.0
    %2223 = vmatpush1.msra.mxu0 %v1446
    %2224 = vmatprep.subr.mxu0 0.0
    %2225 = vmatpush1.msra.mxu0 %v1445
    %2226 = vmatprep.subr.mxu0 0.0
    %2227 = vmatpush1.msra.mxu0 %v1444
    %2228 = vmatprep.subr.mxu0 0.0
    %2229 = vmatpush2.msra.mxu0 0.0
    %2230 = vmatprep.subr.mxu0 0.0
    %2231 = vmatpush2.msra.mxu0 0.0
    %2232 = vmatprep.subr.mxu0 0.0
    %2233 = vmatpush2.msra.mxu0 0.0
    %2234 = vmatprep.subr.mxu0 0.0
    %2235 = vmatpush2.msra.mxu0 0.0
    %2236 = vmatprep.subr.mxu0 0.0
    %2237 = vmatpush2.msra.mxu0 0.0
    %2238 = vmatprep.subr.mxu0 0.0
    %2239 = vmatpush2.msra.mxu0 0.0
    %2240 = vmatprep.subr.mxu0 0.0
    %2241 = vmatpush2.msra.mxu0 0.0
    %2242 = vmatprep.subr.mxu0 0.0
    %2243 = vmatpush2.msra.mxu0 0.0
    %2244 = vmatprep.subr.mxu0 0.0
    %2245 = vmatpush2.msra.mxu0 0.0
    %2246 = vmatprep.subr.mxu0 0.0
    %2247 = vmatpush2.msra.mxu0 0.0
    %2248 = vmatprep.subr.mxu0 0.0
    %2249 = vmatpush2.msra.mxu0 0.0
    %2250 = vmatprep.subr.mxu0 0.0
    %2251 = vmatpush2.msra.mxu0 0.0
    %2252 = vmatprep.subr.mxu0 0.0
    %2253 = vmatpush2.msra.mxu0 0.0
    %2254 = vmatprep.subr.mxu0 0.0
    %2255 = vmatpush2.msra.mxu0 0.0
    %2256 = vmatprep.subr.mxu0 0.0
    %2257 = vmatpush2.msra.mxu0 0.0
    %2258 = vmatprep.subr.mxu0 0.0
    %2259 = vmatpush2.msra.mxu0 0.0
    %2260 = vmatprep.mubr.f32.mxu0 0.0
    %2261 = vmatmul.mubr.f32.gmra.mxu0 %v2194
    %v2262 = vpop.f32.mrf.mxu0
    %v2263 = vadd.f32 0.0, %v2262
    %v2264 = vpop.f32.mrf.mxu0
    %2265 = vdwg.mxu0
    %v2266 = vld [vmem:[%s4] sm:$0xff]
    %v2267 = vld [vmem:[%s4 + $0x8] sm:$0xff]
    %v2268 = vld [vmem:[%s4 + $0x10] sm:$0xff]
    %v2269 = vld [vmem:[%s5] sm:$0xff]
    %v2270 = vld [vmem:[%s5 + $0x8] sm:$0xff]
    %v2271 = vld [vmem:[%s5 + $0x10] sm:$0xff]
    %v2272 = vld [vmem:[%s1] sm:$0xff]
    %v2273 = vld [vmem:[%s1 + $0x8] sm:$0xff]
    %vm2274 = vcmask 130048
    %v2276 = vsel %vm2274, %v2269, 0
    %v2279 = vsel %vm2274, %v2270, 0
    %v2282 = vsel %vm2274, %v2271, 0
    %2284 = vmatprep.subr.mxu0 0.0
    %2285 = vmatpush1.msra.mxu0 0.0
    %2286 = vmatprep.subr.mxu0 0.0
    %2287 = vmatpush1.msra.mxu0 0.0
    %2288 = vmatprep.subr.mxu0 0.0
    %2289 = vmatpush1.msra.mxu0 0.0
    %2290 = vmatprep.subr.mxu0 0.0
    %2291 = vmatpush1.msra.mxu0 0.0
    %2292 = vmatprep.subr.mxu0 0.0
    %2293 = vmatpush1.msra.mxu0 0.0
    %2294 = vmatprep.subr.mxu0 0.0
    %2295 = vmatpush1.msra.mxu0 0.0
    %2296 = vmatprep.subr.mxu0 0.0
    %2297 = vmatpush1.msra.mxu0 0.0
    %2298 = vmatprep.subr.mxu0 0.0
    %2299 = vmatpush1.msra.mxu0 0.0
    %2300 = vmatprep.subr.mxu0 0.0
    %2301 = vmatpush1.msra.mxu0 0.0
    %2302 = vmatprep.subr.mxu0 0.0
    %2303 = vmatpush1.msra.mxu0 0.0
    %2304 = vmatprep.subr.mxu0 0.0
    %2305 = vmatpush1.msra.mxu0 0.0
    %2306 = vmatprep.subr.mxu0 0.0
    %2307 = vmatpush1.msra.mxu0 0.0
    %2308 = vmatprep.subr.mxu0 0.0
    %2309 = vmatpush1.msra.mxu0 0.0
    %2310 = vmatprep.subr.mxu0 0.0
    %2311 = vmatpush1.msra.mxu0 0.0
    %2312 = vmatprep.subr.mxu0 0.0
    %2313 = vmatpush1.msra.mxu0 %v2273
    %2314 = vmatprep.subr.mxu0 0.0
    %2315 = vmatpush1.msra.mxu0 %v2272
    %2316 = vmatprep.subr.mxu0 0.0
    %2317 = vmatpush2.msra.mxu0 0.0
    %2318 = vmatprep.subr.mxu0 0.0
    %2319 = vmatpush2.msra.mxu0 0.0
    %2320 = vmatprep.subr.mxu0 0.0
    %2321 = vmatpush2.msra.mxu0 0.0
    %2322 = vmatprep.subr.mxu0 0.0
    %2323 = vmatpush2.msra.mxu0 0.0
    %2324 = vmatprep.subr.mxu0 0.0
    %2325 = vmatpush2.msra.mxu0 0.0
    %2326 = vmatprep.subr.mxu0 0.0
    %2327 = vmatpush2.msra.mxu0 0.0
    %2328 = vmatprep.subr.mxu0 0.0
    %2329 = vmatpush2.msra.mxu0 0.0
    %2330 = vmatprep.subr.mxu0 0.0
    %2331 = vmatpush2.msra.mxu0 0.0
    %2332 = vmatprep.subr.mxu0 0.0
    %2333 = vmatpush2.msra.mxu0 0.0
    %2334 = vmatprep.subr.mxu0 0.0
    %2335 = vmatpush2.msra.mxu0 0.0
    %2336 = vmatprep.subr.mxu0 0.0
    %2337 = vmatpush2.msra.mxu0 0.0
    %2338 = vmatprep.subr.mxu0 0.0
    %2339 = vmatpush2.msra.mxu0 0.0
    %2340 = vmatprep.subr.mxu0 0.0
    %2341 = vmatpush2.msra.mxu0 0.0
    %2342 = vmatprep.subr.mxu0 0.0
    %2343 = vmatpush2.msra.mxu0 0.0
    %2344 = vmatprep.subr.mxu0 0.0
    %2345 = vmatpush2.msra.mxu0 0.0
    %2346 = vmatprep.subr.mxu0 0.0
    %2347 = vmatpush2.msra.mxu0 0.0
    %2348 = vmatprep.mubr.f32.mxu0 0.0
    %2349 = vmatmul.mubr.f32.gmra.mxu0 %v2276
    %v2350 = vpop.f32.mrf.mxu0
    %v2351 = vadd.f32 0.0, %v2350
    %v2352 = vpop.f32.mrf.mxu0
    %2353 = vmatprep.mubr.f32.mxu0 0.0
    %2354 = vmatmul.mubr.f32.gmra.mxu0 %v2279
    %v2355 = vpop.f32.mrf.mxu0
    %v2356 = vadd.f32 0.0, %v2355
    %v2357 = vpop.f32.mrf.mxu0
    %2358 = vmatprep.mubr.f32.mxu0 0.0
    %2359 = vmatmul.mubr.f32.gmra.mxu0 %v2282
    %v2360 = vpop.f32.mrf.mxu0
    %v2361 = vadd.f32 0.0, %v2360
    %v2362 = vpop.f32.mrf.mxu0
    %2363 = vdwg.mxu0
    %v2365 = vsel %vm409, %v2266, 0
    %v2368 = vsel %vm409, %v2267, 0
    %v2371 = vsel %vm409, %v2268, 0
    %2373 = vmatprep.subr.mxu0 0.0
    %2374 = vmatpush1.msra.mxu0 0.0
    %2375 = vmatprep.subr.mxu0 0.0
    %2376 = vmatpush1.msra.mxu0 0.0
    %2377 = vmatprep.subr.mxu0 0.0
    %2378 = vmatpush1.msra.mxu0 0.0
    %2379 = vmatprep.subr.mxu0 0.0
    %2380 = vmatpush1.msra.mxu0 0.0
    %2381 = vmatprep.subr.mxu0 0.0
    %2382 = vmatpush1.msra.mxu0 0.0
    %2383 = vmatprep.subr.mxu0 0.0
    %2384 = vmatpush1.msra.mxu0 0.0
    %2385 = vmatprep.subr.mxu0 0.0
    %2386 = vmatpush1.msra.mxu0 0.0
    %2387 = vmatprep.subr.mxu0 0.0
    %2388 = vmatpush1.msra.mxu0 0.0
    %2389 = vmatprep.subr.mxu0 0.0
    %2390 = vmatpush1.msra.mxu0 %v2191
    %2391 = vmatprep.subr.mxu0 0.0
    %2392 = vmatpush1.msra.mxu0 %v2190
    %2393 = vmatprep.subr.mxu0 0.0
    %2394 = vmatpush1.msra.mxu0 %v2189
    %2395 = vmatprep.subr.mxu0 0.0
    %2396 = vmatpush1.msra.mxu0 %v2188
    %2397 = vmatprep.subr.mxu0 0.0
    %2398 = vmatpush1.msra.mxu0 %v2187
    %2399 = vmatprep.subr.mxu0 0.0
    %2400 = vmatpush1.msra.mxu0 %v2186
    %2401 = vmatprep.subr.mxu0 0.0
    %2402 = vmatpush1.msra.mxu0 %v2185
    %2403 = vmatprep.subr.mxu0 0.0
    %2404 = vmatpush1.msra.mxu0 %v2184
    %2405 = vmatprep.subr.mxu0 0.0
    %2406 = vmatpush2.msra.mxu0 0.0
    %2407 = vmatprep.subr.mxu0 0.0
    %2408 = vmatpush2.msra.mxu0 0.0
    %2409 = vmatprep.subr.mxu0 0.0
    %2410 = vmatpush2.msra.mxu0 0.0
    %2411 = vmatprep.subr.mxu0 0.0
    %2412 = vmatpush2.msra.mxu0 0.0
    %2413 = vmatprep.subr.mxu0 0.0
    %2414 = vmatpush2.msra.mxu0 0.0
    %2415 = vmatprep.subr.mxu0 0.0
    %2416 = vmatpush2.msra.mxu0 0.0
    %2417 = vmatprep.subr.mxu0 0.0
    %2418 = vmatpush2.msra.mxu0 0.0
    %2419 = vmatprep.subr.mxu0 0.0
    %2420 = vmatpush2.msra.mxu0 0.0
    %2421 = vmatprep.subr.mxu0 0.0
    %2422 = vmatpush2.msra.mxu0 0.0
    %2423 = vmatprep.subr.mxu0 0.0
    %2424 = vmatpush2.msra.mxu0 0.0
    %2425 = vmatprep.subr.mxu0 0.0
    %2426 = vmatpush2.msra.mxu0 0.0
    %2427 = vmatprep.subr.mxu0 0.0
    %2428 = vmatpush2.msra.mxu0 0.0
    %2429 = vmatprep.subr.mxu0 0.0
    %2430 = vmatpush2.msra.mxu0 0.0
    %2431 = vmatprep.subr.mxu0 0.0
    %2432 = vmatpush2.msra.mxu0 0.0
    %2433 = vmatprep.subr.mxu0 0.0
    %2434 = vmatpush2.msra.mxu0 0.0
    %2435 = vmatprep.subr.mxu0 0.0
    %2436 = vmatpush2.msra.mxu0 0.0
    %2437 = vmatprep.mubr.f32.mxu0 0.0
    %2438 = vmatmul.mubr.f32.gmra.mxu0 %v2365
    %v2439 = vpop.f32.mrf.mxu0
    %v2440 = vadd.f32 %v2351, %v2439
    %v2441 = vpop.f32.mrf.mxu0
    %2442 = vmatprep.mubr.f32.mxu0 0.0
    %2443 = vmatmul.mubr.f32.gmra.mxu0 %v2368
    %v2444 = vpop.f32.mrf.mxu0
    %v2445 = vadd.f32 %v2356, %v2444
    %v2446 = vpop.f32.mrf.mxu0
    %2447 = vmatprep.mubr.f32.mxu0 0.0
    %2448 = vmatmul.mubr.f32.gmra.mxu0 %v2371
    %v2449 = vpop.f32.mrf.mxu0
    %v2450 = vadd.f32 %v2361, %v2449
    %v2451 = vpop.f32.mrf.mxu0
    %2452 = vdwg.mxu0
    %v2453 = vld [vmem:[%s11] sm:$0xff]
    %v2454 = vld [vmem:[%s11 + $0x8] sm:$0xff]
    %v2455 = vld [vmem:[%s11 + $0x10] sm:$0xff]
    %v2456 = vld [vmem:[%s11 + $0x18] sm:$0xff]
    %v2457 = vld [vmem:[%s12] sm:$0x1]
    %v2459 = vlaneseq
    %v2460 = vshrl.u32 %v2459, 7
    %v2461 = vsub.s32 0, %v2460
    %v2462 = vrot.slane %v2457, %v2461
    %v2465 = vsel %vm102, %v2440, 0
    %v2468 = vsel %vm102, %v2445, 0
    %v2471 = vsel %vm102, %v2450, 0
    %2473 = vmatprep.subr.mxu0 0.0
    %2474 = vmatpush1.msra.mxu0 0.0
    %2475 = vmatprep.subr.mxu0 0.0
    %2476 = vmatpush1.msra.mxu0 0.0
    %2477 = vmatprep.subr.mxu0 0.0
    %2478 = vmatpush1.msra.mxu0 0.0
    %2479 = vmatprep.subr.mxu0 0.0
    %2480 = vmatpush1.msra.mxu0 0.0
    %2481 = vmatprep.subr.mxu0 0.0
    %2482 = vmatpush1.msra.mxu0 0.0
    %2483 = vmatprep.subr.mxu0 0.0
    %2484 = vmatpush1.msra.mxu0 0.0
    %2485 = vmatprep.subr.mxu0 0.0
    %2486 = vmatpush1.msra.mxu0 0.0
    %2487 = vmatprep.subr.mxu0 0.0
    %2488 = vmatpush1.msra.mxu0 0.0
    %2489 = vmatprep.subr.mxu0 0.0
    %2490 = vmatpush1.msra.mxu0 0.0
    %2491 = vmatprep.subr.mxu0 0.0
    %2492 = vmatpush1.msra.mxu0 0.0
    %2493 = vmatprep.subr.mxu0 0.0
    %2494 = vmatpush1.msra.mxu0 0.0
    %2495 = vmatprep.subr.mxu0 0.0
    %2496 = vmatpush1.msra.mxu0 0.0
    %2497 = vmatprep.subr.mxu0 0.0
    %2498 = vmatpush1.msra.mxu0 %v2456
    %2499 = vmatprep.subr.mxu0 0.0
    %2500 = vmatpush1.msra.mxu0 %v2455
    %2501 = vmatprep.subr.mxu0 0.0
    %2502 = vmatpush1.msra.mxu0 %v2454
    %2503 = vmatprep.subr.mxu0 0.0
    %2504 = vmatpush1.msra.mxu0 %v2453
    %2505 = vmatprep.subr.mxu0 0.0
    %2506 = vmatpush2.msra.mxu0 0.0
    %2507 = vmatprep.subr.mxu0 0.0
    %2508 = vmatpush2.msra.mxu0 0.0
    %2509 = vmatprep.subr.mxu0 0.0
    %2510 = vmatpush2.msra.mxu0 0.0
    %2511 = vmatprep.subr.mxu0 0.0
    %2512 = vmatpush2.msra.mxu0 0.0
    %2513 = vmatprep.subr.mxu0 0.0
    %2514 = vmatpush2.msra.mxu0 0.0
    %2515 = vmatprep.subr.mxu0 0.0
    %2516 = vmatpush2.msra.mxu0 0.0
    %2517 = vmatprep.subr.mxu0 0.0
    %2518 = vmatpush2.msra.mxu0 0.0
    %2519 = vmatprep.subr.mxu0 0.0
    %2520 = vmatpush2.msra.mxu0 0.0
    %2521 = vmatprep.subr.mxu0 0.0
    %2522 = vmatpush2.msra.mxu0 0.0
    %2523 = vmatprep.subr.mxu0 0.0
    %2524 = vmatpush2.msra.mxu0 0.0
    %2525 = vmatprep.subr.mxu0 0.0
    %2526 = vmatpush2.msra.mxu0 0.0
    %2527 = vmatprep.subr.mxu0 0.0
    %2528 = vmatpush2.msra.mxu0 0.0
    %2529 = vmatprep.subr.mxu0 0.0
    %2530 = vmatpush2.msra.mxu0 0.0
    %2531 = vmatprep.subr.mxu0 0.0
    %2532 = vmatpush2.msra.mxu0 0.0
    %2533 = vmatprep.subr.mxu0 0.0
    %2534 = vmatpush2.msra.mxu0 0.0
    %2535 = vmatprep.subr.mxu0 0.0
    %2536 = vmatpush2.msra.mxu0 0.0
    %2537 = vmatprep.mubr.f32.mxu0 0.0
    %2538 = vmatmul.mubr.f32.gmra.mxu0 %v2465
    %v2539 = vpop.f32.mrf.mxu0
    %v2540 = vadd.f32 %v2462, %v2539
    %v2541 = vpop.f32.mrf.mxu0
    %2542 = vmatprep.mubr.f32.mxu0 0.0
    %2543 = vmatmul.mubr.f32.gmra.mxu0 %v2468
    %v2544 = vpop.f32.mrf.mxu0
    %v2545 = vadd.f32 %v2462, %v2544
    %v2546 = vpop.f32.mrf.mxu0
    %2547 = vmatprep.mubr.f32.mxu0 0.0
    %2548 = vmatmul.mubr.f32.gmra.mxu0 %v2471
    %v2549 = vpop.f32.mrf.mxu0
    %v2550 = vadd.f32 %v2462, %v2549
    %v2551 = vpop.f32.mrf.mxu0
    %2552 = vdwg.mxu0
    %v2553 = vld [vmem:[%s3] sm:$0xff]
    %v2554 = vld [vmem:[%s3 + $0x8] sm:$0xff]
    %v2555 = vld [vmem:[%s3 + $0x10] sm:$0xff]
    %2559 = vrot.lane.b32.xlu0 %v2540, 96
    %v2560 = vpop.permute.xlu0 %2559
    %2561 = vrot.lane.b32.xlu0 %v2545, 96
    %v2562 = vpop.permute.xlu0 %2561
    %2563 = vrot.lane.b32.xlu0 %v2550, 96
    %v2564 = vpop.permute.xlu0 %2563
    %v2565 = vsel %vm102, %v2540, 0
    %v2567 = vsel %vm102, %v2545, 0
    %v2569 = vsel %vm102, %v2550, 0
    %v2571 = vsel %vm102, %v2560, 0
    %v2573 = vsel %vm102, %v2562, 0
    %v2575 = vsel %vm102, %v2564, 0
    %2577 = vmatprep.subr.mxu0 0.0
    %2578 = vmatpush1.xpose.msra.mxu0 0.0
    %2579 = vmatprep.subr.mxu0 0.0
    %2580 = vmatpush1.xpose.msra.mxu0 0.0
    %2581 = vmatprep.subr.mxu0 0.0
    %2582 = vmatpush1.xpose.msra.mxu0 0.0
    %2583 = vmatprep.subr.mxu0 0.0
    %2584 = vmatpush1.xpose.msra.mxu0 0.0
    %2585 = vmatprep.subr.mxu0 0.0
    %2586 = vmatpush1.xpose.msra.mxu0 0.0
    %2587 = vmatprep.subr.mxu0 0.0
    %2588 = vmatpush1.xpose.msra.mxu0 0.0
    %2589 = vmatprep.subr.mxu0 0.0
    %2590 = vmatpush1.xpose.msra.mxu0 0.0
    %2591 = vmatprep.subr.mxu0 0.0
    %2592 = vmatpush1.xpose.msra.mxu0 0.0
    %2593 = vmatprep.subr.mxu0 0.0
    %2594 = vmatpush1.xpose.msra.mxu0 0.0
    %2595 = vmatprep.subr.mxu0 0.0
    %2596 = vmatpush1.xpose.msra.mxu0 0.0
    %2597 = vmatprep.subr.mxu0 0.0
    %2598 = vmatpush1.xpose.msra.mxu0 0.0
    %2599 = vmatprep.subr.mxu0 0.0
    %2600 = vmatpush1.xpose.msra.mxu0 0.0
    %2601 = vmatprep.subr.mxu0 0.0
    %2602 = vmatpush1.xpose.msra.mxu0 0.0
    %2603 = vmatprep.subr.mxu0 0.0
    %2604 = vmatpush1.xpose.msra.mxu0 %v2575
    %2605 = vmatprep.subr.mxu0 0.0
    %2606 = vmatpush1.xpose.msra.mxu0 %v2573
    %2607 = vmatprep.subr.mxu0 0.0
    %2608 = vmatpush1.xpose.msra.mxu0 %v2571
    %2609 = vmatprep.subr.mxu0 0.0
    %2610 = vmatpush2.xpose.msra.mxu0 0.0
    %2611 = vmatprep.subr.mxu0 0.0
    %2612 = vmatpush2.xpose.msra.mxu0 0.0
    %2613 = vmatprep.subr.mxu0 0.0
    %2614 = vmatpush2.xpose.msra.mxu0 0.0
    %2615 = vmatprep.subr.mxu0 0.0
    %2616 = vmatpush2.xpose.msra.mxu0 0.0
    %2617 = vmatprep.subr.mxu0 0.0
    %2618 = vmatpush2.xpose.msra.mxu0 0.0
    %2619 = vmatprep.subr.mxu0 0.0
    %2620 = vmatpush2.xpose.msra.mxu0 0.0
    %2621 = vmatprep.subr.mxu0 0.0
    %2622 = vmatpush2.xpose.msra.mxu0 0.0
    %2623 = vmatprep.subr.mxu0 0.0
    %2624 = vmatpush2.xpose.msra.mxu0 0.0
    %2625 = vmatprep.subr.mxu0 0.0
    %2626 = vmatpush2.xpose.msra.mxu0 0.0
    %2627 = vmatprep.subr.mxu0 0.0
    %2628 = vmatpush2.xpose.msra.mxu0 0.0
    %2629 = vmatprep.subr.mxu0 0.0
    %2630 = vmatpush2.xpose.msra.mxu0 0.0
    %2631 = vmatprep.subr.mxu0 0.0
    %2632 = vmatpush2.xpose.msra.mxu0 0.0
    %2633 = vmatprep.subr.mxu0 0.0
    %2634 = vmatpush2.xpose.msra.mxu0 0.0
    %2635 = vmatprep.subr.mxu0 0.0
    %2636 = vmatpush2.xpose.msra.mxu0 0.0
    %2637 = vmatprep.subr.mxu0 0.0
    %2638 = vmatpush2.xpose.msra.mxu0 0.0
    %2639 = vmatprep.subr.mxu0 0.0
    %2640 = vmatpush2.xpose.msra.mxu0 0.0
    %2641 = vmatprep.mubr.f32.mxu0 0.0
    %2642 = vmatmul.mubr.f32.gmra.mxu0 %v2565
    %v2643 = vpop.f32.mrf.mxu0
    %v2644 = vadd.f32 0.0, %v2643
    %v2645 = vpop.f32.mrf.mxu0
    %2646 = vmatprep.mubr.f32.mxu0 0.0
    %2647 = vmatmul.mubr.f32.gmra.mxu0 %v2567
    %v2648 = vpop.f32.mrf.mxu0
    %v2649 = vadd.f32 0.0, %v2648
    %v2650 = vpop.f32.mrf.mxu0
    %2651 = vmatprep.mubr.f32.mxu0 0.0
    %2652 = vmatmul.mubr.f32.gmra.mxu0 %v2569
    %v2653 = vpop.f32.mrf.mxu0
    %v2654 = vadd.f32 0.0, %v2653
    %v2655 = vpop.f32.mrf.mxu0
    %2656 = vdwg.mxu0
    %v2657 = vmul.f32 %v2644, %v2644
    %v2658 = vmul.f32 %v2649, %v2649
    %v2659 = vmul.f32 %v2654, %v2654
    %v2660 = vmul.f32 %v2657, %v2553
    %v2661 = vmul.f32 %v2658, %v2554
    %v2662 = vmul.f32 %v2659, %v2555
    %vm2663 = vcmask 195584
    %v2664 = vsel %vm2663, %v2660, 0.0
    %2665 = vadd.xlane.f32.xlu0 %v2664
    %v2666 = vpop.xlane.xlu0 %2665
    %v2667 = vsel %vm2663, %v2661, 0.0
    %2668 = vadd.xlane.f32.xlu0 %v2667
    %v2669 = vpop.xlane.xlu0 %2668
    %v2670 = vsel %vm2663, %v2662, 0.0
    %2671 = vadd.xlane.f32.xlu0 %v2670
    %v2672 = vpop.xlane.xlu0 %2671
    %v2673 = vmax.f32 %v2666, 1e-12
    %v2674 = vmax.f32 %v2669, 1e-12
    %v2675 = vmax.f32 %v2672, 1e-12
    %v2676 = vrcp.pop %v2673
    %v2677 = vmul.f32 %v2660, %v2676
    %v2678 = vrcp.pop %v2674
    %v2679 = vmul.f32 %v2661, %v2678
    %v2680 = vrcp.pop %v2675
    %v2681 = vmul.f32 %v2662, %v2680
    %2682 = vmatprep.subr.mxu0 0.0
    %2683 = vmatpush1.msra.mxu0 0.0
    %2684 = vmatprep.subr.mxu0 0.0
    %2685 = vmatpush1.msra.mxu0 0.0
    %2686 = vmatprep.subr.mxu0 0.0
    %2687 = vmatpush1.msra.mxu0 0.0
    %2688 = vmatprep.subr.mxu0 0.0
    %2689 = vmatpush1.msra.mxu0 0.0
    %2690 = vmatprep.subr.mxu0 0.0
    %2691 = vmatpush1.msra.mxu0 0.0
    %2692 = vmatprep.subr.mxu0 0.0
    %2693 = vmatpush1.msra.mxu0 0.0
    %2694 = vmatprep.subr.mxu0 0.0
    %2695 = vmatpush1.msra.mxu0 0.0
    %2696 = vmatprep.subr.mxu0 0.0
    %2697 = vmatpush1.msra.mxu0 0.0
    %2698 = vmatprep.subr.mxu0 0.0
    %2699 = vmatpush1.msra.mxu0 0.0
    %2700 = vmatprep.subr.mxu0 0.0
    %2701 = vmatpush1.msra.mxu0 0.0
    %2702 = vmatprep.subr.mxu0 0.0
    %2703 = vmatpush1.msra.mxu0 0.0
    %2704 = vmatprep.subr.mxu0 0.0
    %2705 = vmatpush1.msra.mxu0 0.0
    %2706 = vmatprep.subr.mxu0 0.0
    %2707 = vmatpush1.msra.mxu0 %v694
    %2708 = vmatprep.subr.mxu0 0.0
    %2709 = vmatpush1.msra.mxu0 %v693
    %2710 = vmatprep.subr.mxu0 0.0
    %2711 = vmatpush1.msra.mxu0 %v692
    %2712 = vmatprep.subr.mxu0 0.0
    %2713 = vmatpush1.msra.mxu0 %v691
    %2714 = vmatprep.subr.mxu0 0.0
    %2715 = vmatpush2.msra.mxu0 0.0
    %2716 = vmatprep.subr.mxu0 0.0
    %2717 = vmatpush2.msra.mxu0 0.0
    %2718 = vmatprep.subr.mxu0 0.0
    %2719 = vmatpush2.msra.mxu0 0.0
    %2720 = vmatprep.subr.mxu0 0.0
    %2721 = vmatpush2.msra.mxu0 0.0
    %2722 = vmatprep.subr.mxu0 0.0
    %2723 = vmatpush2.msra.mxu0 0.0
    %2724 = vmatprep.subr.mxu0 0.0
    %2725 = vmatpush2.msra.mxu0 0.0
    %2726 = vmatprep.subr.mxu0 0.0
    %2727 = vmatpush2.msra.mxu0 0.0
    %2728 = vmatprep.subr.mxu0 0.0
    %2729 = vmatpush2.msra.mxu0 0.0
    %2730 = vmatprep.subr.mxu0 0.0
    %2731 = vmatpush2.msra.mxu0 0.0
    %2732 = vmatprep.subr.mxu0 0.0
    %2733 = vmatpush2.msra.mxu0 0.0
    %2734 = vmatprep.subr.mxu0 0.0
    %2735 = vmatpush2.msra.mxu0 0.0
    %2736 = vmatprep.subr.mxu0 0.0
    %2737 = vmatpush2.msra.mxu0 0.0
    %2738 = vmatprep.subr.mxu0 0.0
    %2739 = vmatpush2.msra.mxu0 0.0
    %2740 = vmatprep.subr.mxu0 0.0
    %2741 = vmatpush2.msra.mxu0 0.0
    %2742 = vmatprep.subr.mxu0 0.0
    %2743 = vmatpush2.msra.mxu0 0.0
    %2744 = vmatprep.subr.mxu0 0.0
    %2745 = vmatpush2.msra.mxu0 0.0
    %2746 = vmatprep.mubr.f32.mxu0 0.0
    %2747 = vmatmul.mubr.f32.gmra.mxu0 %v2465
    %v2748 = vpop.f32.mrf.mxu0
    %v2749 = vadd.f32 0.0, %v2748
    %v2750 = vpop.f32.mrf.mxu0
    %2751 = vmatprep.mubr.f32.mxu0 0.0
    %2752 = vmatmul.mubr.f32.gmra.mxu0 %v2468
    %v2753 = vpop.f32.mrf.mxu0
    %v2754 = vadd.f32 0.0, %v2753
    %v2755 = vpop.f32.mrf.mxu0
    %2756 = vmatprep.mubr.f32.mxu0 0.0
    %2757 = vmatmul.mubr.f32.gmra.mxu0 %v2471
    %v2758 = vpop.f32.mrf.mxu0
    %v2759 = vadd.f32 0.0, %v2758
    %v2760 = vpop.f32.mrf.mxu0
    %2761 = vdwg.mxu0
    %v2763 = vsel %vm2663, %v2677, 0
    %v2766 = vsel %vm2663, %v2679, 0
    %v2769 = vsel %vm2663, %v2681, 0
    %2771 = vmatprep.subr.mxu0 0.0
    %2772 = vmatpush1.msra.mxu0 0.0
    %2773 = vmatprep.subr.mxu0 0.0
    %2774 = vmatpush1.msra.mxu0 0.0
    %2775 = vmatprep.subr.mxu0 0.0
    %2776 = vmatpush1.msra.mxu0 0.0
    %2777 = vmatprep.subr.mxu0 0.0
    %2778 = vmatpush1.msra.mxu0 0.0
    %2779 = vmatprep.subr.mxu0 0.0
    %2780 = vmatpush1.msra.mxu0 0.0
    %2781 = vmatprep.subr.mxu0 0.0
    %2782 = vmatpush1.msra.mxu0 0.0
    %2783 = vmatprep.subr.mxu0 0.0
    %2784 = vmatpush1.msra.mxu0 0.0
    %2785 = vmatprep.subr.mxu0 0.0
    %2786 = vmatpush1.msra.mxu0 0.0
    %2787 = vmatprep.subr.mxu0 0.0
    %2788 = vmatpush1.msra.mxu0 0.0
    %2789 = vmatprep.subr.mxu0 0.0
    %2790 = vmatpush1.msra.mxu0 0.0
    %2791 = vmatprep.subr.mxu0 0.0
    %2792 = vmatpush1.msra.mxu0 0.0
    %2793 = vmatprep.subr.mxu0 0.0
    %2794 = vmatpush1.msra.mxu0 0.0
    %2795 = vmatprep.subr.mxu0 0.0
    %2796 = vmatpush1.msra.mxu0 0.0
    %2797 = vmatprep.subr.mxu0 0.0
    %2798 = vmatpush1.msra.mxu0 %v2759
    %2799 = vmatprep.subr.mxu0 0.0
    %2800 = vmatpush1.msra.mxu0 %v2754
    %2801 = vmatprep.subr.mxu0 0.0
    %2802 = vmatpush1.msra.mxu0 %v2749
    %2803 = vmatprep.subr.mxu0 0.0
    %2804 = vmatpush2.msra.mxu0 0.0
    %2805 = vmatprep.subr.mxu0 0.0
    %2806 = vmatpush2.msra.mxu0 0.0
    %2807 = vmatprep.subr.mxu0 0.0
    %2808 = vmatpush2.msra.mxu0 0.0
    %2809 = vmatprep.subr.mxu0 0.0
    %2810 = vmatpush2.msra.mxu0 0.0
    %2811 = vmatprep.subr.mxu0 0.0
    %2812 = vmatpush2.msra.mxu0 0.0
    %2813 = vmatprep.subr.mxu0 0.0
    %2814 = vmatpush2.msra.mxu0 0.0
    %2815 = vmatprep.subr.mxu0 0.0
    %2816 = vmatpush2.msra.mxu0 0.0
    %2817 = vmatprep.subr.mxu0 0.0
    %2818 = vmatpush2.msra.mxu0 0.0
    %2819 = vmatprep.subr.mxu0 0.0
    %2820 = vmatpush2.msra.mxu0 0.0
    %2821 = vmatprep.subr.mxu0 0.0
    %2822 = vmatpush2.msra.mxu0 0.0
    %2823 = vmatprep.subr.mxu0 0.0
    %2824 = vmatpush2.msra.mxu0 0.0
    %2825 = vmatprep.subr.mxu0 0.0
    %2826 = vmatpush2.msra.mxu0 0.0
    %2827 = vmatprep.subr.mxu0 0.0
    %2828 = vmatpush2.msra.mxu0 0.0
    %2829 = vmatprep.subr.mxu0 0.0
    %2830 = vmatpush2.msra.mxu0 0.0
    %2831 = vmatprep.subr.mxu0 0.0
    %2832 = vmatpush2.msra.mxu0 0.0
    %2833 = vmatprep.subr.mxu0 0.0
    %2834 = vmatpush2.msra.mxu0 0.0
    %2835 = vmatprep.mubr.f32.mxu0 0.0
    %2836 = vmatmul.mubr.f32.gmra.mxu0 %v2763
    %v2837 = vpop.f32.mrf.mxu0
    %v2838 = vadd.f32 0.0, %v2837
    %v2839 = vpop.f32.mrf.mxu0
    %2840 = vmatprep.mubr.f32.mxu0 0.0
    %2841 = vmatmul.mubr.f32.gmra.mxu0 %v2766
    %v2842 = vpop.f32.mrf.mxu0
    %v2843 = vadd.f32 0.0, %v2842
    %v2844 = vpop.f32.mrf.mxu0
    %2845 = vmatprep.mubr.f32.mxu0 0.0
    %2846 = vmatmul.mubr.f32.gmra.mxu0 %v2769
    %v2847 = vpop.f32.mrf.mxu0
    %v2848 = vadd.f32 0.0, %v2847
    %v2849 = vpop.f32.mrf.mxu0
    %2850 = vdwg.mxu0
    %v2851 = vsel %vm102, %v2838, 0.0
    %2852 = vadd.xlane.f32.xlu0 %v2851
    %v2853 = vpop.xlane.xlu0 %2852
    %v2854 = vsel %vm102, %v2843, 0.0
    %2855 = vadd.xlane.f32.xlu0 %v2854
    %v2856 = vpop.xlane.xlu0 %2855
    %v2857 = vsel %vm102, %v2848, 0.0
    %2858 = vadd.xlane.f32.xlu0 %v2857
    %v2859 = vpop.xlane.xlu0 %2858
    %v2860 = vmul.f32 %v2853, %v969
    %v2861 = vmul.f32 %v2856, %v969
    %v2862 = vmul.f32 %v2859, %v969
    %v2863 = vsub.f32 %v2838, %v2860
    %v2864 = vsub.f32 %v2843, %v2861
    %v2865 = vsub.f32 %v2848, %v2862
    %v2866 = vmul.f32 %v2863, %v2863
    %v2867 = vmul.f32 %v2864, %v2864
    %v2868 = vmul.f32 %v2865, %v2865
    %v2869 = vsel %vm102, %v2866, 0.0
    %2870 = vadd.xlane.f32.xlu0 %v2869
    %v2871 = vpop.xlane.xlu0 %2870
    %v2872 = vsel %vm102, %v2867, 0.0
    %2873 = vadd.xlane.f32.xlu0 %v2872
    %v2874 = vpop.xlane.xlu0 %2873
    %v2875 = vsel %vm102, %v2868, 0.0
    %2876 = vadd.xlane.f32.xlu0 %v2875
    %v2877 = vpop.xlane.xlu0 %2876
    %v2878 = vmul.f32 %v2871, %v969
    %v2879 = vmul.f32 %v2874, %v969
    %v2880 = vmul.f32 %v2877, %v969
    %v2881 = vadd.f32 %v2878, 1e-05
    %v2882 = vadd.f32 %v2879, 1e-05
    %v2883 = vadd.f32 %v2880, 1e-05
    %v2884 = vrsqrt.pop %v2881
    %v2885 = vrsqrt.pop %v2882
    %v2886 = vrsqrt.pop %v2883
    %v2887 = vmul.f32 %v2863, %v2884
    %v2888 = vmul.f32 %v2864, %v2885
    %v2889 = vmul.f32 %v2865, %v2886
    %v2890 = vmul.f32 %v2887, %v1793
    %v2891 = vmul.f32 %v2888, %v1793
    %v2892 = vmul.f32 %v2889, %v1793
    %v2893 = vadd.f32 %v2890, %v1805
    %v2894 = vadd.f32 %v2891, %v1805
    %v2895 = vadd.f32 %v2892, %v1805
    %v2896 = vmax.f32 %v2893, 0.0
    %v2897 = vmax.f32 %v2894, 0.0
    %v2898 = vmax.f32 %v2895, 0.0
    %v2900 = vsel %vm102, %v2896, 0
    %v2903 = vsel %vm102, %v2897, 0
    %v2906 = vsel %vm102, %v2898, 0
    %2908 = vmatprep.subr.mxu0 0.0
    %2909 = vmatpush1.msra.mxu0 0.0
    %2910 = vmatprep.subr.mxu0 0.0
    %2911 = vmatpush1.msra.mxu0 0.0
    %2912 = vmatprep.subr.mxu0 0.0
    %2913 = vmatpush1.msra.mxu0 0.0
    %2914 = vmatprep.subr.mxu0 0.0
    %2915 = vmatpush1.msra.mxu0 0.0
    %2916 = vmatprep.subr.mxu0 0.0
    %2917 = vmatpush1.msra.mxu0 0.0
    %2918 = vmatprep.subr.mxu0 0.0
    %2919 = vmatpush1.msra.mxu0 0.0
    %2920 = vmatprep.subr.mxu0 0.0
    %2921 = vmatpush1.msra.mxu0 0.0
    %2922 = vmatprep.subr.mxu0 0.0
    %2923 = vmatpush1.msra.mxu0 0.0
    %2924 = vmatprep.subr.mxu0 0.0
    %2925 = vmatpush1.msra.mxu0 0.0
    %2926 = vmatprep.subr.mxu0 0.0
    %2927 = vmatpush1.msra.mxu0 0.0
    %2928 = vmatprep.subr.mxu0 0.0
    %2929 = vmatpush1.msra.mxu0 0.0
    %2930 = vmatprep.subr.mxu0 0.0
    %2931 = vmatpush1.msra.mxu0 0.0
    %2932 = vmatprep.subr.mxu0 0.0
    %2933 = vmatpush1.msra.mxu0 %v698
    %2934 = vmatprep.subr.mxu0 0.0
    %2935 = vmatpush1.msra.mxu0 %v697
    %2936 = vmatprep.subr.mxu0 0.0
    %2937 = vmatpush1.msra.mxu0 %v696
    %2938 = vmatprep.subr.mxu0 0.0
    %2939 = vmatpush1.msra.mxu0 %v695
    %2940 = vmatprep.subr.mxu0 0.0
    %2941 = vmatpush2.msra.mxu0 0.0
    %2942 = vmatprep.subr.mxu0 0.0
    %2943 = vmatpush2.msra.mxu0 0.0
    %2944 = vmatprep.subr.mxu0 0.0
    %2945 = vmatpush2.msra.mxu0 0.0
    %2946 = vmatprep.subr.mxu0 0.0
    %2947 = vmatpush2.msra.mxu0 0.0
    %2948 = vmatprep.subr.mxu0 0.0
    %2949 = vmatpush2.msra.mxu0 0.0
    %2950 = vmatprep.subr.mxu0 0.0
    %2951 = vmatpush2.msra.mxu0 0.0
    %2952 = vmatprep.subr.mxu0 0.0
    %2953 = vmatpush2.msra.mxu0 0.0
    %2954 = vmatprep.subr.mxu0 0.0
    %2955 = vmatpush2.msra.mxu0 0.0
    %2956 = vmatprep.subr.mxu0 0.0
    %2957 = vmatpush2.msra.mxu0 0.0
    %2958 = vmatprep.subr.mxu0 0.0
    %2959 = vmatpush2.msra.mxu0 0.0
    %2960 = vmatprep.subr.mxu0 0.0
    %2961 = vmatpush2.msra.mxu0 0.0
    %2962 = vmatprep.subr.mxu0 0.0
    %2963 = vmatpush2.msra.mxu0 0.0
    %2964 = vmatprep.subr.mxu0 0.0
    %2965 = vmatpush2.msra.mxu0 0.0
    %2966 = vmatprep.subr.mxu0 0.0
    %2967 = vmatpush2.msra.mxu0 0.0
    %2968 = vmatprep.subr.mxu0 0.0
    %2969 = vmatpush2.msra.mxu0 0.0
    %2970 = vmatprep.subr.mxu0 0.0
    %2971 = vmatpush2.msra.mxu0 0.0
    %2972 = vmatprep.mubr.f32.mxu0 0.0
    %2973 = vmatmul.mubr.f32.gmra.mxu0 %v2900
    %v2974 = vpop.f32.mrf.mxu0
    %v2975 = vadd.f32 0.0, %v2974
    %v2976 = vpop.f32.mrf.mxu0
    %2977 = vmatprep.mubr.f32.mxu0 0.0
    %2978 = vmatmul.mubr.f32.gmra.mxu0 %v2903
    %v2979 = vpop.f32.mrf.mxu0
    %v2980 = vadd.f32 0.0, %v2979
    %v2981 = vpop.f32.mrf.mxu0
    %2982 = vmatprep.mubr.f32.mxu0 0.0
    %2983 = vmatmul.mubr.f32.gmra.mxu0 %v2906
    %v2984 = vpop.f32.mrf.mxu0
    %v2985 = vadd.f32 0.0, %v2984
    %v2986 = vpop.f32.mrf.mxu0
    %2987 = vdwg.mxu0
    %2988 = vmatprep.subr.mxu0 0.0
    %2989 = vmatpush1.msra.mxu0 0.0
    %2990 = vmatprep.subr.mxu0 0.0
    %2991 = vmatpush1.msra.mxu0 0.0
    %2992 = vmatprep.subr.mxu0 0.0
    %2993 = vmatpush1.msra.mxu0 0.0
    %2994 = vmatprep.subr.mxu0 0.0
    %2995 = vmatpush1.msra.mxu0 0.0
    %2996 = vmatprep.subr.mxu0 0.0
    %2997 = vmatpush1.msra.mxu0 0.0
    %2998 = vmatprep.subr.mxu0 0.0
    %2999 = vmatpush1.msra.mxu0 0.0
    %3000 = vmatprep.subr.mxu0 0.0
    %3001 = vmatpush1.msra.mxu0 0.0
    %3002 = vmatprep.subr.mxu0 0.0
    %3003 = vmatpush1.msra.mxu0 0.0
    %3004 = vmatprep.subr.mxu0 0.0
    %3005 = vmatpush1.msra.mxu0 0.0
    %3006 = vmatprep.subr.mxu0 0.0
    %3007 = vmatpush1.msra.mxu0 0.0
    %3008 = vmatprep.subr.mxu0 0.0
    %3009 = vmatpush1.msra.mxu0 0.0
    %3010 = vmatprep.subr.mxu0 0.0
    %3011 = vmatpush1.msra.mxu0 0.0
    %3012 = vmatprep.subr.mxu0 0.0
    %3013 = vmatpush1.msra.mxu0 0.0
    %3014 = vmatprep.subr.mxu0 0.0
    %3015 = vmatpush1.msra.mxu0 %v2985
    %3016 = vmatprep.subr.mxu0 0.0
    %3017 = vmatpush1.msra.mxu0 %v2980
    %3018 = vmatprep.subr.mxu0 0.0
    %3019 = vmatpush1.msra.mxu0 %v2975
    %3020 = vmatprep.subr.mxu0 0.0
    %3021 = vmatpush2.msra.mxu0 0.0
    %3022 = vmatprep.subr.mxu0 0.0
    %3023 = vmatpush2.msra.mxu0 0.0
    %3024 = vmatprep.subr.mxu0 0.0
    %3025 = vmatpush2.msra.mxu0 0.0
    %3026 = vmatprep.subr.mxu0 0.0
    %3027 = vmatpush2.msra.mxu0 0.0
    %3028 = vmatprep.subr.mxu0 0.0
    %3029 = vmatpush2.msra.mxu0 0.0
    %3030 = vmatprep.subr.mxu0 0.0
    %3031 = vmatpush2.msra.mxu0 0.0
    %3032 = vmatprep.subr.mxu0 0.0
    %3033 = vmatpush2.msra.mxu0 0.0
    %3034 = vmatprep.subr.mxu0 0.0
    %3035 = vmatpush2.msra.mxu0 0.0
    %3036 = vmatprep.subr.mxu0 0.0
    %3037 = vmatpush2.msra.mxu0 0.0
    %3038 = vmatprep.subr.mxu0 0.0
    %3039 = vmatpush2.msra.mxu0 0.0
    %3040 = vmatprep.subr.mxu0 0.0
    %3041 = vmatpush2.msra.mxu0 0.0
    %3042 = vmatprep.subr.mxu0 0.0
    %3043 = vmatpush2.msra.mxu0 0.0
    %3044 = vmatprep.subr.mxu0 0.0
    %3045 = vmatpush2.msra.mxu0 0.0
    %3046 = vmatprep.subr.mxu0 0.0
    %3047 = vmatpush2.msra.mxu0 0.0
    %3048 = vmatprep.subr.mxu0 0.0
    %3049 = vmatpush2.msra.mxu0 0.0
    %3050 = vmatprep.subr.mxu0 0.0
    %3051 = vmatpush2.msra.mxu0 0.0
    %3052 = vmatprep.mubr.f32.mxu0 0.0
    %3053 = vmatmul.mubr.f32.gmra.mxu0 %v2763
    %v3054 = vpop.f32.mrf.mxu0
    %v3055 = vadd.f32 0.0, %v3054
    %v3056 = vpop.f32.mrf.mxu0
    %3057 = vmatprep.mubr.f32.mxu0 0.0
    %3058 = vmatmul.mubr.f32.gmra.mxu0 %v2766
    %v3059 = vpop.f32.mrf.mxu0
    %v3060 = vadd.f32 0.0, %v3059
    %v3061 = vpop.f32.mrf.mxu0
    %3062 = vmatprep.mubr.f32.mxu0 0.0
    %3063 = vmatmul.mubr.f32.gmra.mxu0 %v2769
    %v3064 = vpop.f32.mrf.mxu0
    %v3065 = vadd.f32 0.0, %v3064
    %v3066 = vpop.f32.mrf.mxu0
    %3067 = vdwg.mxu0
    %v3068 = vsel %vm102, %v3055, 0.0
    %3069 = vadd.xlane.f32.xlu0 %v3068
    %v3070 = vpop.xlane.xlu0 %3069
    %v3071 = vsel %vm102, %v3060, 0.0
    %3072 = vadd.xlane.f32.xlu0 %v3071
    %v3073 = vpop.xlane.xlu0 %3072
    %v3074 = vsel %vm102, %v3065, 0.0
    %3075 = vadd.xlane.f32.xlu0 %v3074
    %v3076 = vpop.xlane.xlu0 %3075
    %v3077 = vmul.f32 %v3070, %v969
    %v3078 = vmul.f32 %v3073, %v969
    %v3079 = vmul.f32 %v3076, %v969
    %v3080 = vsub.f32 %v3055, %v3077
    %v3081 = vsub.f32 %v3060, %v3078
    %v3082 = vsub.f32 %v3065, %v3079
    %v3083 = vmul.f32 %v3080, %v3080
    %v3084 = vmul.f32 %v3081, %v3081
    %v3085 = vmul.f32 %v3082, %v3082
    %v3086 = vsel %vm102, %v3083, 0.0
    %3087 = vadd.xlane.f32.xlu0 %v3086
    %v3088 = vpop.xlane.xlu0 %3087
    %v3089 = vsel %vm102, %v3084, 0.0
    %3090 = vadd.xlane.f32.xlu0 %v3089
    %v3091 = vpop.xlane.xlu0 %3090
    %v3092 = vsel %vm102, %v3085, 0.0
    %3093 = vadd.xlane.f32.xlu0 %v3092
    %v3094 = vpop.xlane.xlu0 %3093
    %v3095 = vmul.f32 %v3088, %v969
    %v3096 = vmul.f32 %v3091, %v969
    %v3097 = vmul.f32 %v3094, %v969
    %v3098 = vadd.f32 %v3095, 1e-05
    %v3099 = vadd.f32 %v3096, 1e-05
    %v3100 = vadd.f32 %v3097, 1e-05
    %v3101 = vrsqrt.pop %v3098
    %v3102 = vrsqrt.pop %v3099
    %v3103 = vrsqrt.pop %v3100
    %v3104 = vmul.f32 %v3080, %v3101
    %v3105 = vmul.f32 %v3081, %v3102
    %v3106 = vmul.f32 %v3082, %v3103
    %v3107 = vmul.f32 %v3104, %v2163
    %v3108 = vmul.f32 %v3105, %v2163
    %v3109 = vmul.f32 %v3106, %v2163
    %v3110 = vadd.f32 %v3107, %v2175
    %v3111 = vadd.f32 %v3108, %v2175
    %v3112 = vadd.f32 %v3109, %v2175
    %v3113 = vmax.f32 %v3110, 0.0
    %v3114 = vmax.f32 %v3111, 0.0
    %v3115 = vmax.f32 %v3112, 0.0
    %v3116 = vld [vmem:[%s7] sm:$0x3]
    %v3118 = vsel %vm2663, %v3116, 0
    %3120 = vmatprep.subr.mxu0 0.0
    %3121 = vmatpush1.msra.mxu0 0.0
    %3122 = vmatprep.subr.mxu0 0.0
    %3123 = vmatpush1.msra.mxu0 0.0
    %3124 = vmatprep.subr.mxu0 0.0
    %3125 = vmatpush1.msra.mxu0 0.0
    %3126 = vmatprep.subr.mxu0 0.0
    %3127 = vmatpush1.msra.mxu0 0.0
    %3128 = vmatprep.subr.mxu0 0.0
    %3129 = vmatpush1.msra.mxu0 0.0
    %3130 = vmatprep.subr.mxu0 0.0
    %3131 = vmatpush1.msra.mxu0 0.0
    %3132 = vmatprep.subr.mxu0 0.0
    %3133 = vmatpush1.msra.mxu0 0.0
    %3134 = vmatprep.subr.mxu0 0.0
    %3135 = vmatpush1.msra.mxu0 0.0
    %3136 = vmatprep.subr.mxu0 0.0
    %3137 = vmatpush1.msra.mxu0 0.0
    %3138 = vmatprep.subr.mxu0 0.0
    %3139 = vmatpush1.msra.mxu0 0.0
    %3140 = vmatprep.subr.mxu0 0.0
    %3141 = vmatpush1.msra.mxu0 0.0
    %3142 = vmatprep.subr.mxu0 0.0
    %3143 = vmatpush1.msra.mxu0 0.0
    %3144 = vmatprep.subr.mxu0 0.0
    %3145 = vmatpush1.msra.mxu0 0.0
    %3146 = vmatprep.subr.mxu0 0.0
    %3147 = vmatpush1.msra.mxu0 %v3115
    %3148 = vmatprep.subr.mxu0 0.0
    %3149 = vmatpush1.msra.mxu0 %v3114
    %3150 = vmatprep.subr.mxu0 0.0
    %3151 = vmatpush1.msra.mxu0 %v3113
    %3152 = vmatprep.subr.mxu0 0.0
    %3153 = vmatpush2.msra.mxu0 0.0
    %3154 = vmatprep.subr.mxu0 0.0
    %3155 = vmatpush2.msra.mxu0 0.0
    %3156 = vmatprep.subr.mxu0 0.0
    %3157 = vmatpush2.msra.mxu0 0.0
    %3158 = vmatprep.subr.mxu0 0.0
    %3159 = vmatpush2.msra.mxu0 0.0
    %3160 = vmatprep.subr.mxu0 0.0
    %3161 = vmatpush2.msra.mxu0 0.0
    %3162 = vmatprep.subr.mxu0 0.0
    %3163 = vmatpush2.msra.mxu0 0.0
    %3164 = vmatprep.subr.mxu0 0.0
    %3165 = vmatpush2.msra.mxu0 0.0
    %3166 = vmatprep.subr.mxu0 0.0
    %3167 = vmatpush2.msra.mxu0 0.0
    %3168 = vmatprep.subr.mxu0 0.0
    %3169 = vmatpush2.msra.mxu0 0.0
    %3170 = vmatprep.subr.mxu0 0.0
    %3171 = vmatpush2.msra.mxu0 0.0
    %3172 = vmatprep.subr.mxu0 0.0
    %3173 = vmatpush2.msra.mxu0 0.0
    %3174 = vmatprep.subr.mxu0 0.0
    %3175 = vmatpush2.msra.mxu0 0.0
    %3176 = vmatprep.subr.mxu0 0.0
    %3177 = vmatpush2.msra.mxu0 0.0
    %3178 = vmatprep.subr.mxu0 0.0
    %3179 = vmatpush2.msra.mxu0 0.0
    %3180 = vmatprep.subr.mxu0 0.0
    %3181 = vmatpush2.msra.mxu0 0.0
    %3182 = vmatprep.subr.mxu0 0.0
    %3183 = vmatpush2.msra.mxu0 0.0
    %3184 = vmatprep.mubr.f32.mxu0 0.0
    %3185 = vmatmul.mubr.f32.gmra.mxu0 %v3118
    %v3186 = vpop.f32.mrf.mxu0
    %v3187 = vadd.f32 0.0, %v3186
    %v3188 = vpop.f32.mrf.mxu0
    %3189 = vdwg.mxu0
    %v3190 = vld [vmem:[%s8] sm:$0x3]
    %v3192 = vsel %vm2663, %v3190, 0
    %3194 = vmatprep.subr.mxu0 0.0
    %3195 = vmatpush1.msra.mxu0 0.0
    %3196 = vmatprep.subr.mxu0 0.0
    %3197 = vmatpush1.msra.mxu0 0.0
    %3198 = vmatprep.subr.mxu0 0.0
    %3199 = vmatpush1.msra.mxu0 0.0
    %3200 = vmatprep.subr.mxu0 0.0
    %3201 = vmatpush1.msra.mxu0 0.0
    %3202 = vmatprep.subr.mxu0 0.0
    %3203 = vmatpush1.msra.mxu0 0.0
    %3204 = vmatprep.subr.mxu0 0.0
    %3205 = vmatpush1.msra.mxu0 0.0
    %3206 = vmatprep.subr.mxu0 0.0
    %3207 = vmatpush1.msra.mxu0 0.0
    %3208 = vmatprep.subr.mxu0 0.0
    %3209 = vmatpush1.msra.mxu0 0.0
    %3210 = vmatprep.subr.mxu0 0.0
    %3211 = vmatpush1.msra.mxu0 0.0
    %3212 = vmatprep.subr.mxu0 0.0
    %3213 = vmatpush1.msra.mxu0 0.0
    %3214 = vmatprep.subr.mxu0 0.0
    %3215 = vmatpush1.msra.mxu0 0.0
    %3216 = vmatprep.subr.mxu0 0.0
    %3217 = vmatpush1.msra.mxu0 0.0
    %3218 = vmatprep.subr.mxu0 0.0
    %3219 = vmatpush1.msra.mxu0 0.0
    %3220 = vmatprep.subr.mxu0 0.0
    %3221 = vmatpush1.msra.mxu0 %v3115
    %3222 = vmatprep.subr.mxu0 0.0
    %3223 = vmatpush1.msra.mxu0 %v3114
    %3224 = vmatprep.subr.mxu0 0.0
    %3225 = vmatpush1.msra.mxu0 %v3113
    %3226 = vmatprep.subr.mxu0 0.0
    %3227 = vmatpush2.msra.mxu0 0.0
    %3228 = vmatprep.subr.mxu0 0.0
    %3229 = vmatpush2.msra.mxu0 0.0
    %3230 = vmatprep.subr.mxu0 0.0
    %3231 = vmatpush2.msra.mxu0 0.0
    %3232 = vmatprep.subr.mxu0 0.0
    %3233 = vmatpush2.msra.mxu0 0.0
    %3234 = vmatprep.subr.mxu0 0.0
    %3235 = vmatpush2.msra.mxu0 0.0
    %3236 = vmatprep.subr.mxu0 0.0
    %3237 = vmatpush2.msra.mxu0 0.0
    %3238 = vmatprep.subr.mxu0 0.0
    %3239 = vmatpush2.msra.mxu0 0.0
    %3240 = vmatprep.subr.mxu0 0.0
    %3241 = vmatpush2.msra.mxu0 0.0
    %3242 = vmatprep.subr.mxu0 0.0
    %3243 = vmatpush2.msra.mxu0 0.0
    %3244 = vmatprep.subr.mxu0 0.0
    %3245 = vmatpush2.msra.mxu0 0.0
    %3246 = vmatprep.subr.mxu0 0.0
    %3247 = vmatpush2.msra.mxu0 0.0
    %3248 = vmatprep.subr.mxu0 0.0
    %3249 = vmatpush2.msra.mxu0 0.0
    %3250 = vmatprep.subr.mxu0 0.0
    %3251 = vmatpush2.msra.mxu0 0.0
    %3252 = vmatprep.subr.mxu0 0.0
    %3253 = vmatpush2.msra.mxu0 0.0
    %3254 = vmatprep.subr.mxu0 0.0
    %3255 = vmatpush2.msra.mxu0 0.0
    %3256 = vmatprep.subr.mxu0 0.0
    %3257 = vmatpush2.msra.mxu0 0.0
    %3258 = vmatprep.mubr.f32.mxu0 0.0
    %3259 = vmatmul.mubr.f32.gmra.mxu0 %v3192
    %v3260 = vpop.f32.mrf.mxu0
    %v3261 = vadd.f32 0.0, %v3260
    %v3262 = vpop.f32.mrf.mxu0
    %3263 = vdwg.mxu0
    %v3264 = vld [vmem:[%s19] sm:$0xff]
    %v3265 = vld [vmem:[%s19 + $0x8] sm:$0xff]
    %v3266 = vld [vmem:[%s19 + $0x10] sm:$0xff]
    %v3267 = vld [vmem:[%s19 + $0x18] sm:$0xff]
    %v3268 = vld [vmem:[%s19 + $0x20] sm:$0xff]
    %v3269 = vld [vmem:[%s19 + $0x28] sm:$0xff]
    %v3270 = vld [vmem:[%s19 + $0x30] sm:$0xff]
    %v3271 = vld [vmem:[%s19 + $0x38] sm:$0xff]
    %v3272 = vld [vmem:[%s19 + $0x40] sm:$0xff]
    %v3273 = vld [vmem:[%s19 + $0x48] sm:$0xff]
    %v3274 = vld [vmem:[%s19 + $0x50] sm:$0xff]
    %v3275 = vld [vmem:[%s19 + $0x58] sm:$0xff]
    %v3277 = vsel %vm102, %v2263, 0
    %3279 = vmatprep.subr.mxu0 0.0
    %3280 = vmatpush1.msra.mxu0 0.0
    %3281 = vmatprep.subr.mxu0 0.0
    %3282 = vmatpush1.msra.mxu0 0.0
    %3283 = vmatprep.subr.mxu0 0.0
    %3284 = vmatpush1.msra.mxu0 0.0
    %3285 = vmatprep.subr.mxu0 0.0
    %3286 = vmatpush1.msra.mxu0 0.0
    %3287 = vmatprep.subr.mxu0 0.0
    %3288 = vmatpush1.msra.mxu0 0.0
    %3289 = vmatprep.subr.mxu0 0.0
    %3290 = vmatpush1.msra.mxu0 0.0
    %3291 = vmatprep.subr.mxu0 0.0
    %3292 = vmatpush1.msra.mxu0 0.0
    %3293 = vmatprep.subr.mxu0 0.0
    %3294 = vmatpush1.msra.mxu0 0.0
    %3295 = vmatprep.subr.mxu0 0.0
    %3296 = vmatpush1.msra.mxu0 0.0
    %3297 = vmatprep.subr.mxu0 0.0
    %3298 = vmatpush1.msra.mxu0 0.0
    %3299 = vmatprep.subr.mxu0 0.0
    %3300 = vmatpush1.msra.mxu0 0.0
    %3301 = vmatprep.subr.mxu0 0.0
    %3302 = vmatpush1.msra.mxu0 0.0
    %3303 = vmatprep.subr.mxu0 0.0
    %3304 = vmatpush1.msra.mxu0 %v3271
    %3305 = vmatprep.subr.mxu0 0.0
    %3306 = vmatpush1.msra.mxu0 %v3270
    %3307 = vmatprep.subr.mxu0 0.0
    %3308 = vmatpush1.msra.mxu0 %v3269
    %3309 = vmatprep.subr.mxu0 0.0
    %3310 = vmatpush1.msra.mxu0 %v3268
    %3311 = vmatprep.subr.mxu0 0.0
    %3312 = vmatpush2.msra.mxu0 0.0
    %3313 = vmatprep.subr.mxu0 0.0
    %3314 = vmatpush2.msra.mxu0 0.0
    %3315 = vmatprep.subr.mxu0 0.0
    %3316 = vmatpush2.msra.mxu0 0.0
    %3317 = vmatprep.subr.mxu0 0.0
    %3318 = vmatpush2.msra.mxu0 0.0
    %3319 = vmatprep.subr.mxu0 0.0
    %3320 = vmatpush2.msra.mxu0 0.0
    %3321 = vmatprep.subr.mxu0 0.0
    %3322 = vmatpush2.msra.mxu0 0.0
    %3323 = vmatprep.subr.mxu0 0.0
    %3324 = vmatpush2.msra.mxu0 0.0
    %3325 = vmatprep.subr.mxu0 0.0
    %3326 = vmatpush2.msra.mxu0 0.0
    %3327 = vmatprep.subr.mxu0 0.0
    %3328 = vmatpush2.msra.mxu0 0.0
    %3329 = vmatprep.subr.mxu0 0.0
    %3330 = vmatpush2.msra.mxu0 0.0
    %3331 = vmatprep.subr.mxu0 0.0
    %3332 = vmatpush2.msra.mxu0 0.0
    %3333 = vmatprep.subr.mxu0 0.0
    %3334 = vmatpush2.msra.mxu0 0.0
    %3335 = vmatprep.subr.mxu0 0.0
    %3336 = vmatpush2.msra.mxu0 0.0
    %3337 = vmatprep.subr.mxu0 0.0
    %3338 = vmatpush2.msra.mxu0 0.0
    %3339 = vmatprep.subr.mxu0 0.0
    %3340 = vmatpush2.msra.mxu0 0.0
    %3341 = vmatprep.subr.mxu0 0.0
    %3342 = vmatpush2.msra.mxu0 0.0
    %3343 = vmatprep.mubr.f32.mxu0 0.0
    %3344 = vmatmul.mubr.f32.gmra.mxu0 %v3277
    %v3345 = vpop.f32.mrf.mxu0
    %v3346 = vadd.f32 0.0, %v3345
    %v3347 = vpop.f32.mrf.mxu0
    %3348 = vdwg.mxu0
    %v3350 = vsel %vm102, %v3187, 0
    %3352 = vmatprep.subr.mxu0 0.0
    %3353 = vmatpush1.msra.mxu0 0.0
    %3354 = vmatprep.subr.mxu0 0.0
    %3355 = vmatpush1.msra.mxu0 0.0
    %3356 = vmatprep.subr.mxu0 0.0
    %3357 = vmatpush1.msra.mxu0 0.0
    %3358 = vmatprep.subr.mxu0 0.0
    %3359 = vmatpush1.msra.mxu0 0.0
    %3360 = vmatprep.subr.mxu0 0.0
    %3361 = vmatpush1.msra.mxu0 0.0
    %3362 = vmatprep.subr.mxu0 0.0
    %3363 = vmatpush1.msra.mxu0 0.0
    %3364 = vmatprep.subr.mxu0 0.0
    %3365 = vmatpush1.msra.mxu0 0.0
    %3366 = vmatprep.subr.mxu0 0.0
    %3367 = vmatpush1.msra.mxu0 0.0
    %3368 = vmatprep.subr.mxu0 0.0
    %3369 = vmatpush1.msra.mxu0 0.0
    %3370 = vmatprep.subr.mxu0 0.0
    %3371 = vmatpush1.msra.mxu0 0.0
    %3372 = vmatprep.subr.mxu0 0.0
    %3373 = vmatpush1.msra.mxu0 0.0
    %3374 = vmatprep.subr.mxu0 0.0
    %3375 = vmatpush1.msra.mxu0 0.0
    %3376 = vmatprep.subr.mxu0 0.0
    %3377 = vmatpush1.msra.mxu0 %v3267
    %3378 = vmatprep.subr.mxu0 0.0
    %3379 = vmatpush1.msra.mxu0 %v3266
    %3380 = vmatprep.subr.mxu0 0.0
    %3381 = vmatpush1.msra.mxu0 %v3265
    %3382 = vmatprep.subr.mxu0 0.0
    %3383 = vmatpush1.msra.mxu0 %v3264
    %3384 = vmatprep.subr.mxu0 0.0
    %3385 = vmatpush2.msra.mxu0 0.0
    %3386 = vmatprep.subr.mxu0 0.0
    %3387 = vmatpush2.msra.mxu0 0.0
    %3388 = vmatprep.subr.mxu0 0.0
    %3389 = vmatpush2.msra.mxu0 0.0
    %3390 = vmatprep.subr.mxu0 0.0
    %3391 = vmatpush2.msra.mxu0 0.0
    %3392 = vmatprep.subr.mxu0 0.0
    %3393 = vmatpush2.msra.mxu0 0.0
    %3394 = vmatprep.subr.mxu0 0.0
    %3395 = vmatpush2.msra.mxu0 0.0
    %3396 = vmatprep.subr.mxu0 0.0
    %3397 = vmatpush2.msra.mxu0 0.0
    %3398 = vmatprep.subr.mxu0 0.0
    %3399 = vmatpush2.msra.mxu0 0.0
    %3400 = vmatprep.subr.mxu0 0.0
    %3401 = vmatpush2.msra.mxu0 0.0
    %3402 = vmatprep.subr.mxu0 0.0
    %3403 = vmatpush2.msra.mxu0 0.0
    %3404 = vmatprep.subr.mxu0 0.0
    %3405 = vmatpush2.msra.mxu0 0.0
    %3406 = vmatprep.subr.mxu0 0.0
    %3407 = vmatpush2.msra.mxu0 0.0
    %3408 = vmatprep.subr.mxu0 0.0
    %3409 = vmatpush2.msra.mxu0 0.0
    %3410 = vmatprep.subr.mxu0 0.0
    %3411 = vmatpush2.msra.mxu0 0.0
    %3412 = vmatprep.subr.mxu0 0.0
    %3413 = vmatpush2.msra.mxu0 0.0
    %3414 = vmatprep.subr.mxu0 0.0
    %3415 = vmatpush2.msra.mxu0 0.0
    %3416 = vmatprep.mubr.f32.mxu0 0.0
    %3417 = vmatmul.mubr.f32.gmra.mxu0 %v3350
    %v3418 = vpop.f32.mrf.mxu0
    %v3419 = vadd.f32 %v3346, %v3418
    %v3420 = vpop.f32.mrf.mxu0
    %3421 = vdwg.mxu0
    %v3423 = vsel %vm102, %v3261, 0
    %3425 = vmatprep.subr.mxu0 0.0
    %3426 = vmatpush1.msra.mxu0 0.0
    %3427 = vmatprep.subr.mxu0 0.0
    %3428 = vmatpush1.msra.mxu0 0.0
    %3429 = vmatprep.subr.mxu0 0.0
    %3430 = vmatpush1.msra.mxu0 0.0
    %3431 = vmatprep.subr.mxu0 0.0
    %3432 = vmatpush1.msra.mxu0 0.0
    %3433 = vmatprep.subr.mxu0 0.0
    %3434 = vmatpush1.msra.mxu0 0.0
    %3435 = vmatprep.subr.mxu0 0.0
    %3436 = vmatpush1.msra.mxu0 0.0
    %3437 = vmatprep.subr.mxu0 0.0
    %3438 = vmatpush1.msra.mxu0 0.0
    %3439 = vmatprep.subr.mxu0 0.0
    %3440 = vmatpush1.msra.mxu0 0.0
    %3441 = vmatprep.subr.mxu0 0.0
    %3442 = vmatpush1.msra.mxu0 0.0
    %3443 = vmatprep.subr.mxu0 0.0
    %3444 = vmatpush1.msra.mxu0 0.0
    %3445 = vmatprep.subr.mxu0 0.0
    %3446 = vmatpush1.msra.mxu0 0.0
    %3447 = vmatprep.subr.mxu0 0.0
    %3448 = vmatpush1.msra.mxu0 0.0
    %3449 = vmatprep.subr.mxu0 0.0
    %3450 = vmatpush1.msra.mxu0 %v3275
    %3451 = vmatprep.subr.mxu0 0.0
    %3452 = vmatpush1.msra.mxu0 %v3274
    %3453 = vmatprep.subr.mxu0 0.0
    %3454 = vmatpush1.msra.mxu0 %v3273
    %3455 = vmatprep.subr.mxu0 0.0
    %3456 = vmatpush1.msra.mxu0 %v3272
    %3457 = vmatprep.subr.mxu0 0.0
    %3458 = vmatpush2.msra.mxu0 0.0
    %3459 = vmatprep.subr.mxu0 0.0
    %3460 = vmatpush2.msra.mxu0 0.0
    %3461 = vmatprep.subr.mxu0 0.0
    %3462 = vmatpush2.msra.mxu0 0.0
    %3463 = vmatprep.subr.mxu0 0.0
    %3464 = vmatpush2.msra.mxu0 0.0
    %3465 = vmatprep.subr.mxu0 0.0
    %3466 = vmatpush2.msra.mxu0 0.0
    %3467 = vmatprep.subr.mxu0 0.0
    %3468 = vmatpush2.msra.mxu0 0.0
    %3469 = vmatprep.subr.mxu0 0.0
    %3470 = vmatpush2.msra.mxu0 0.0
    %3471 = vmatprep.subr.mxu0 0.0
    %3472 = vmatpush2.msra.mxu0 0.0
    %3473 = vmatprep.subr.mxu0 0.0
    %3474 = vmatpush2.msra.mxu0 0.0
    %3475 = vmatprep.subr.mxu0 0.0
    %3476 = vmatpush2.msra.mxu0 0.0
    %3477 = vmatprep.subr.mxu0 0.0
    %3478 = vmatpush2.msra.mxu0 0.0
    %3479 = vmatprep.subr.mxu0 0.0
    %3480 = vmatpush2.msra.mxu0 0.0
    %3481 = vmatprep.subr.mxu0 0.0
    %3482 = vmatpush2.msra.mxu0 0.0
    %3483 = vmatprep.subr.mxu0 0.0
    %3484 = vmatpush2.msra.mxu0 0.0
    %3485 = vmatprep.subr.mxu0 0.0
    %3486 = vmatpush2.msra.mxu0 0.0
    %3487 = vmatprep.subr.mxu0 0.0
    %3488 = vmatpush2.msra.mxu0 0.0
    %3489 = vmatprep.mubr.f32.mxu0 0.0
    %3490 = vmatmul.mubr.f32.gmra.mxu0 %v3423
    %v3491 = vpop.f32.mrf.mxu0
    %v3492 = vadd.f32 0.0, %v3491
    %v3493 = vpop.f32.mrf.mxu0
    %3494 = vdwg.mxu0
    %v3495 = vadd.f32 %v3419, %v3492
    %v3496 = vld [vmem:[%s20] sm:$0x1]
    %v3498 = vlaneseq
    %v3499 = vshrl.u32 %v3498, 7
    %v3500 = vsub.s32 0, %v3499
    %v3501 = vrot.slane %v3496, %v3500
    %v3503 = vadd.f32 %v3495, %v3501
    %v3504 = vmax.f32 %v3503, 0.0
    %v3505 = vld [vmem:[%s21] sm:$0xff]
    %v3506 = vld [vmem:[%s21 + $0x8] sm:$0xff]
    %v3507 = vld [vmem:[%s21 + $0x10] sm:$0xff]
    %v3508 = vld [vmem:[%s21 + $0x18] sm:$0xff]
    %v3509 = vld [vmem:[%s22] sm:$0x1]
    %v3511 = vlaneseq
    %v3512 = vshrl.u32 %v3511, 7
    %v3513 = vsub.s32 0, %v3512
    %v3514 = vrot.slane %v3509, %v3513
    %v3517 = vsel %vm102, %v3504, 0
    %3519 = vmatprep.subr.mxu0 0.0
    %3520 = vmatpush1.msra.mxu0 0.0
    %3521 = vmatprep.subr.mxu0 0.0
    %3522 = vmatpush1.msra.mxu0 0.0
    %3523 = vmatprep.subr.mxu0 0.0
    %3524 = vmatpush1.msra.mxu0 0.0
    %3525 = vmatprep.subr.mxu0 0.0
    %3526 = vmatpush1.msra.mxu0 0.0
    %3527 = vmatprep.subr.mxu0 0.0
    %3528 = vmatpush1.msra.mxu0 0.0
    %3529 = vmatprep.subr.mxu0 0.0
    %3530 = vmatpush1.msra.mxu0 0.0
    %3531 = vmatprep.subr.mxu0 0.0
    %3532 = vmatpush1.msra.mxu0 0.0
    %3533 = vmatprep.subr.mxu0 0.0
    %3534 = vmatpush1.msra.mxu0 0.0
    %3535 = vmatprep.subr.mxu0 0.0
    %3536 = vmatpush1.msra.mxu0 0.0
    %3537 = vmatprep.subr.mxu0 0.0
    %3538 = vmatpush1.msra.mxu0 0.0
    %3539 = vmatprep.subr.mxu0 0.0
    %3540 = vmatpush1.msra.mxu0 0.0
    %3541 = vmatprep.subr.mxu0 0.0
    %3542 = vmatpush1.msra.mxu0 0.0
    %3543 = vmatprep.subr.mxu0 0.0
    %3544 = vmatpush1.msra.mxu0 %v3508
    %3545 = vmatprep.subr.mxu0 0.0
    %3546 = vmatpush1.msra.mxu0 %v3507
    %3547 = vmatprep.subr.mxu0 0.0
    %3548 = vmatpush1.msra.mxu0 %v3506
    %3549 = vmatprep.subr.mxu0 0.0
    %3550 = vmatpush1.msra.mxu0 %v3505
    %3551 = vmatprep.subr.mxu0 0.0
    %3552 = vmatpush2.msra.mxu0 0.0
    %3553 = vmatprep.subr.mxu0 0.0
    %3554 = vmatpush2.msra.mxu0 0.0
    %3555 = vmatprep.subr.mxu0 0.0
    %3556 = vmatpush2.msra.mxu0 0.0
    %3557 = vmatprep.subr.mxu0 0.0
    %3558 = vmatpush2.msra.mxu0 0.0
    %3559 = vmatprep.subr.mxu0 0.0
    %3560 = vmatpush2.msra.mxu0 0.0
    %3561 = vmatprep.subr.mxu0 0.0
    %3562 = vmatpush2.msra.mxu0 0.0
    %3563 = vmatprep.subr.mxu0 0.0
    %3564 = vmatpush2.msra.mxu0 0.0
    %3565 = vmatprep.subr.mxu0 0.0
    %3566 = vmatpush2.msra.mxu0 0.0
    %3567 = vmatprep.subr.mxu0 0.0
    %3568 = vmatpush2.msra.mxu0 0.0
    %3569 = vmatprep.subr.mxu0 0.0
    %3570 = vmatpush2.msra.mxu0 0.0
    %3571 = vmatprep.subr.mxu0 0.0
    %3572 = vmatpush2.msra.mxu0 0.0
    %3573 = vmatprep.subr.mxu0 0.0
    %3574 = vmatpush2.msra.mxu0 0.0
    %3575 = vmatprep.subr.mxu0 0.0
    %3576 = vmatpush2.msra.mxu0 0.0
    %3577 = vmatprep.subr.mxu0 0.0
    %3578 = vmatpush2.msra.mxu0 0.0
    %3579 = vmatprep.subr.mxu0 0.0
    %3580 = vmatpush2.msra.mxu0 0.0
    %3581 = vmatprep.subr.mxu0 0.0
    %3582 = vmatpush2.msra.mxu0 0.0
    %3583 = vmatprep.mubr.f32.mxu0 0.0
    %3584 = vmatmul.mubr.f32.gmra.mxu0 %v3517
    %v3585 = vpop.f32.mrf.mxu0
    %v3586 = vadd.f32 %v3514, %v3585
    %v3587 = vpop.f32.mrf.mxu0
    %3588 = vdwg.mxu0
    %3589 = vst [vmem:[#allocation2] sm:$0x3] %v3586
    // Predicated region
    $region94: #{tokens_as_extra_graph_mean_forward.1} parent=1 // pred_check
      _
    $region95: #{tokens_as_extra_graph_mean_forward.1} parent=1 // pred_check_branch
      %3591 = sbr.rel (0) target = $region97
    $region96: #{tokens_as_extra_graph_mean_forward.1} parent=1 // pred_region
      %s3593 = ssub.s32 32, 32
      %3594 = vsyncadd [#allocation3], %s3593
      %s3596 = sshll.u32 [#allocation2], 4
      %s3597 = int_to_ptr.vmem [resolvable:$true] %s3596
      %3599 = dma.vmem_to_hbm [thread:$0]  %s3597, 32, %s23, [#allocation3]
    $region97: #{tokens_as_extra_graph_mean_forward.1} parent=1 // pred_fallthru
      _
    // Predicated region
    $region98: #{tokens_as_extra_graph_mean_forward.1} parent=1 // pred_check
      _
    $region99: #{tokens_as_extra_graph_mean_forward.1} parent=1 // pred_check_branch
      %3601 = sbr.rel (0) target = $region101
    $region100: #{tokens_as_extra_graph_mean_forward.1} parent=1 // pred_region
      %3602 = dma.done [#allocation3], 32
    $region101: #{tokens_as_extra_graph_mean_forward.1} parent=1 // pred_fallthru
      _
    %3603 = vsyncpa [#allocation3], 1

</llo_original>
